<compile_context>
chip_gen: v5e
topology: v5e:2x2
jax: 0.10.0
libtpu: 0.0.40
codegen_flags: <defaults>
</compile_context>

<pallas_src>
import jax
import jax.numpy as jnp
from jax.experimental import pallas as pl
from jax.experimental.pallas import tpu as pltpu

LATENT = 128
N_CLASSES = 10
EMB_DIM = 10
IMG_PIX = 28 * 28          # 784
IMG_PAD = 896              # 7 * 128 : lane-dense head width (sliced back to 784)
BN_EPS = 0.8               # second positional arg of nn.BatchNorm1d is eps
LRELU_SLOPE = 0.2


def _leaky_relu(x):
    return jnp.where(x > 0, x, LRELU_SLOPE * x)


def _batchnorm_train(x, gamma, beta):
    # training-mode BatchNorm1d: biased batch statistics over dim 0, eps=0.8
    mean = jnp.mean(x, axis=0, keepdims=True)
    var = jnp.mean((x - mean) ** 2, axis=0, keepdims=True)
    return (x - mean) * jax.lax.rsqrt(var + BN_EPS) * gamma + beta


def generator_kernel(lin1_ref, noise_ref, w1b_ref,
                     w2_ref, g2_ref, be2_ref,
                     w3_ref, g3_ref, be3_ref,
                     w4_hbm, g4_ref, be4_ref,
                     w5_hbm, b5_ref,
                     out_ref,
                     w4_buf, w5_buf, dma_sem):
    f32 = jnp.float32

    # Kick off the two big-weight DMAs (w4: 1 MiB, w5: 1.75 MiB in bf16 ~ 80%
    # of all weight bytes) immediately so they overlap with blocks 1-3.
    cp4 = pltpu.make_async_copy(w4_hbm, w4_buf, dma_sem.at[0])
    cp5 = pltpu.make_async_copy(w5_hbm, w5_buf, dma_sem.at[1])
    cp4.start()
    cp5.start()

    # block 1: Linear(138,128) + LeakyReLU (no BN).
    # cat([emb, noise],1) @ W1 + b1 == noise @ W1[10:] + (emb @ W1[:10] + b1);
    # the label-dependent term was folded into lin1_ref in the wrapper.
    h = jnp.dot(noise_ref[...], w1b_ref[...].astype(f32),
                preferred_element_type=f32) + lin1_ref[...]
    h = _leaky_relu(h)

    # block 2: Linear(128,256) + BN(eps=0.8) + LeakyReLU
    # (Linear bias omitted: training-mode BN subtracts the batch mean, so
    #  BN(x + b) == BN(x) exactly; same for blocks 3 and 4.)
    h = jnp.dot(h, w2_ref[...].astype(f32), preferred_element_type=f32)
    h = _leaky_relu(_batchnorm_train(h, g2_ref[...], be2_ref[...]))

    # block 3: Linear(256,512) + BN + LeakyReLU
    h = jnp.dot(h, w3_ref[...].astype(f32), preferred_element_type=f32)
    h = _leaky_relu(_batchnorm_train(h, g3_ref[...], be3_ref[...]))

    # block 4: Linear(512,1024) + BN + LeakyReLU  (needs w4 -> wait only now)
    cp4.wait()
    h = jnp.dot(h, w4_buf[...].astype(f32), preferred_element_type=f32)
    h = _leaky_relu(_batchnorm_train(h, g4_ref[...], be4_ref[...]))

    # head: Linear(1024, 896-padded) + Tanh      (needs w5 -> wait only now)
    cp5.wait()
    h = jnp.dot(h, w5_buf[...].astype(f32),
                preferred_element_type=f32) + b5_ref[...]
    out_ref[...] = jnp.tanh(h)


def init_params(key):
    """Deterministic synthetic parameters (weights stored as (in, out), f32).

    Linear biases of the BN blocks (b2/b3/b4) are not materialized: training-
    mode BatchNorm subtracts the batch mean, so they cancel exactly."""
    ks = jax.random.split(key, 15)
    s = 0.05
    p = {}
    p["emb"] = jax.random.normal(ks[0], (N_CLASSES, EMB_DIM), jnp.float32)
    # Linear(138,128): split into embedding rows and noise rows (concat-free).
    p["w1a"] = s * jax.random.normal(ks[1], (EMB_DIM, 128), jnp.float32)
    p["w1b"] = s * jax.random.normal(ks[2], (LATENT, 128), jnp.float32)
    p["b1"] = s * jax.random.normal(ks[3], (1, 128), jnp.float32)
    p["w2"] = s * jax.random.normal(ks[4], (128, 256), jnp.float32)
    p["g2"] = 1.0 + 0.1 * jax.random.normal(ks[5], (1, 256), jnp.float32)
    p["be2"] = 0.1 * jax.random.normal(ks[6], (1, 256), jnp.float32)
    p["w3"] = s * jax.random.normal(ks[7], (256, 512), jnp.float32)
    p["g3"] = 1.0 + 0.1 * jax.random.normal(ks[8], (1, 512), jnp.float32)
    p["be3"] = 0.1 * jax.random.normal(ks[9], (1, 512), jnp.float32)
    p["w4"] = s * jax.random.normal(ks[10], (512, 1024), jnp.float32)
    p["g4"] = 1.0 + 0.1 * jax.random.normal(ks[11], (1, 1024), jnp.float32)
    p["be4"] = 0.1 * jax.random.normal(ks[12], (1, 1024), jnp.float32)
    p["w5"] = s * jax.random.normal(ks[13], (1024, IMG_PIX), jnp.float32)
    p["b5"] = s * jax.random.normal(ks[14], (1, IMG_PIX), jnp.float32)
    return p


def prepare_params(p):
    """Perf prep: pad head to a lane multiple (784 -> 896, zero columns) and
    cast the large weight matrices to bf16 (halves HBM weight traffic; the
    kernel upcasts them and accumulates in f32)."""
    q = dict(p)
    pad = IMG_PAD - IMG_PIX
    q["w5"] = jnp.pad(p["w5"], ((0, 0), (0, pad)))
    q["b5"] = jnp.pad(p["b5"], ((0, 0), (0, pad)))
    for k in ("w1b", "w2", "w3", "w4", "w5"):
        q[k] = q[k].astype(jnp.bfloat16)
    return q


@jax.jit
def generator_forward(noise, labels, params):
    """noise: (B, 128) f32, labels: (B,) int32 -> img (B, 28, 28, 1)."""
    B = noise.shape[0]
    p = params

    # glue: embedding row gather + fold of the label half of Linear(138,128)
    # and its bias into a single per-sample additive term (exact rewrite).
    lin1 = p["emb"][labels].astype(jnp.float32) @ p["w1a"] + p["b1"]   # (B,128)

    ins = (lin1, noise, p["w1b"],
           p["w2"], p["g2"], p["be2"],
           p["w3"], p["g3"], p["be3"],
           p["w4"], p["g4"], p["be4"],
           p["w5"], p["b5"])

    vmem = pl.BlockSpec(memory_space=pltpu.MemorySpace.VMEM)
    hbm = pl.BlockSpec(memory_space=pl.ANY)   # manual DMA inside the kernel
    in_specs = [vmem, vmem, vmem,
                vmem, vmem, vmem,
                vmem, vmem, vmem,
                hbm, vmem, vmem,
                hbm, vmem]

    flops = 2 * B * (LATENT * 128 + 128 * 256 + 256 * 512
                     + 512 * 1024 + 1024 * IMG_PAD)
    bytes_accessed = int(sum(x.size * x.dtype.itemsize for x in ins)
                         + B * IMG_PAD * 4)
    transcendentals = B * IMG_PAD + 3 * (256 + 512 + 1024)   # tanh + rsqrt

    img_flat = pl.pallas_call(
        generator_kernel,
        out_shape=jax.ShapeDtypeStruct((B, IMG_PAD), jnp.float32),
        in_specs=in_specs,
        out_specs=vmem,
        scratch_shapes=[
            pltpu.VMEM((512, 1024), jnp.bfloat16),   # w4 landing buffer
            pltpu.VMEM((1024, IMG_PAD), jnp.bfloat16),  # w5 landing buffer
            pltpu.SemaphoreType.DMA((2,)),
        ],
        compiler_params=pltpu.CompilerParams(
            vmem_limit_bytes=32 * 1024 * 1024),      # v7x-safe (64 MiB physical)
        cost_estimate=pl.CostEstimate(
            flops=flops, bytes_accessed=bytes_accessed,
            transcendentals=transcendentals),
    )(*ins)

    return img_flat[:, :IMG_PIX].reshape(B, 28, 28, 1)


def generator_reference(noise, labels, p):
    """Plain-JAX reference with identical math (same bf16-quantized weights,
    f32 accumulation) for a tight sanity check against the kernel."""
    f32 = jnp.float32
    emb = p["emb"][labels].astype(f32)
    h = _leaky_relu(emb @ p["w1a"] + noise @ p["w1b"].astype(f32) + p["b1"])
    h = _leaky_relu(_batchnorm_train(h @ p["w2"].astype(f32), p["g2"], p["be2"]))
    h = _leaky_relu(_batchnorm_train(h @ p["w3"].astype(f32), p["g3"], p["be3"]))
    h = _leaky_relu(_batchnorm_train(h @ p["w4"].astype(f32), p["g4"], p["be4"]))
    h = jnp.tanh(h @ p["w5"].astype(f32) + p["b5"])
    return h[:, :IMG_PIX].reshape(noise.shape[0], 28, 28, 1)


if __name__ == "__main__":
    key = jax.random.PRNGKey(0)
    kp, kn, kl = jax.random.split(key, 3)

    B = 8  # small batch (>1 so training-mode BatchNorm is well-defined)
    params = prepare_params(init_params(kp))
    noise = jax.random.normal(kn, (B, LATENT), jnp.float32)
    labels = jax.random.randint(kl, (B,), 0, N_CLASSES, dtype=jnp.int32)

    img = jax.block_until_ready(generator_forward(noise, labels, params))

    assert img.shape == (B, 28, 28, 1), img.shape
    assert bool(jnp.all(jnp.isfinite(img)))

    ref = jax.block_until_ready(generator_reference(noise, labels, params))
    # loose tolerance: TPU MXU f32 accumulation vs XLA default dot precision
    err = float(jnp.max(jnp.abs(img - ref)))
    assert err < 2e-2, err

    print("KERNEL_OK")
</pallas_src>

<mosaic_0001>
module attributes {stable_mosaic.version = 11 : i64} {
  func.func @generator_kernel(%arg0: memref<8x128xf32, #tpu.memory_space<vmem>>, %arg1: memref<8x128xf32, #tpu.memory_space<vmem>>, %arg2: memref<128x128xbf16, #tpu.memory_space<vmem>>, %arg3: memref<128x256xbf16, #tpu.memory_space<vmem>>, %arg4: memref<1x256xf32, #tpu.memory_space<vmem>>, %arg5: memref<1x256xf32, #tpu.memory_space<vmem>>, %arg6: memref<256x512xbf16, #tpu.memory_space<vmem>>, %arg7: memref<1x512xf32, #tpu.memory_space<vmem>>, %arg8: memref<1x512xf32, #tpu.memory_space<vmem>>, %arg9: memref<512x1024xbf16, #tpu.memory_space<any>>, %arg10: memref<1x1024xf32, #tpu.memory_space<vmem>>, %arg11: memref<1x1024xf32, #tpu.memory_space<vmem>>, %arg12: memref<1024x896xbf16, #tpu.memory_space<any>>, %arg13: memref<1x896xf32, #tpu.memory_space<vmem>>, %arg14: memref<8x896xf32, #tpu.memory_space<vmem>>, %arg15: memref<512x1024xbf16, #tpu.memory_space<vmem>>, %arg16: memref<1024x896xbf16, #tpu.memory_space<vmem>>, %arg17: memref<2x!tpu.dma_semaphore, #tpu.memory_space<semaphore_mem>>) attributes {dimension_semantics = [], scalar_prefetch = 0 : i64, scratch_operands = 3 : i64, tpu.core_type = #tpu.core_type<tc>} {
    %c0_i32 = arith.constant 0 : i32
    %0 = tpu.memref_slice %arg17[%c0_i32] : memref<2x!tpu.dma_semaphore, #tpu.memory_space<semaphore_mem>> -> memref<1x!tpu.dma_semaphore, #tpu.memory_space<semaphore_mem>>
    %1 = tpu.memref_squeeze %0 : memref<1x!tpu.dma_semaphore, #tpu.memory_space<semaphore_mem>> -> memref<!tpu.dma_semaphore, #tpu.memory_space<semaphore_mem>>
    tpu.enqueue_dma source(%arg9 : memref<512x1024xbf16, #tpu.memory_space<any>>) target(%arg15 : memref<512x1024xbf16, #tpu.memory_space<vmem>>) target_semaphore(%1 : memref<!tpu.dma_semaphore, #tpu.memory_space<semaphore_mem>>)
    %c1_i32 = arith.constant 1 : i32
    %2 = tpu.memref_slice %arg17[%c1_i32] : memref<2x!tpu.dma_semaphore, #tpu.memory_space<semaphore_mem>> -> memref<1x!tpu.dma_semaphore, #tpu.memory_space<semaphore_mem>>
    %3 = tpu.memref_squeeze %2 : memref<1x!tpu.dma_semaphore, #tpu.memory_space<semaphore_mem>> -> memref<!tpu.dma_semaphore, #tpu.memory_space<semaphore_mem>>
    tpu.enqueue_dma source(%arg12 : memref<1024x896xbf16, #tpu.memory_space<any>>) target(%arg16 : memref<1024x896xbf16, #tpu.memory_space<vmem>>) target_semaphore(%3 : memref<!tpu.dma_semaphore, #tpu.memory_space<semaphore_mem>>)
    %c0 = arith.constant 0 : index
    %c0_0 = arith.constant 0 : index
    %4 = vector.load %arg1[%c0, %c0_0] : memref<8x128xf32, #tpu.memory_space<vmem>>, vector<8x128xf32>
    %c0_1 = arith.constant 0 : index
    %c0_2 = arith.constant 0 : index
    %5 = vector.load %arg2[%c0_1, %c0_2] : memref<128x128xbf16, #tpu.memory_space<vmem>>, vector<128x128xbf16>
    %6 = arith.extf %5 : vector<128x128xbf16> to vector<128x128xf32>
    %cst = arith.constant dense<0.000000e+00> : vector<8x128xf32>
    %7 = tpu.matmul %4, %6, %cst {dimension_numbers = #tpu.dot_dimension_numbers<[1], [0], [0], [1], [0, 0, 1, 1], [], []>} : vector<8x128xf32>, vector<128x128xf32>, vector<8x128xf32> -> vector<8x128xf32>
    %c0_3 = arith.constant 0 : index
    %c0_4 = arith.constant 0 : index
    %8 = vector.load %arg0[%c0_3, %c0_4] : memref<8x128xf32, #tpu.memory_space<vmem>>, vector<8x128xf32>
    %9 = arith.addf %7, %8 : vector<8x128xf32>
    %cst_5 = arith.constant 0.000000e+00 : f32
    %10 = vector.broadcast %cst_5 : f32 to vector<8x128xf32>
    %11 = arith.cmpf ogt, %9, %10 : vector<8x128xf32>
    %cst_6 = arith.constant 2.000000e-01 : f32
    %12 = vector.broadcast %cst_6 : f32 to vector<8x128xf32>
    %13 = arith.mulf %12, %9 : vector<8x128xf32>
    %14 = arith.select %11, %9, %13 : vector<8x128xi1>, vector<8x128xf32>
    %c0_7 = arith.constant 0 : index
    %c0_8 = arith.constant 0 : index
    %15 = vector.load %arg3[%c0_7, %c0_8] : memref<128x256xbf16, #tpu.memory_space<vmem>>, vector<128x256xbf16>
    %16 = arith.extf %15 : vector<128x256xbf16> to vector<128x256xf32>
    %cst_9 = arith.constant dense<0.000000e+00> : vector<8x256xf32>
    %17 = tpu.matmul %14, %16, %cst_9 {dimension_numbers = #tpu.dot_dimension_numbers<[1], [0], [0], [1], [0, 0, 1, 1], [], []>} : vector<8x128xf32>, vector<128x256xf32>, vector<8x256xf32> -> vector<8x256xf32>
    %c0_10 = arith.constant 0 : index
    %c0_11 = arith.constant 0 : index
    %18 = vector.load %arg4[%c0_10, %c0_11] : memref<1x256xf32, #tpu.memory_space<vmem>>, vector<1x256xf32>
    %c0_12 = arith.constant 0 : index
    %c0_13 = arith.constant 0 : index
    %19 = vector.load %arg5[%c0_12, %c0_13] : memref<1x256xf32, #tpu.memory_space<vmem>>, vector<1x256xf32>
    %cst_14 = arith.constant dense<0.000000e+00> : vector<256xf32>
    %20 = vector.multi_reduction <add>, %17, %cst_14 [0] : vector<8x256xf32> to vector<256xf32>
    %21 = vector.shape_cast %20 : vector<256xf32> to vector<1x256xf32>
    %cst_15 = arith.constant 8.000000e+00 : f32
    %22 = vector.broadcast %cst_15 : f32 to vector<1x256xf32>
    %23 = arith.divf %21, %22 : vector<1x256xf32>
    %24 = vector.broadcast %23 : vector<1x256xf32> to vector<8x256xf32>
    %25 = arith.subf %17, %24 : vector<8x256xf32>
    %26 = arith.mulf %25, %25 : vector<8x256xf32>
    %cst_16 = arith.constant dense<0.000000e+00> : vector<256xf32>
    %27 = vector.multi_reduction <add>, %26, %cst_16 [0] : vector<8x256xf32> to vector<256xf32>
    %28 = vector.shape_cast %27 : vector<256xf32> to vector<1x256xf32>
    %cst_17 = arith.constant 8.000000e+00 : f32
    %29 = vector.broadcast %cst_17 : f32 to vector<1x256xf32>
    %30 = arith.divf %28, %29 : vector<1x256xf32>
    %31 = vector.broadcast %23 : vector<1x256xf32> to vector<8x256xf32>
    %32 = arith.subf %17, %31 : vector<8x256xf32>
    %cst_18 = arith.constant 8.000000e-01 : f32
    %33 = vector.broadcast %cst_18 : f32 to vector<1x256xf32>
    %34 = arith.addf %30, %33 : vector<1x256xf32>
    %35 = math.rsqrt %34 : vector<1x256xf32>
    %36 = vector.broadcast %35 : vector<1x256xf32> to vector<8x256xf32>
    %37 = arith.mulf %32, %36 : vector<8x256xf32>
    %38 = vector.broadcast %18 : vector<1x256xf32> to vector<8x256xf32>
    %39 = arith.mulf %37, %38 : vector<8x256xf32>
    %40 = vector.broadcast %19 : vector<1x256xf32> to vector<8x256xf32>
    %41 = arith.addf %39, %40 : vector<8x256xf32>
    %cst_19 = arith.constant 0.000000e+00 : f32
    %42 = vector.broadcast %cst_19 : f32 to vector<8x256xf32>
    %43 = arith.cmpf ogt, %41, %42 : vector<8x256xf32>
    %cst_20 = arith.constant 2.000000e-01 : f32
    %44 = vector.broadcast %cst_20 : f32 to vector<8x256xf32>
    %45 = arith.mulf %44, %41 : vector<8x256xf32>
    %46 = arith.select %43, %41, %45 : vector<8x256xi1>, vector<8x256xf32>
    %c0_21 = arith.constant 0 : index
    %c0_22 = arith.constant 0 : index
    %47 = vector.load %arg6[%c0_21, %c0_22] : memref<256x512xbf16, #tpu.memory_space<vmem>>, vector<256x512xbf16>
    %48 = arith.extf %47 : vector<256x512xbf16> to vector<256x512xf32>
    %cst_23 = arith.constant dense<0.000000e+00> : vector<8x512xf32>
    %49 = tpu.matmul %46, %48, %cst_23 {dimension_numbers = #tpu.dot_dimension_numbers<[1], [0], [0], [1], [0, 0, 1, 1], [], []>} : vector<8x256xf32>, vector<256x512xf32>, vector<8x512xf32> -> vector<8x512xf32>
    %c0_24 = arith.constant 0 : index
    %c0_25 = arith.constant 0 : index
    %50 = vector.load %arg7[%c0_24, %c0_25] : memref<1x512xf32, #tpu.memory_space<vmem>>, vector<1x512xf32>
    %c0_26 = arith.constant 0 : index
    %c0_27 = arith.constant 0 : index
    %51 = vector.load %arg8[%c0_26, %c0_27] : memref<1x512xf32, #tpu.memory_space<vmem>>, vector<1x512xf32>
    %cst_28 = arith.constant dense<0.000000e+00> : vector<512xf32>
    %52 = vector.multi_reduction <add>, %49, %cst_28 [0] : vector<8x512xf32> to vector<512xf32>
    %53 = vector.shape_cast %52 : vector<512xf32> to vector<1x512xf32>
    %cst_29 = arith.constant 8.000000e+00 : f32
    %54 = vector.broadcast %cst_29 : f32 to vector<1x512xf32>
    %55 = arith.divf %53, %54 : vector<1x512xf32>
    %56 = vector.broadcast %55 : vector<1x512xf32> to vector<8x512xf32>
    %57 = arith.subf %49, %56 : vector<8x512xf32>
    %58 = arith.mulf %57, %57 : vector<8x512xf32>
    %cst_30 = arith.constant dense<0.000000e+00> : vector<512xf32>
    %59 = vector.multi_reduction <add>, %58, %cst_30 [0] : vector<8x512xf32> to vector<512xf32>
    %60 = vector.shape_cast %59 : vector<512xf32> to vector<1x512xf32>
    %cst_31 = arith.constant 8.000000e+00 : f32
    %61 = vector.broadcast %cst_31 : f32 to vector<1x512xf32>
    %62 = arith.divf %60, %61 : vector<1x512xf32>
    %63 = vector.broadcast %55 : vector<1x512xf32> to vector<8x512xf32>
    %64 = arith.subf %49, %63 : vector<8x512xf32>
    %cst_32 = arith.constant 8.000000e-01 : f32
    %65 = vector.broadcast %cst_32 : f32 to vector<1x512xf32>
    %66 = arith.addf %62, %65 : vector<1x512xf32>
    %67 = math.rsqrt %66 : vector<1x512xf32>
    %68 = vector.broadcast %67 : vector<1x512xf32> to vector<8x512xf32>
    %69 = arith.mulf %64, %68 : vector<8x512xf32>
    %70 = vector.broadcast %50 : vector<1x512xf32> to vector<8x512xf32>
    %71 = arith.mulf %69, %70 : vector<8x512xf32>
    %72 = vector.broadcast %51 : vector<1x512xf32> to vector<8x512xf32>
    %73 = arith.addf %71, %72 : vector<8x512xf32>
    %cst_33 = arith.constant 0.000000e+00 : f32
    %74 = vector.broadcast %cst_33 : f32 to vector<8x512xf32>
    %75 = arith.cmpf ogt, %73, %74 : vector<8x512xf32>
    %cst_34 = arith.constant 2.000000e-01 : f32
    %76 = vector.broadcast %cst_34 : f32 to vector<8x512xf32>
    %77 = arith.mulf %76, %73 : vector<8x512xf32>
    %78 = arith.select %75, %73, %77 : vector<8x512xi1>, vector<8x512xf32>
    %c0_i32_35 = arith.constant 0 : i32
    %79 = tpu.memref_slice %arg17[%c0_i32_35] : memref<2x!tpu.dma_semaphore, #tpu.memory_space<semaphore_mem>> -> memref<1x!tpu.dma_semaphore, #tpu.memory_space<semaphore_mem>>
    %80 = tpu.memref_squeeze %79 : memref<1x!tpu.dma_semaphore, #tpu.memory_space<semaphore_mem>> -> memref<!tpu.dma_semaphore, #tpu.memory_space<semaphore_mem>>
    tpu.wait_dma2 semaphore(%80 : memref<!tpu.dma_semaphore, #tpu.memory_space<semaphore_mem>>) src(%arg9 : memref<512x1024xbf16, #tpu.memory_space<any>>) dst(%arg15 : memref<512x1024xbf16, #tpu.memory_space<vmem>>)
    %c0_36 = arith.constant 0 : index
    %c0_37 = arith.constant 0 : index
    %81 = vector.load %arg15[%c0_36, %c0_37] : memref<512x1024xbf16, #tpu.memory_space<vmem>>, vector<512x1024xbf16>
    %82 = arith.extf %81 : vector<512x1024xbf16> to vector<512x1024xf32>
    %cst_38 = arith.constant dense<0.000000e+00> : vector<8x1024xf32>
    %83 = tpu.matmul %78, %82, %cst_38 {dimension_numbers = #tpu.dot_dimension_numbers<[1], [0], [0], [1], [0, 0, 1, 1], [], []>} : vector<8x512xf32>, vector<512x1024xf32>, vector<8x1024xf32> -> vector<8x1024xf32>
    %c0_39 = arith.constant 0 : index
    %c0_40 = arith.constant 0 : index
    %84 = vector.load %arg10[%c0_39, %c0_40] : memref<1x1024xf32, #tpu.memory_space<vmem>>, vector<1x1024xf32>
    %c0_41 = arith.constant 0 : index
    %c0_42 = arith.constant 0 : index
    %85 = vector.load %arg11[%c0_41, %c0_42] : memref<1x1024xf32, #tpu.memory_space<vmem>>, vector<1x1024xf32>
    %cst_43 = arith.constant dense<0.000000e+00> : vector<1024xf32>
    %86 = vector.multi_reduction <add>, %83, %cst_43 [0] : vector<8x1024xf32> to vector<1024xf32>
    %87 = vector.shape_cast %86 : vector<1024xf32> to vector<1x1024xf32>
    %cst_44 = arith.constant 8.000000e+00 : f32
    %88 = vector.broadcast %cst_44 : f32 to vector<1x1024xf32>
    %89 = arith.divf %87, %88 : vector<1x1024xf32>
    %90 = vector.broadcast %89 : vector<1x1024xf32> to vector<8x1024xf32>
    %91 = arith.subf %83, %90 : vector<8x1024xf32>
    %92 = arith.mulf %91, %91 : vector<8x1024xf32>
    %cst_45 = arith.constant dense<0.000000e+00> : vector<1024xf32>
    %93 = vector.multi_reduction <add>, %92, %cst_45 [0] : vector<8x1024xf32> to vector<1024xf32>
    %94 = vector.shape_cast %93 : vector<1024xf32> to vector<1x1024xf32>
    %cst_46 = arith.constant 8.000000e+00 : f32
    %95 = vector.broadcast %cst_46 : f32 to vector<1x1024xf32>
    %96 = arith.divf %94, %95 : vector<1x1024xf32>
    %97 = vector.broadcast %89 : vector<1x1024xf32> to vector<8x1024xf32>
    %98 = arith.subf %83, %97 : vector<8x1024xf32>
    %cst_47 = arith.constant 8.000000e-01 : f32
    %99 = vector.broadcast %cst_47 : f32 to vector<1x1024xf32>
    %100 = arith.addf %96, %99 : vector<1x1024xf32>
    %101 = math.rsqrt %100 : vector<1x1024xf32>
    %102 = vector.broadcast %101 : vector<1x1024xf32> to vector<8x1024xf32>
    %103 = arith.mulf %98, %102 : vector<8x1024xf32>
    %104 = vector.broadcast %84 : vector<1x1024xf32> to vector<8x1024xf32>
    %105 = arith.mulf %103, %104 : vector<8x1024xf32>
    %106 = vector.broadcast %85 : vector<1x1024xf32> to vector<8x1024xf32>
    %107 = arith.addf %105, %106 : vector<8x1024xf32>
    %cst_48 = arith.constant 0.000000e+00 : f32
    %108 = vector.broadcast %cst_48 : f32 to vector<8x1024xf32>
    %109 = arith.cmpf ogt, %107, %108 : vector<8x1024xf32>
    %cst_49 = arith.constant 2.000000e-01 : f32
    %110 = vector.broadcast %cst_49 : f32 to vector<8x1024xf32>
    %111 = arith.mulf %110, %107 : vector<8x1024xf32>
    %112 = arith.select %109, %107, %111 : vector<8x1024xi1>, vector<8x1024xf32>
    %c1_i32_50 = arith.constant 1 : i32
    %113 = tpu.memref_slice %arg17[%c1_i32_50] : memref<2x!tpu.dma_semaphore, #tpu.memory_space<semaphore_mem>> -> memref<1x!tpu.dma_semaphore, #tpu.memory_space<semaphore_mem>>
    %114 = tpu.memref_squeeze %113 : memref<1x!tpu.dma_semaphore, #tpu.memory_space<semaphore_mem>> -> memref<!tpu.dma_semaphore, #tpu.memory_space<semaphore_mem>>
    tpu.wait_dma2 semaphore(%114 : memref<!tpu.dma_semaphore, #tpu.memory_space<semaphore_mem>>) src(%arg12 : memref<1024x896xbf16, #tpu.memory_space<any>>) dst(%arg16 : memref<1024x896xbf16, #tpu.memory_space<vmem>>)
    %c0_51 = arith.constant 0 : index
    %c0_52 = arith.constant 0 : index
    %115 = vector.load %arg16[%c0_51, %c0_52] : memref<1024x896xbf16, #tpu.memory_space<vmem>>, vector<1024x896xbf16>
    %116 = arith.extf %115 : vector<1024x896xbf16> to vector<1024x896xf32>
    %cst_53 = arith.constant dense<0.000000e+00> : vector<8x896xf32>
    %117 = tpu.matmul %112, %116, %cst_53 {dimension_numbers = #tpu.dot_dimension_numbers<[1], [0], [0], [1], [0, 0, 1, 1], [], []>} : vector<8x1024xf32>, vector<1024x896xf32>, vector<8x896xf32> -> vector<8x896xf32>
    %c0_54 = arith.constant 0 : index
    %c0_55 = arith.constant 0 : index
    %118 = vector.load %arg13[%c0_54, %c0_55] : memref<1x896xf32, #tpu.memory_space<vmem>>, vector<1x896xf32>
    %119 = vector.broadcast %118 : vector<1x896xf32> to vector<8x896xf32>
    %120 = arith.addf %117, %119 : vector<8x896xf32>
    %121 = math.tanh %120 : vector<8x896xf32>
    %c0_56 = arith.constant 0 : index
    %c0_57 = arith.constant 0 : index
    %122 = vector.load %arg14[%c0_56, %c0_57] : memref<8x896xf32, #tpu.memory_space<vmem>>, vector<8x896xf32>
    tpu.vector_store %arg14[%c0_56, %c0_57], %121 {strides = array<i32>} : memref<8x896xf32, #tpu.memory_space<vmem>>, vector<8x896xf32>,
    return
  }
}

</mosaic_0001>

<llo_original>
// kernel: generator_forward.1
$region0: #{generator_forward.1}
  #allocation0 [shape = 'u32[]', space=smem, size = 0x4, offset = 0x4, fixed_abs, tag = 'smem constant byte address 0x4 - core index']
  #allocation1 [shape = 'u32[72,128]{1,0:T(1,128)}', space=vmem, size = 0x9000, scoped, tag = 'internal scratch']
  #allocation2 [shape = 'bf16[512,1024]{1,0:T(8,128)(2,1)}', space=vmem, size = 0x100000, scoped, tag = 'scratch operand']
  #allocation3 [shape = 'bf16[1024,896]{1,0:T(8,128)(2,1)}', space=vmem, size = 0x1c0000, scoped, tag = 'scratch operand']
  #allocation4 [shape = 's32[2]{0}', space=sflag, size = 0x8, scoped, tag = 'scratch operand']
  #allocation22 [shape = 's32[]', space=sflag, size = 0x4, offset = 0, fixed_abs, tag = 'sflag constant byte address 0x0 - dummy sync flag']
  #allocation23 [shape = 's32[]', space=sflag, size = 0x4, offset = 0, fixed_abs, tag = 'sflag constant byte address 0x0 - dummy sync flag']
  #allocation24 [shape = 'u32[]', space=smem, size = 0x4, offset = 0x44, fixed_abs, tag = 'smem constant byte address 0x44 - assertion arg 0']
  #allocation25 [shape = 'u32[]', space=smem, size = 0x4, offset = 0x48, fixed_abs, tag = 'smem constant byte address 0x48 - assertion arg 1']
  #allocation26 [shape = 's32[]', space=sflag, size = 0x4, offset = 0, fixed_abs, tag = 'sflag constant byte address 0x0 - dummy sync flag']
  #allocation27 [shape = 's32[]', space=sflag, size = 0x4, offset = 0, fixed_abs, tag = 'sflag constant byte address 0x0 - dummy sync flag']
  %s0 = inlined_call_operand.vmem [shape: f32[8,128], index: 0, kind: input, shape index: {}]
  %s1 = inlined_call_operand.hbm [shape: f32[8,128], index: 1, kind: input, shape index: {}]
  %s2 = inlined_call_operand.hbm [shape: bf16[128,128], index: 2, kind: input, shape index: {}]
  %s3 = inlined_call_operand.hbm [shape: bf16[128,256], index: 3, kind: input, shape index: {}]
  %s4 = inlined_call_operand.hbm [shape: f32[1,256], index: 4, kind: input, shape index: {}]
  %s5 = inlined_call_operand.hbm [shape: f32[1,256], index: 5, kind: input, shape index: {}]
  %s6 = inlined_call_operand.hbm [shape: bf16[256,512], index: 6, kind: input, shape index: {}]
  %s7 = inlined_call_operand.hbm [shape: f32[1,512], index: 7, kind: input, shape index: {}]
  %s8 = inlined_call_operand.hbm [shape: f32[1,512], index: 8, kind: input, shape index: {}]
  %s9 = inlined_call_operand.hbm [shape: bf16[512,1024], index: 9, kind: input, shape index: {}]
  %s10 = inlined_call_operand.hbm [shape: f32[1,1024], index: 10, kind: input, shape index: {}]
  %s11 = inlined_call_operand.hbm [shape: f32[1,1024], index: 11, kind: input, shape index: {}]
  %s12 = inlined_call_operand.hbm [shape: bf16[1024,896], index: 12, kind: input, shape index: {}]
  %s13 = inlined_call_operand.hbm [shape: f32[1,896], index: 13, kind: input, shape index: {}]
  %s14 = inlined_call_operand.vmem [shape: f32[8,896], index: 14, kind: output, shape index: {}]
  %s15 = sld [smem:[#allocation0]]
  $region110: #{generator_forward.1} parent=0
    _
  %s17 = ssub.s32 1, %s15
  %s18 = scalar_select 0, %s17, %s15
  $region1: #{generator_forward.1} parent=0
    #allocation5 [shape = 'u8[4096]{0}', space=vmem, size = 0x1000, scoped, tag = 'input window, operand 1, single buffered']
    #allocation6 [shape = 's32[1]{0}', space=sflag, size = 0x4, scoped, tag = 'scoped memory for generator_forward.1']
    #allocation7 [shape = 'u8[32768]{0}', space=vmem, size = 0x8000, scoped, tag = 'input window, operand 2, single buffered']
    #allocation8 [shape = 's32[1]{0}', space=sflag, size = 0x4, scoped, tag = 'scoped memory for generator_forward.1']
    #allocation9 [shape = 'u8[65536]{0}', space=vmem, size = 0x10000, scoped, tag = 'input window, operand 3, single buffered']
    #allocation10 [shape = 'u8[1024]{0}', space=vmem, size = 0x400, scoped, tag = 'input window, operand 4, single buffered']
    #allocation11 [shape = 's32[1]{0}', space=sflag, size = 0x4, scoped, tag = 'scoped memory for generator_forward.1']
    #allocation12 [shape = 'u8[1024]{0}', space=vmem, size = 0x400, scoped, tag = 'input window, operand 5, single buffered']
    #allocation13 [shape = 'u8[262144]{0}', space=vmem, size = 0x40000, scoped, tag = 'input window, operand 6, single buffered']
    #allocation14 [shape = 's32[1]{0}', space=sflag, size = 0x4, scoped, tag = 'scoped memory for generator_forward.1']
    #allocation15 [shape = 'u8[2048]{0}', space=vmem, size = 0x800, scoped, tag = 'input window, operand 7, single buffered']
    #allocation16 [shape = 'u8[2048]{0}', space=vmem, size = 0x800, scoped, tag = 'input window, operand 8, single buffered']
    #allocation17 [shape = 's32[1]{0}', space=sflag, size = 0x4, scoped, tag = 'scoped memory for generator_forward.1']
    #allocation18 [shape = 'u8[4096]{0}', space=vmem, size = 0x1000, scoped, tag = 'input window, operand 10, single buffered']
    #allocation19 [shape = 'u8[4096]{0}', space=vmem, size = 0x1000, scoped, tag = 'input window, operand 11, single buffered']
    #allocation20 [shape = 's32[1]{0}', space=sflag, size = 0x4, scoped, tag = 'scoped memory for generator_forward.1']
    #allocation21 [shape = 'u8[3584]{0}', space=vmem, size = 0x1000, scoped, tag = 'input window, operand 13, single buffered']
    %19 = vsyncpa [#allocation6], 0
    %20 = vsyncpa [#allocation8], 0
    %21 = vsyncpa [#allocation11], 0
    %22 = vsyncpa [#allocation14], 0
    %23 = vsyncpa [#allocation17], 0
    %24 = vsyncpa [#allocation20], 0
    // Predicated region
    $region2: #{generator_forward.1} parent=1 // pred_check
      _
    $region3: #{generator_forward.1} parent=1 // pred_check_branch
      %26 = sbr.rel (0) target = $region5
    $region4: #{generator_forward.1} parent=1 // pred_region
      _
    $region5: #{generator_forward.1} parent=1 // pred_fallthru
      _
    // Predicated region
    $region6: #{generator_forward.1} parent=1 // pred_check
      _
    $region7: #{generator_forward.1} parent=1 // pred_check_branch
      %28 = sbr.rel (0) target = $region9
    $region8: #{generator_forward.1} parent=1 // pred_region
      %30 = vsyncadd [#allocation6], 0
      %s32 = sshll.u32 %s1, 4
      %s33 = int_to_ptr.hbm [resolvable:$true] %s32
      %s34 = sshll.u32 [#allocation5], 4
      %s35 = int_to_ptr.vmem [resolvable:$true] %s34
      %37 = dma.hbm_to_vmem [thread:$0]  %s33, 128, %s35, [#allocation6]
    $region9: #{generator_forward.1} parent=1 // pred_fallthru
      _
    // Predicated region
    $region10: #{generator_forward.1} parent=1 // pred_check
      _
    $region11: #{generator_forward.1} parent=1 // pred_check_branch
      %39 = sbr.rel (0) target = $region13
    $region12: #{generator_forward.1} parent=1 // pred_region
      %41 = vsyncadd [#allocation8], 0
      %s42 = sshll.u32 %s2, 4
      %s43 = int_to_ptr.hbm [resolvable:$true] %s42
      %s44 = sshll.u32 [#allocation7], 4
      %s45 = int_to_ptr.vmem [resolvable:$true] %s44
      %50 = dma.hbm_to_vmem [thread:$0]  %s43, 1024, %s45, [#allocation8], 64, 64, 4
    $region13: #{generator_forward.1} parent=1 // pred_fallthru
      _
    // Predicated region
    $region14: #{generator_forward.1} parent=1 // pred_check
      _
    $region15: #{generator_forward.1} parent=1 // pred_check_branch
      %52 = sbr.rel (0) target = $region17
    $region16: #{generator_forward.1} parent=1 // pred_region
      %54 = vsyncadd [#allocation8], 0
      %s55 = sshll.u32 %s3, 4
      %s56 = int_to_ptr.hbm [resolvable:$true] %s55
      %s57 = sshll.u32 [#allocation9], 4
      %s58 = int_to_ptr.vmem [resolvable:$true] %s57
      %63 = dma.hbm_to_vmem [thread:$0]  %s56, 2048, %s58, [#allocation8], 128, 128, 8
    $region17: #{generator_forward.1} parent=1 // pred_fallthru
      _
    // Predicated region
    $region18: #{generator_forward.1} parent=1 // pred_check
      _
    $region19: #{generator_forward.1} parent=1 // pred_check_branch
      %65 = sbr.rel (0) target = $region21
    $region20: #{generator_forward.1} parent=1 // pred_region
      %67 = vsyncadd [#allocation11], 0
      %s69 = sshll.u32 %s4, 4
      %s70 = int_to_ptr.hbm [resolvable:$true] %s69
      %s71 = sshll.u32 [#allocation10], 4
      %s72 = int_to_ptr.vmem [resolvable:$true] %s71
      %74 = dma.hbm_to_vmem [thread:$0]  %s70, 32, %s72, [#allocation11]
    $region21: #{generator_forward.1} parent=1 // pred_fallthru
      _
    // Predicated region
    $region22: #{generator_forward.1} parent=1 // pred_check
      _
    $region23: #{generator_forward.1} parent=1 // pred_check_branch
      %76 = sbr.rel (0) target = $region25
    $region24: #{generator_forward.1} parent=1 // pred_region
      %78 = vsyncadd [#allocation11], 0
      %s80 = sshll.u32 %s5, 4
      %s81 = int_to_ptr.hbm [resolvable:$true] %s80
      %s82 = sshll.u32 [#allocation12], 4
      %s83 = int_to_ptr.vmem [resolvable:$true] %s82
      %85 = dma.hbm_to_vmem [thread:$0]  %s81, 32, %s83, [#allocation11]
    $region25: #{generator_forward.1} parent=1 // pred_fallthru
      _
    // Predicated region
    $region26: #{generator_forward.1} parent=1 // pred_check
      _
    $region27: #{generator_forward.1} parent=1 // pred_check_branch
      %87 = sbr.rel (0) target = $region29
    $region28: #{generator_forward.1} parent=1 // pred_region
      %89 = vsyncadd [#allocation14], 0
      %s90 = sshll.u32 %s6, 4
      %s91 = int_to_ptr.hbm [resolvable:$true] %s90
      %s92 = sshll.u32 [#allocation13], 4
      %s93 = int_to_ptr.vmem [resolvable:$true] %s92
      %98 = dma.hbm_to_vmem [thread:$0]  %s91, 8192, %s93, [#allocation14], 256, 256, 16
    $region29: #{generator_forward.1} parent=1 // pred_fallthru
      _
    // Predicated region
    $region30: #{generator_forward.1} parent=1 // pred_check
      _
    $region31: #{generator_forward.1} parent=1 // pred_check_branch
      %100 = sbr.rel (0) target = $region33
    $region32: #{generator_forward.1} parent=1 // pred_region
      %102 = vsyncadd [#allocation14], 0
      %s104 = sshll.u32 %s7, 4
      %s105 = int_to_ptr.hbm [resolvable:$true] %s104
      %s106 = sshll.u32 [#allocation15], 4
      %s107 = int_to_ptr.vmem [resolvable:$true] %s106
      %109 = dma.hbm_to_vmem [thread:$0]  %s105, 64, %s107, [#allocation14]
    $region33: #{generator_forward.1} parent=1 // pred_fallthru
      _
    // Predicated region
    $region34: #{generator_forward.1} parent=1 // pred_check
      _
    $region35: #{generator_forward.1} parent=1 // pred_check_branch
      %111 = sbr.rel (0) target = $region37
    $region36: #{generator_forward.1} parent=1 // pred_region
      %113 = vsyncadd [#allocation17], 0
      %s115 = sshll.u32 %s8, 4
      %s116 = int_to_ptr.hbm [resolvable:$true] %s115
      %s117 = sshll.u32 [#allocation16], 4
      %s118 = int_to_ptr.vmem [resolvable:$true] %s117
      %120 = dma.hbm_to_vmem [thread:$0]  %s116, 64, %s118, [#allocation17]
    $region37: #{generator_forward.1} parent=1 // pred_fallthru
      _
    // Predicated region
    $region38: #{generator_forward.1} parent=1 // pred_check
      _
    $region39: #{generator_forward.1} parent=1 // pred_check_branch
      %122 = sbr.rel (0) target = $region41
    $region40: #{generator_forward.1} parent=1 // pred_region
      %124 = vsyncadd [#allocation17], 0
      %s126 = sshll.u32 %s10, 4
      %s127 = int_to_ptr.hbm [resolvable:$true] %s126
      %s128 = sshll.u32 [#allocation18], 4
      %s129 = int_to_ptr.vmem [resolvable:$true] %s128
      %131 = dma.hbm_to_vmem [thread:$0]  %s127, 128, %s129, [#allocation17]
    $region41: #{generator_forward.1} parent=1 // pred_fallthru
      _
    // Predicated region
    $region42: #{generator_forward.1} parent=1 // pred_check
      _
    $region43: #{generator_forward.1} parent=1 // pred_check_branch
      %133 = sbr.rel (0) target = $region45
    $region44: #{generator_forward.1} parent=1 // pred_region
      %135 = vsyncadd [#allocation20], 0
      %s137 = sshll.u32 %s11, 4
      %s138 = int_to_ptr.hbm [resolvable:$true] %s137
      %s139 = sshll.u32 [#allocation19], 4
      %s140 = int_to_ptr.vmem [resolvable:$true] %s139
      %142 = dma.hbm_to_vmem [thread:$0]  %s138, 128, %s140, [#allocation20]
    $region45: #{generator_forward.1} parent=1 // pred_fallthru
      _
    // Predicated region
    $region46: #{generator_forward.1} parent=1 // pred_check
      _
    $region47: #{generator_forward.1} parent=1 // pred_check_branch
      %144 = sbr.rel (0) target = $region49
    $region48: #{generator_forward.1} parent=1 // pred_region
      %146 = vsyncadd [#allocation20], 0
      %s148 = sshll.u32 %s13, 4
      %s149 = int_to_ptr.hbm [resolvable:$true] %s148
      %s150 = sshll.u32 [#allocation21], 4
      %s151 = int_to_ptr.vmem [resolvable:$true] %s150
      %153 = dma.hbm_to_vmem [thread:$0]  %s149, 112, %s151, [#allocation20]
    $region49: #{generator_forward.1} parent=1 // pred_fallthru
      _
    // Predicated region
    $region50: #{generator_forward.1} parent=1 // pred_check
      _
    $region51: #{generator_forward.1} parent=1 // pred_check_branch
      %155 = sbr.rel (0) target = $region53
    $region52: #{generator_forward.1} parent=1 // pred_region
      %157 = dma.done [#allocation6], 128
    $region53: #{generator_forward.1} parent=1 // pred_fallthru
      _
    // Predicated region
    $region54: #{generator_forward.1} parent=1 // pred_check
      _
    $region55: #{generator_forward.1} parent=1 // pred_check_branch
      %159 = sbr.rel (0) target = $region57
    $region56: #{generator_forward.1} parent=1 // pred_region
      %161 = dma.done [#allocation8], 1024
    $region57: #{generator_forward.1} parent=1 // pred_fallthru
      _
    // Predicated region
    $region58: #{generator_forward.1} parent=1 // pred_check
      _
    $region59: #{generator_forward.1} parent=1 // pred_check_branch
      %163 = sbr.rel (0) target = $region61
    $region60: #{generator_forward.1} parent=1 // pred_region
      %165 = dma.done [#allocation8], 2048
    $region61: #{generator_forward.1} parent=1 // pred_fallthru
      _
    // Predicated region
    $region62: #{generator_forward.1} parent=1 // pred_check
      _
    $region63: #{generator_forward.1} parent=1 // pred_check_branch
      %167 = sbr.rel (0) target = $region65
    $region64: #{generator_forward.1} parent=1 // pred_region
      %169 = dma.done [#allocation11], 32
    $region65: #{generator_forward.1} parent=1 // pred_fallthru
      _
    // Predicated region
    $region66: #{generator_forward.1} parent=1 // pred_check
      _
    $region67: #{generator_forward.1} parent=1 // pred_check_branch
      %171 = sbr.rel (0) target = $region69
    $region68: #{generator_forward.1} parent=1 // pred_region
      %173 = dma.done [#allocation11], 32
    $region69: #{generator_forward.1} parent=1 // pred_fallthru
      _
    // Predicated region
    $region70: #{generator_forward.1} parent=1 // pred_check
      _
    $region71: #{generator_forward.1} parent=1 // pred_check_branch
      %175 = sbr.rel (0) target = $region73
    $region72: #{generator_forward.1} parent=1 // pred_region
      %177 = dma.done [#allocation14], 8192
    $region73: #{generator_forward.1} parent=1 // pred_fallthru
      _
    // Predicated region
    $region74: #{generator_forward.1} parent=1 // pred_check
      _
    $region75: #{generator_forward.1} parent=1 // pred_check_branch
      %179 = sbr.rel (0) target = $region77
    $region76: #{generator_forward.1} parent=1 // pred_region
      %181 = dma.done [#allocation14], 64
    $region77: #{generator_forward.1} parent=1 // pred_fallthru
      _
    // Predicated region
    $region78: #{generator_forward.1} parent=1 // pred_check
      _
    $region79: #{generator_forward.1} parent=1 // pred_check_branch
      %183 = sbr.rel (0) target = $region81
    $region80: #{generator_forward.1} parent=1 // pred_region
      %185 = dma.done [#allocation17], 64
    $region81: #{generator_forward.1} parent=1 // pred_fallthru
      _
    // Predicated region
    $region82: #{generator_forward.1} parent=1 // pred_check
      _
    $region83: #{generator_forward.1} parent=1 // pred_check_branch
      %187 = sbr.rel (0) target = $region85
    $region84: #{generator_forward.1} parent=1 // pred_region
      %189 = dma.done [#allocation17], 128
    $region85: #{generator_forward.1} parent=1 // pred_fallthru
      _
    // Predicated region
    $region86: #{generator_forward.1} parent=1 // pred_check
      _
    $region87: #{generator_forward.1} parent=1 // pred_check_branch
      %191 = sbr.rel (0) target = $region89
    $region88: #{generator_forward.1} parent=1 // pred_region
      %193 = dma.done [#allocation20], 128
    $region89: #{generator_forward.1} parent=1 // pred_fallthru
      _
    // Predicated region
    $region90: #{generator_forward.1} parent=1 // pred_check
      _
    $region91: #{generator_forward.1} parent=1 // pred_check_branch
      %195 = sbr.rel (0) target = $region93
    $region92: #{generator_forward.1} parent=1 // pred_region
      %197 = dma.done [#allocation20], 112
    $region93: #{generator_forward.1} parent=1 // pred_fallthru
      _
    // Predicated region
    $region94: #{generator_forward.1} parent=1 // pred_check
      _
    $region95: #{generator_forward.1} parent=1 // pred_check_branch
      %199 = sbr.rel target = $region97
    $region96: #{generator_forward.1} parent=1 // pred_region
      %200 = sst [smem:[#allocation24]] [#allocation23]
      %201 = sst [smem:[#allocation25]] [#allocation22]
    $region97: #{generator_forward.1} parent=1 // pred_fallthru
      _
    %203 = shalt.err (0)
    %s205 = sshll.u32 %s9, 4
    %s206 = int_to_ptr.hbm [resolvable:$true] %s205
    %s207 = sshll.u32 [#allocation2], 4
    %s208 = int_to_ptr.vmem [resolvable:$true] %s207
    %210 = dma.hbm_to_vmem [thread:$0]  %s206, 32768, %s208, [#allocation4]
    %s211 = scalar_lea.sflag [#allocation4], 1
    // Predicated region
    $region98: #{generator_forward.1} parent=1 // pred_check
      _
    $region99: #{generator_forward.1} parent=1 // pred_check_branch
      %213 = sbr.rel target = $region101
    $region100: #{generator_forward.1} parent=1 // pred_region
      %214 = sst [smem:[#allocation24]] [#allocation27]
      %215 = sst [smem:[#allocation25]] [#allocation26]
    $region101: #{generator_forward.1} parent=1 // pred_fallthru
      _
    %217 = shalt.err (0)
    %s219 = sshll.u32 %s12, 4
    %s220 = int_to_ptr.hbm [resolvable:$true] %s219
    %s221 = sshll.u32 [#allocation3], 4
    %s222 = int_to_ptr.vmem [resolvable:$true] %s221
    %224 = dma.hbm_to_vmem [thread:$0]  %s220, 57344, %s222, %s211
    %v225 = vld [vmem:[#allocation5] sm:$0xff]
    %v226 = vld [vmem:[#allocation7] sm:$0xf]
    %v227 = vld [vmem:[#allocation7 + $0x4] sm:$0xf]
    %v228 = vld [vmem:[#allocation7 + $0x8] sm:$0xf]
    %v229 = vld [vmem:[#allocation7 + $0xc] sm:$0xf]
    %v230 = vld [vmem:[#allocation7 + $0x10] sm:$0xf]
    %v231 = vld [vmem:[#allocation7 + $0x14] sm:$0xf]
    %v232 = vld [vmem:[#allocation7 + $0x18] sm:$0xf]
    %v233 = vld [vmem:[#allocation7 + $0x1c] sm:$0xf]
    %v234 = vld [vmem:[#allocation7 + $0x20] sm:$0xf]
    %v235 = vld [vmem:[#allocation7 + $0x24] sm:$0xf]
    %v236 = vld [vmem:[#allocation7 + $0x28] sm:$0xf]
    %v237 = vld [vmem:[#allocation7 + $0x2c] sm:$0xf]
    %v238 = vld [vmem:[#allocation7 + $0x30] sm:$0xf]
    %v239 = vld [vmem:[#allocation7 + $0x34] sm:$0xf]
    %v240 = vld [vmem:[#allocation7 + $0x38] sm:$0xf]
    %v241 = vld [vmem:[#allocation7 + $0x3c] sm:$0xf]
    %v242 = vunpack.c.l.bf16 %v226
    %v243 = vunpack.c.l.bf16 %v227
    %v244 = vunpack.c.l.bf16 %v228
    %v245 = vunpack.c.l.bf16 %v229
    %v246 = vunpack.c.l.bf16 %v230
    %v247 = vunpack.c.l.bf16 %v231
    %v248 = vunpack.c.l.bf16 %v232
    %v249 = vunpack.c.l.bf16 %v233
    %v250 = vunpack.c.l.bf16 %v234
    %v251 = vunpack.c.l.bf16 %v235
    %v252 = vunpack.c.l.bf16 %v236
    %v253 = vunpack.c.l.bf16 %v237
    %v254 = vunpack.c.l.bf16 %v238
    %v255 = vunpack.c.l.bf16 %v239
    %v256 = vunpack.c.l.bf16 %v240
    %v257 = vunpack.c.l.bf16 %v241
    %v258 = vld [vmem:[%s0] sm:$0xff]
    %259 = vmatpush.msra.mxu0 %v257
    %260 = vmatpush.msra.mxu0 %v256
    %261 = vmatpush.msra.mxu0 %v255
    %262 = vmatpush.msra.mxu0 %v254
    %263 = vmatpush.msra.mxu0 %v253
    %264 = vmatpush.msra.mxu0 %v252
    %265 = vmatpush.msra.mxu0 %v251
    %266 = vmatpush.msra.mxu0 %v250
    %267 = vmatpush.msra.mxu0 %v249
    %268 = vmatpush.msra.mxu0 %v248
    %269 = vmatpush.msra.mxu0 %v247
    %270 = vmatpush.msra.mxu0 %v246
    %271 = vmatpush.msra.mxu0 %v245
    %272 = vmatpush.msra.mxu0 %v244
    %273 = vmatpush.msra.mxu0 %v243
    %274 = vmatpush.msra.mxu0 %v242
    %275 = vmatmul.f32.gmra.mxu0 %v225
    %v276 = vpop.f32.mrf.mxu0
    %v277 = vadd.f32 %v258, %v276
    %278 = vdwg.mxu0
    %vm279 = vcmp.gt.f32.partialorder %v277, 0.0
    %v280 = vmul.f32 %v277, 0.2
    %v281 = vsel %vm279, %v277, %v280
    %v282 = vld [vmem:[#allocation9] sm:$0xff]
    %v283 = vld [vmem:[#allocation9 + $0x8] sm:$0xff]
    %v284 = vld [vmem:[#allocation9 + $0x10] sm:$0xff]
    %v285 = vld [vmem:[#allocation9 + $0x18] sm:$0xff]
    %v286 = vld [vmem:[#allocation9 + $0x20] sm:$0xff]
    %v287 = vld [vmem:[#allocation9 + $0x28] sm:$0xff]
    %v288 = vld [vmem:[#allocation9 + $0x30] sm:$0xff]
    %v289 = vld [vmem:[#allocation9 + $0x38] sm:$0xff]
    %v290 = vld [vmem:[#allocation9 + $0x40] sm:$0xff]
    %v291 = vld [vmem:[#allocation9 + $0x48] sm:$0xff]
    %v292 = vld [vmem:[#allocation9 + $0x50] sm:$0xff]
    %v293 = vld [vmem:[#allocation9 + $0x58] sm:$0xff]
    %v294 = vld [vmem:[#allocation9 + $0x60] sm:$0xff]
    %v295 = vld [vmem:[#allocation9 + $0x68] sm:$0xff]
    %v296 = vld [vmem:[#allocation9 + $0x70] sm:$0xff]
    %v297 = vld [vmem:[#allocation9 + $0x78] sm:$0xff]
    %v298 = vunpack.c.l.bf16 %v282
    %v299 = vunpack.c.h.bf16 %v282
    %v300 = vunpack.c.l.bf16 %v283
    %v301 = vunpack.c.h.bf16 %v283
    %v302 = vunpack.c.l.bf16 %v284
    %v303 = vunpack.c.h.bf16 %v284
    %v304 = vunpack.c.l.bf16 %v285
    %v305 = vunpack.c.h.bf16 %v285
    %v306 = vunpack.c.l.bf16 %v286
    %v307 = vunpack.c.h.bf16 %v286
    %v308 = vunpack.c.l.bf16 %v287
    %v309 = vunpack.c.h.bf16 %v287
    %v310 = vunpack.c.l.bf16 %v288
    %v311 = vunpack.c.h.bf16 %v288
    %v312 = vunpack.c.l.bf16 %v289
    %v313 = vunpack.c.h.bf16 %v289
    %v314 = vunpack.c.l.bf16 %v290
    %v315 = vunpack.c.h.bf16 %v290
    %v316 = vunpack.c.l.bf16 %v291
    %v317 = vunpack.c.h.bf16 %v291
    %v318 = vunpack.c.l.bf16 %v292
    %v319 = vunpack.c.h.bf16 %v292
    %v320 = vunpack.c.l.bf16 %v293
    %v321 = vunpack.c.h.bf16 %v293
    %v322 = vunpack.c.l.bf16 %v294
    %v323 = vunpack.c.h.bf16 %v294
    %v324 = vunpack.c.l.bf16 %v295
    %v325 = vunpack.c.h.bf16 %v295
    %v326 = vunpack.c.l.bf16 %v296
    %v327 = vunpack.c.h.bf16 %v296
    %v328 = vunpack.c.l.bf16 %v297
    %v329 = vunpack.c.h.bf16 %v297
    %330 = vmatpush.msra.mxu0 %v328
    %331 = vmatpush.msra.mxu0 %v326
    %332 = vmatpush.msra.mxu0 %v324
    %333 = vmatpush.msra.mxu0 %v322
    %334 = vmatpush.msra.mxu0 %v320
    %335 = vmatpush.msra.mxu0 %v318
    %336 = vmatpush.msra.mxu0 %v316
    %337 = vmatpush.msra.mxu0 %v314
    %338 = vmatpush.msra.mxu0 %v312
    %339 = vmatpush.msra.mxu0 %v310
    %340 = vmatpush.msra.mxu0 %v308
    %341 = vmatpush.msra.mxu0 %v306
    %342 = vmatpush.msra.mxu0 %v304
    %343 = vmatpush.msra.mxu0 %v302
    %344 = vmatpush.msra.mxu0 %v300
    %345 = vmatpush.msra.mxu0 %v298
    %346 = vmatmul.f32.gmra.mxu0 %v281
    %v347 = vpop.f32.mrf.mxu0
    %v348 = vadd.f32 0.0, %v347
    %349 = vdwg.mxu0
    %350 = vmatpush.msra.mxu0 %v329
    %351 = vmatpush.msra.mxu0 %v327
    %352 = vmatpush.msra.mxu0 %v325
    %353 = vmatpush.msra.mxu0 %v323
    %354 = vmatpush.msra.mxu0 %v321
    %355 = vmatpush.msra.mxu0 %v319
    %356 = vmatpush.msra.mxu0 %v317
    %357 = vmatpush.msra.mxu0 %v315
    %358 = vmatpush.msra.mxu0 %v313
    %359 = vmatpush.msra.mxu0 %v311
    %360 = vmatpush.msra.mxu0 %v309
    %361 = vmatpush.msra.mxu0 %v307
    %362 = vmatpush.msra.mxu0 %v305
    %363 = vmatpush.msra.mxu0 %v303
    %364 = vmatpush.msra.mxu0 %v301
    %365 = vmatpush.msra.mxu0 %v299
    %366 = vmatmul.f32.gmra.mxu0 %v281
    %v367 = vpop.f32.mrf.mxu0
    %v368 = vadd.f32 0.0, %v367
    %369 = vdwg.mxu0
    %v370 = vld [vmem:[#allocation10] sm:$0x3]
    %v371 = vld [vmem:[#allocation12] sm:$0x3]
    %v372 = vrot.slane %v348, 4
    %v373 = vadd.f32 %v348, %v372
    %v374 = vrot.slane %v373, 2
    %v375 = vadd.f32 %v373, %v374
    %v376 = vrot.slane %v375, 1
    %v377 = vadd.f32 %v375, %v376
    %v378 = vrot.slane %v368, 4
    %v379 = vadd.f32 %v368, %v378
    %v380 = vrot.slane %v379, 2
    %v381 = vadd.f32 %v379, %v380
    %v382 = vrot.slane %v381, 1
    %v383 = vadd.f32 %v381, %v382
    %v384 = vrcp.pop 8.0
    %v385 = vmul.f32 8.0, %v384
    %v386 = vsub.f32 1.0, %v385
    %v387 = vmul.f32 %v384, %v386
    %v388 = vadd.f32 %v384, %v387
    %vm389 = vweird.f32 %v384
    %v390 = vsel %vm389, %v384, %v388
    %v391 = vmul.f32 %v377, %v390
    %v392 = vmul.f32 %v383, %v390
    %v393 = vsub.f32 %v348, %v391
    %v394 = vsub.f32 %v368, %v392
    %v395 = vmul.f32 %v393, %v393
    %v396 = vmul.f32 %v394, %v394
    %v397 = vrot.slane %v395, 4
    %v398 = vadd.f32 %v395, %v397
    %v399 = vrot.slane %v398, 2
    %v400 = vadd.f32 %v398, %v399
    %v401 = vrot.slane %v400, 1
    %v402 = vadd.f32 %v400, %v401
    %v403 = vrot.slane %v396, 4
    %v404 = vadd.f32 %v396, %v403
    %v405 = vrot.slane %v404, 2
    %v406 = vadd.f32 %v404, %v405
    %v407 = vrot.slane %v406, 1
    %v408 = vadd.f32 %v406, %v407
    %v409 = vmul.f32 %v402, %v390
    %v410 = vmul.f32 %v408, %v390
    %v411 = vadd.f32 %v409, 0.8
    %v412 = vadd.f32 %v410, 0.8
    %v413 = vrsqrt.pop %v411
    %v414 = vmul.f32 %v413, %v411
    %v415 = vmul.f32 %v414, %v413
    %v416 = vmul.f32 0.5, %v415
    %v417 = vsub.f32 1.5, %v416
    %v418 = vmul.f32 %v413, %v417
    %vm419 = vweird.f32 %v411
    %vm420 = vweird.f32 %v413
    %vm421 = vmor %vm419, %vm420
    %v422 = vsel %vm421, %v413, %v418
    %v423 = vrsqrt.pop %v412
    %v424 = vmul.f32 %v423, %v412
    %v425 = vmul.f32 %v424, %v423
    %v426 = vmul.f32 0.5, %v425
    %v427 = vsub.f32 1.5, %v426
    %v428 = vmul.f32 %v423, %v427
    %vm429 = vweird.f32 %v412
    %vm430 = vweird.f32 %v423
    %vm431 = vmor %vm429, %vm430
    %v432 = vsel %vm431, %v423, %v428
    %v433 = vmul.f32 %v393, %v422
    %v434 = vmul.f32 %v394, %v432
    %v436 = vperm.slane %v370, 0
    %v437 = vperm.slane %v370, 1
    %v440 = vmul.f32 %v433, %v436
    %v441 = vmul.f32 %v434, %v437
    %v443 = vperm.slane %v371, 0
    %v444 = vperm.slane %v371, 1
    %v447 = vadd.f32 %v440, %v443
    %v448 = vadd.f32 %v441, %v444
    %vm449 = vcmp.gt.f32.partialorder %v447, 0.0
    %vm450 = vcmp.gt.f32.partialorder %v448, 0.0
    %v451 = vmul.f32 %v447, 0.2
    %v452 = vmul.f32 %v448, 0.2
    %v453 = vsel %vm449, %v447, %v451
    %v454 = vsel %vm450, %v448, %v452
    %v455 = vld [vmem:[#allocation13] sm:$0xff]
    %v456 = vld [vmem:[#allocation13 + $0x8] sm:$0xff]
    %v457 = vld [vmem:[#allocation13 + $0x10] sm:$0xff]
    %v458 = vld [vmem:[#allocation13 + $0x18] sm:$0xff]
    %v459 = vld [vmem:[#allocation13 + $0x20] sm:$0xff]
    %v460 = vld [vmem:[#allocation13 + $0x28] sm:$0xff]
    %v461 = vld [vmem:[#allocation13 + $0x30] sm:$0xff]
    %v462 = vld [vmem:[#allocation13 + $0x38] sm:$0xff]
    %v463 = vld [vmem:[#allocation13 + $0x40] sm:$0xff]
    %v464 = vld [vmem:[#allocation13 + $0x48] sm:$0xff]
    %v465 = vld [vmem:[#allocation13 + $0x50] sm:$0xff]
    %v466 = vld [vmem:[#allocation13 + $0x58] sm:$0xff]
    %v467 = vld [vmem:[#allocation13 + $0x60] sm:$0xff]
    %v468 = vld [vmem:[#allocation13 + $0x68] sm:$0xff]
    %v469 = vld [vmem:[#allocation13 + $0x70] sm:$0xff]
    %v470 = vld [vmem:[#allocation13 + $0x78] sm:$0xff]
    %v471 = vld [vmem:[#allocation13 + $0x80] sm:$0xff]
    %v472 = vld [vmem:[#allocation13 + $0x88] sm:$0xff]
    %v473 = vld [vmem:[#allocation13 + $0x90] sm:$0xff]
    %v474 = vld [vmem:[#allocation13 + $0x98] sm:$0xff]
    %v475 = vld [vmem:[#allocation13 + $0xa0] sm:$0xff]
    %v476 = vld [vmem:[#allocation13 + $0xa8] sm:$0xff]
    %v477 = vld [vmem:[#allocation13 + $0xb0] sm:$0xff]
    %v478 = vld [vmem:[#allocation13 + $0xb8] sm:$0xff]
    %v479 = vld [vmem:[#allocation13 + $0xc0] sm:$0xff]
    %v480 = vld [vmem:[#allocation13 + $0xc8] sm:$0xff]
    %v481 = vld [vmem:[#allocation13 + $0xd0] sm:$0xff]
    %v482 = vld [vmem:[#allocation13 + $0xd8] sm:$0xff]
    %v483 = vld [vmem:[#allocation13 + $0xe0] sm:$0xff]
    %v484 = vld [vmem:[#allocation13 + $0xe8] sm:$0xff]
    %v485 = vld [vmem:[#allocation13 + $0xf0] sm:$0xff]
    %v486 = vld [vmem:[#allocation13 + $0xf8] sm:$0xff]
    %v487 = vld [vmem:[#allocation13 + $0x100] sm:$0xff]
    %v488 = vld [vmem:[#allocation13 + $0x108] sm:$0xff]
    %v489 = vld [vmem:[#allocation13 + $0x110] sm:$0xff]
    %v490 = vld [vmem:[#allocation13 + $0x118] sm:$0xff]
    %v491 = vld [vmem:[#allocation13 + $0x120] sm:$0xff]
    %v492 = vld [vmem:[#allocation13 + $0x128] sm:$0xff]
    %v493 = vld [vmem:[#allocation13 + $0x130] sm:$0xff]
    %v494 = vld [vmem:[#allocation13 + $0x138] sm:$0xff]
    %v495 = vld [vmem:[#allocation13 + $0x140] sm:$0xff]
    %v496 = vld [vmem:[#allocation13 + $0x148] sm:$0xff]
    %v497 = vld [vmem:[#allocation13 + $0x150] sm:$0xff]
    %v498 = vld [vmem:[#allocation13 + $0x158] sm:$0xff]
    %v499 = vld [vmem:[#allocation13 + $0x160] sm:$0xff]
    %v500 = vld [vmem:[#allocation13 + $0x168] sm:$0xff]
    %v501 = vld [vmem:[#allocation13 + $0x170] sm:$0xff]
    %v502 = vld [vmem:[#allocation13 + $0x178] sm:$0xff]
    %v503 = vld [vmem:[#allocation13 + $0x180] sm:$0xff]
    %v504 = vld [vmem:[#allocation13 + $0x188] sm:$0xff]
    %v505 = vld [vmem:[#allocation13 + $0x190] sm:$0xff]
    %v506 = vld [vmem:[#allocation13 + $0x198] sm:$0xff]
    %v507 = vld [vmem:[#allocation13 + $0x1a0] sm:$0xff]
    %v508 = vld [vmem:[#allocation13 + $0x1a8] sm:$0xff]
    %v509 = vld [vmem:[#allocation13 + $0x1b0] sm:$0xff]
    %v510 = vld [vmem:[#allocation13 + $0x1b8] sm:$0xff]
    %v511 = vld [vmem:[#allocation13 + $0x1c0] sm:$0xff]
    %v512 = vld [vmem:[#allocation13 + $0x1c8] sm:$0xff]
    %v513 = vld [vmem:[#allocation13 + $0x1d0] sm:$0xff]
    %v514 = vld [vmem:[#allocation13 + $0x1d8] sm:$0xff]
    %v515 = vld [vmem:[#allocation13 + $0x1e0] sm:$0xff]
    %v516 = vld [vmem:[#allocation13 + $0x1e8] sm:$0xff]
    %v517 = vld [vmem:[#allocation13 + $0x1f0] sm:$0xff]
    %v518 = vld [vmem:[#allocation13 + $0x1f8] sm:$0xff]
    %v519 = vunpack.c.l.bf16 %v455
    %v520 = vunpack.c.h.bf16 %v455
    %v521 = vunpack.c.l.bf16 %v456
    %v522 = vunpack.c.h.bf16 %v456
    %v523 = vunpack.c.l.bf16 %v457
    %v524 = vunpack.c.h.bf16 %v457
    %v525 = vunpack.c.l.bf16 %v458
    %v526 = vunpack.c.h.bf16 %v458
    %v527 = vunpack.c.l.bf16 %v459
    %v528 = vunpack.c.h.bf16 %v459
    %v529 = vunpack.c.l.bf16 %v460
    %v530 = vunpack.c.h.bf16 %v460
    %v531 = vunpack.c.l.bf16 %v461
    %v532 = vunpack.c.h.bf16 %v461
    %v533 = vunpack.c.l.bf16 %v462
    %v534 = vunpack.c.h.bf16 %v462
    %v535 = vunpack.c.l.bf16 %v463
    %v536 = vunpack.c.h.bf16 %v463
    %v537 = vunpack.c.l.bf16 %v464
    %v538 = vunpack.c.h.bf16 %v464
    %v539 = vunpack.c.l.bf16 %v465
    %v540 = vunpack.c.h.bf16 %v465
    %v541 = vunpack.c.l.bf16 %v466
    %v542 = vunpack.c.h.bf16 %v466
    %v543 = vunpack.c.l.bf16 %v467
    %v544 = vunpack.c.h.bf16 %v467
    %v545 = vunpack.c.l.bf16 %v468
    %v546 = vunpack.c.h.bf16 %v468
    %v547 = vunpack.c.l.bf16 %v469
    %v548 = vunpack.c.h.bf16 %v469
    %v549 = vunpack.c.l.bf16 %v470
    %v550 = vunpack.c.h.bf16 %v470
    %v551 = vunpack.c.l.bf16 %v471
    %v552 = vunpack.c.h.bf16 %v471
    %v553 = vunpack.c.l.bf16 %v472
    %v554 = vunpack.c.h.bf16 %v472
    %v555 = vunpack.c.l.bf16 %v473
    %v556 = vunpack.c.h.bf16 %v473
    %v557 = vunpack.c.l.bf16 %v474
    %v558 = vunpack.c.h.bf16 %v474
    %v559 = vunpack.c.l.bf16 %v475
    %v560 = vunpack.c.h.bf16 %v475
    %v561 = vunpack.c.l.bf16 %v476
    %v562 = vunpack.c.h.bf16 %v476
    %v563 = vunpack.c.l.bf16 %v477
    %v564 = vunpack.c.h.bf16 %v477
    %v565 = vunpack.c.l.bf16 %v478
    %v566 = vunpack.c.h.bf16 %v478
    %v567 = vunpack.c.l.bf16 %v479
    %v568 = vunpack.c.h.bf16 %v479
    %v569 = vunpack.c.l.bf16 %v480
    %v570 = vunpack.c.h.bf16 %v480
    %v571 = vunpack.c.l.bf16 %v481
    %v572 = vunpack.c.h.bf16 %v481
    %v573 = vunpack.c.l.bf16 %v482
    %v574 = vunpack.c.h.bf16 %v482
    %v575 = vunpack.c.l.bf16 %v483
    %v576 = vunpack.c.h.bf16 %v483
    %v577 = vunpack.c.l.bf16 %v484
    %v578 = vunpack.c.h.bf16 %v484
    %v579 = vunpack.c.l.bf16 %v485
    %v580 = vunpack.c.h.bf16 %v485
    %v581 = vunpack.c.l.bf16 %v486
    %v582 = vunpack.c.h.bf16 %v486
    %v583 = vunpack.c.l.bf16 %v487
    %v584 = vunpack.c.h.bf16 %v487
    %v585 = vunpack.c.l.bf16 %v488
    %v586 = vunpack.c.h.bf16 %v488
    %v587 = vunpack.c.l.bf16 %v489
    %v588 = vunpack.c.h.bf16 %v489
    %v589 = vunpack.c.l.bf16 %v490
    %v590 = vunpack.c.h.bf16 %v490
    %v591 = vunpack.c.l.bf16 %v491
    %v592 = vunpack.c.h.bf16 %v491
    %v593 = vunpack.c.l.bf16 %v492
    %v594 = vunpack.c.h.bf16 %v492
    %v595 = vunpack.c.l.bf16 %v493
    %v596 = vunpack.c.h.bf16 %v493
    %v597 = vunpack.c.l.bf16 %v494
    %v598 = vunpack.c.h.bf16 %v494
    %v599 = vunpack.c.l.bf16 %v495
    %v600 = vunpack.c.h.bf16 %v495
    %v601 = vunpack.c.l.bf16 %v496
    %v602 = vunpack.c.h.bf16 %v496
    %v603 = vunpack.c.l.bf16 %v497
    %v604 = vunpack.c.h.bf16 %v497
    %v605 = vunpack.c.l.bf16 %v498
    %v606 = vunpack.c.h.bf16 %v498
    %v607 = vunpack.c.l.bf16 %v499
    %v608 = vunpack.c.h.bf16 %v499
    %v609 = vunpack.c.l.bf16 %v500
    %v610 = vunpack.c.h.bf16 %v500
    %v611 = vunpack.c.l.bf16 %v501
    %v612 = vunpack.c.h.bf16 %v501
    %v613 = vunpack.c.l.bf16 %v502
    %v614 = vunpack.c.h.bf16 %v502
    %v615 = vunpack.c.l.bf16 %v503
    %v616 = vunpack.c.h.bf16 %v503
    %v617 = vunpack.c.l.bf16 %v504
    %v618 = vunpack.c.h.bf16 %v504
    %v619 = vunpack.c.l.bf16 %v505
    %v620 = vunpack.c.h.bf16 %v505
    %v621 = vunpack.c.l.bf16 %v506
    %v622 = vunpack.c.h.bf16 %v506
    %v623 = vunpack.c.l.bf16 %v507
    %v624 = vunpack.c.h.bf16 %v507
    %v625 = vunpack.c.l.bf16 %v508
    %v626 = vunpack.c.h.bf16 %v508
    %v627 = vunpack.c.l.bf16 %v509
    %v628 = vunpack.c.h.bf16 %v509
    %v629 = vunpack.c.l.bf16 %v510
    %v630 = vunpack.c.h.bf16 %v510
    %v631 = vunpack.c.l.bf16 %v511
    %v632 = vunpack.c.h.bf16 %v511
    %v633 = vunpack.c.l.bf16 %v512
    %v634 = vunpack.c.h.bf16 %v512
    %v635 = vunpack.c.l.bf16 %v513
    %v636 = vunpack.c.h.bf16 %v513
    %v637 = vunpack.c.l.bf16 %v514
    %v638 = vunpack.c.h.bf16 %v514
    %v639 = vunpack.c.l.bf16 %v515
    %v640 = vunpack.c.h.bf16 %v515
    %v641 = vunpack.c.l.bf16 %v516
    %v642 = vunpack.c.h.bf16 %v516
    %v643 = vunpack.c.l.bf16 %v517
    %v644 = vunpack.c.h.bf16 %v517
    %v645 = vunpack.c.l.bf16 %v518
    %v646 = vunpack.c.h.bf16 %v518
    %647 = vmatpush.msra.mxu0 %v579
    %648 = vmatpush.msra.mxu0 %v575
    %649 = vmatpush.msra.mxu0 %v571
    %650 = vmatpush.msra.mxu0 %v567
    %651 = vmatpush.msra.mxu0 %v563
    %652 = vmatpush.msra.mxu0 %v559
    %653 = vmatpush.msra.mxu0 %v555
    %654 = vmatpush.msra.mxu0 %v551
    %655 = vmatpush.msra.mxu0 %v547
    %656 = vmatpush.msra.mxu0 %v543
    %657 = vmatpush.msra.mxu0 %v539
    %658 = vmatpush.msra.mxu0 %v535
    %659 = vmatpush.msra.mxu0 %v531
    %660 = vmatpush.msra.mxu0 %v527
    %661 = vmatpush.msra.mxu0 %v523
    %662 = vmatpush.msra.mxu0 %v519
    %663 = vmatmul.f32.gmra.mxu0 %v453
    %v664 = vpop.f32.mrf.mxu0
    %v665 = vadd.f32 0.0, %v664
    %666 = vdwg.mxu0
    %667 = vmatpush.msra.mxu0 %v643
    %668 = vmatpush.msra.mxu0 %v639
    %669 = vmatpush.msra.mxu0 %v635
    %670 = vmatpush.msra.mxu0 %v631
    %671 = vmatpush.msra.mxu0 %v627
    %672 = vmatpush.msra.mxu0 %v623
    %673 = vmatpush.msra.mxu0 %v619
    %674 = vmatpush.msra.mxu0 %v615
    %675 = vmatpush.msra.mxu0 %v611
    %676 = vmatpush.msra.mxu0 %v607
    %677 = vmatpush.msra.mxu0 %v603
    %678 = vmatpush.msra.mxu0 %v599
    %679 = vmatpush.msra.mxu0 %v595
    %680 = vmatpush.msra.mxu0 %v591
    %681 = vmatpush.msra.mxu0 %v587
    %682 = vmatpush.msra.mxu0 %v583
    %683 = vmatmul.f32.gmra.mxu0 %v454
    %v684 = vpop.f32.mrf.mxu0
    %v685 = vadd.f32 %v665, %v684
    %686 = vdwg.mxu0
    %687 = vmatpush.msra.mxu0 %v580
    %688 = vmatpush.msra.mxu0 %v576
    %689 = vmatpush.msra.mxu0 %v572
    %690 = vmatpush.msra.mxu0 %v568
    %691 = vmatpush.msra.mxu0 %v564
    %692 = vmatpush.msra.mxu0 %v560
    %693 = vmatpush.msra.mxu0 %v556
    %694 = vmatpush.msra.mxu0 %v552
    %695 = vmatpush.msra.mxu0 %v548
    %696 = vmatpush.msra.mxu0 %v544
    %697 = vmatpush.msra.mxu0 %v540
    %698 = vmatpush.msra.mxu0 %v536
    %699 = vmatpush.msra.mxu0 %v532
    %700 = vmatpush.msra.mxu0 %v528
    %701 = vmatpush.msra.mxu0 %v524
    %702 = vmatpush.msra.mxu0 %v520
    %703 = vmatmul.f32.gmra.mxu0 %v453
    %v704 = vpop.f32.mrf.mxu0
    %v705 = vadd.f32 0.0, %v704
    %706 = vdwg.mxu0
    %707 = vmatpush.msra.mxu0 %v644
    %708 = vmatpush.msra.mxu0 %v640
    %709 = vmatpush.msra.mxu0 %v636
    %710 = vmatpush.msra.mxu0 %v632
    %711 = vmatpush.msra.mxu0 %v628
    %712 = vmatpush.msra.mxu0 %v624
    %713 = vmatpush.msra.mxu0 %v620
    %714 = vmatpush.msra.mxu0 %v616
    %715 = vmatpush.msra.mxu0 %v612
    %716 = vmatpush.msra.mxu0 %v608
    %717 = vmatpush.msra.mxu0 %v604
    %718 = vmatpush.msra.mxu0 %v600
    %719 = vmatpush.msra.mxu0 %v596
    %720 = vmatpush.msra.mxu0 %v592
    %721 = vmatpush.msra.mxu0 %v588
    %722 = vmatpush.msra.mxu0 %v584
    %723 = vmatmul.f32.gmra.mxu0 %v454
    %v724 = vpop.f32.mrf.mxu0
    %v725 = vadd.f32 %v705, %v724
    %726 = vdwg.mxu0
    %727 = vmatpush.msra.mxu0 %v581
    %728 = vmatpush.msra.mxu0 %v577
    %729 = vmatpush.msra.mxu0 %v573
    %730 = vmatpush.msra.mxu0 %v569
    %731 = vmatpush.msra.mxu0 %v565
    %732 = vmatpush.msra.mxu0 %v561
    %733 = vmatpush.msra.mxu0 %v557
    %734 = vmatpush.msra.mxu0 %v553
    %735 = vmatpush.msra.mxu0 %v549
    %736 = vmatpush.msra.mxu0 %v545
    %737 = vmatpush.msra.mxu0 %v541
    %738 = vmatpush.msra.mxu0 %v537
    %739 = vmatpush.msra.mxu0 %v533
    %740 = vmatpush.msra.mxu0 %v529
    %741 = vmatpush.msra.mxu0 %v525
    %742 = vmatpush.msra.mxu0 %v521
    %743 = vmatmul.f32.gmra.mxu0 %v453
    %v744 = vpop.f32.mrf.mxu0
    %v745 = vadd.f32 0.0, %v744
    %746 = vdwg.mxu0
    %747 = vmatpush.msra.mxu0 %v645
    %748 = vmatpush.msra.mxu0 %v641
    %749 = vmatpush.msra.mxu0 %v637
    %750 = vmatpush.msra.mxu0 %v633
    %751 = vmatpush.msra.mxu0 %v629
    %752 = vmatpush.msra.mxu0 %v625
    %753 = vmatpush.msra.mxu0 %v621
    %754 = vmatpush.msra.mxu0 %v617
    %755 = vmatpush.msra.mxu0 %v613
    %756 = vmatpush.msra.mxu0 %v609
    %757 = vmatpush.msra.mxu0 %v605
    %758 = vmatpush.msra.mxu0 %v601
    %759 = vmatpush.msra.mxu0 %v597
    %760 = vmatpush.msra.mxu0 %v593
    %761 = vmatpush.msra.mxu0 %v589
    %762 = vmatpush.msra.mxu0 %v585
    %763 = vmatmul.f32.gmra.mxu0 %v454
    %v764 = vpop.f32.mrf.mxu0
    %v765 = vadd.f32 %v745, %v764
    %766 = vdwg.mxu0
    %767 = vmatpush.msra.mxu0 %v582
    %768 = vmatpush.msra.mxu0 %v578
    %769 = vmatpush.msra.mxu0 %v574
    %770 = vmatpush.msra.mxu0 %v570
    %771 = vmatpush.msra.mxu0 %v566
    %772 = vmatpush.msra.mxu0 %v562
    %773 = vmatpush.msra.mxu0 %v558
    %774 = vmatpush.msra.mxu0 %v554
    %775 = vmatpush.msra.mxu0 %v550
    %776 = vmatpush.msra.mxu0 %v546
    %777 = vmatpush.msra.mxu0 %v542
    %778 = vmatpush.msra.mxu0 %v538
    %779 = vmatpush.msra.mxu0 %v534
    %780 = vmatpush.msra.mxu0 %v530
    %781 = vmatpush.msra.mxu0 %v526
    %782 = vmatpush.msra.mxu0 %v522
    %783 = vmatmul.f32.gmra.mxu0 %v453
    %v784 = vpop.f32.mrf.mxu0
    %v785 = vadd.f32 0.0, %v784
    %786 = vdwg.mxu0
    %787 = vmatpush.msra.mxu0 %v646
    %788 = vmatpush.msra.mxu0 %v642
    %789 = vmatpush.msra.mxu0 %v638
    %790 = vmatpush.msra.mxu0 %v634
    %791 = vmatpush.msra.mxu0 %v630
    %792 = vmatpush.msra.mxu0 %v626
    %793 = vmatpush.msra.mxu0 %v622
    %794 = vmatpush.msra.mxu0 %v618
    %795 = vmatpush.msra.mxu0 %v614
    %796 = vmatpush.msra.mxu0 %v610
    %797 = vmatpush.msra.mxu0 %v606
    %798 = vmatpush.msra.mxu0 %v602
    %799 = vmatpush.msra.mxu0 %v598
    %800 = vmatpush.msra.mxu0 %v594
    %801 = vmatpush.msra.mxu0 %v590
    %802 = vmatpush.msra.mxu0 %v586
    %803 = vmatmul.f32.gmra.mxu0 %v454
    %v804 = vpop.f32.mrf.mxu0
    %v805 = vadd.f32 %v785, %v804
    %806 = vdwg.mxu0
    %v807 = vld [vmem:[#allocation15] sm:$0xf]
    %v808 = vld [vmem:[#allocation16] sm:$0xf]
    %v809 = vrot.slane %v685, 4
    %v810 = vadd.f32 %v685, %v809
    %v811 = vrot.slane %v810, 2
    %v812 = vadd.f32 %v810, %v811
    %v813 = vrot.slane %v812, 1
    %v814 = vadd.f32 %v812, %v813
    %v815 = vrot.slane %v725, 4
    %v816 = vadd.f32 %v725, %v815
    %v817 = vrot.slane %v816, 2
    %v818 = vadd.f32 %v816, %v817
    %v819 = vrot.slane %v818, 1
    %v820 = vadd.f32 %v818, %v819
    %v821 = vrot.slane %v765, 4
    %v822 = vadd.f32 %v765, %v821
    %v823 = vrot.slane %v822, 2
    %v824 = vadd.f32 %v822, %v823
    %v825 = vrot.slane %v824, 1
    %v826 = vadd.f32 %v824, %v825
    %v827 = vrot.slane %v805, 4
    %v828 = vadd.f32 %v805, %v827
    %v829 = vrot.slane %v828, 2
    %v830 = vadd.f32 %v828, %v829
    %v831 = vrot.slane %v830, 1
    %v832 = vadd.f32 %v830, %v831
    %v833 = vmul.f32 %v814, %v390
    %v834 = vmul.f32 %v820, %v390
    %v835 = vmul.f32 %v826, %v390
    %v836 = vmul.f32 %v832, %v390
    %v837 = vsub.f32 %v685, %v833
    %v838 = vsub.f32 %v725, %v834
    %v839 = vsub.f32 %v765, %v835
    %v840 = vsub.f32 %v805, %v836
    %v841 = vmul.f32 %v837, %v837
    %v842 = vmul.f32 %v838, %v838
    %v843 = vmul.f32 %v839, %v839
    %v844 = vmul.f32 %v840, %v840
    %v845 = vrot.slane %v841, 4
    %v846 = vadd.f32 %v841, %v845
    %v847 = vrot.slane %v846, 2
    %v848 = vadd.f32 %v846, %v847
    %v849 = vrot.slane %v848, 1
    %v850 = vadd.f32 %v848, %v849
    %v851 = vrot.slane %v842, 4
    %v852 = vadd.f32 %v842, %v851
    %v853 = vrot.slane %v852, 2
    %v854 = vadd.f32 %v852, %v853
    %v855 = vrot.slane %v854, 1
    %v856 = vadd.f32 %v854, %v855
    %v857 = vrot.slane %v843, 4
    %v858 = vadd.f32 %v843, %v857
    %v859 = vrot.slane %v858, 2
    %v860 = vadd.f32 %v858, %v859
    %v861 = vrot.slane %v860, 1
    %v862 = vadd.f32 %v860, %v861
    %v863 = vrot.slane %v844, 4
    %v864 = vadd.f32 %v844, %v863
    %v865 = vrot.slane %v864, 2
    %v866 = vadd.f32 %v864, %v865
    %v867 = vrot.slane %v866, 1
    %v868 = vadd.f32 %v866, %v867
    %v869 = vmul.f32 %v850, %v390
    %v870 = vmul.f32 %v856, %v390
    %v871 = vmul.f32 %v862, %v390
    %v872 = vmul.f32 %v868, %v390
    %v873 = vadd.f32 %v869, 0.8
    %v874 = vadd.f32 %v870, 0.8
    %v875 = vadd.f32 %v871, 0.8
    %v876 = vadd.f32 %v872, 0.8
    %v877 = vrsqrt.pop %v873
    %v878 = vmul.f32 %v877, %v873
    %v879 = vmul.f32 %v878, %v877
    %v880 = vmul.f32 0.5, %v879
    %v881 = vsub.f32 1.5, %v880
    %v882 = vmul.f32 %v877, %v881
    %vm883 = vweird.f32 %v873
    %vm884 = vweird.f32 %v877
    %vm885 = vmor %vm883, %vm884
    %v886 = vsel %vm885, %v877, %v882
    %v887 = vrsqrt.pop %v874
    %v888 = vmul.f32 %v887, %v874
    %v889 = vmul.f32 %v888, %v887
    %v890 = vmul.f32 0.5, %v889
    %v891 = vsub.f32 1.5, %v890
    %v892 = vmul.f32 %v887, %v891
    %vm893 = vweird.f32 %v874
    %vm894 = vweird.f32 %v887
    %vm895 = vmor %vm893, %vm894
    %v896 = vsel %vm895, %v887, %v892
    %v897 = vrsqrt.pop %v875
    %v898 = vmul.f32 %v897, %v875
    %v899 = vmul.f32 %v898, %v897
    %v900 = vmul.f32 0.5, %v899
    %v901 = vsub.f32 1.5, %v900
    %v902 = vmul.f32 %v897, %v901
    %vm903 = vweird.f32 %v875
    %vm904 = vweird.f32 %v897
    %vm905 = vmor %vm903, %vm904
    %v906 = vsel %vm905, %v897, %v902
    %v907 = vrsqrt.pop %v876
    %v908 = vmul.f32 %v907, %v876
    %v909 = vmul.f32 %v908, %v907
    %v910 = vmul.f32 0.5, %v909
    %v911 = vsub.f32 1.5, %v910
    %v912 = vmul.f32 %v907, %v911
    %vm913 = vweird.f32 %v876
    %vm914 = vweird.f32 %v907
    %vm915 = vmor %vm913, %vm914
    %v916 = vsel %vm915, %v907, %v912
    %v917 = vmul.f32 %v837, %v886
    %v918 = vmul.f32 %v838, %v896
    %v919 = vmul.f32 %v839, %v906
    %v920 = vmul.f32 %v840, %v916
    %v922 = vperm.slane %v807, 0
    %v923 = vperm.slane %v807, 1
    %v924 = vperm.slane %v807, 2
    %v925 = vperm.slane %v807, 3
    %v930 = vmul.f32 %v917, %v922
    %v931 = vmul.f32 %v918, %v923
    %v932 = vmul.f32 %v919, %v924
    %v933 = vmul.f32 %v920, %v925
    %v935 = vperm.slane %v808, 0
    %v936 = vperm.slane %v808, 1
    %v937 = vperm.slane %v808, 2
    %v938 = vperm.slane %v808, 3
    %v943 = vadd.f32 %v930, %v935
    %v944 = vadd.f32 %v931, %v936
    %v945 = vadd.f32 %v932, %v937
    %v946 = vadd.f32 %v933, %v938
    %vm947 = vcmp.gt.f32.partialorder %v943, 0.0
    %vm948 = vcmp.gt.f32.partialorder %v944, 0.0
    %vm949 = vcmp.gt.f32.partialorder %v945, 0.0
    %vm950 = vcmp.gt.f32.partialorder %v946, 0.0
    %v951 = vmul.f32 %v943, 0.2
    %v952 = vmul.f32 %v944, 0.2
    %v953 = vmul.f32 %v945, 0.2
    %v954 = vmul.f32 %v946, 0.2
    %v955 = vsel %vm947, %v943, %v951
    %v956 = vsel %vm948, %v944, %v952
    %v957 = vsel %vm949, %v945, %v953
    %v958 = vsel %vm950, %v946, %v954
    %s959 = smul.u32 4, 64
    %s960 = smul.u32 %s959, 8
    %s961 = sshll.u32 %s960, 4
    %962 = dma.done [#allocation4], %s961
    %v963 = vld [vmem:[#allocation2] sm:$0xff]
    %v964 = vld [vmem:[#allocation2 + $0x8] sm:$0xff]
    %v965 = vld [vmem:[#allocation2 + $0x10] sm:$0xff]
    %v966 = vld [vmem:[#allocation2 + $0x18] sm:$0xff]
    %v967 = vld [vmem:[#allocation2 + $0x20] sm:$0xff]
    %v968 = vld [vmem:[#allocation2 + $0x28] sm:$0xff]
    %v969 = vld [vmem:[#allocation2 + $0x30] sm:$0xff]
    %v970 = vld [vmem:[#allocation2 + $0x38] sm:$0xff]
    %v971 = vld [vmem:[#allocation2 + $0x40] sm:$0xff]
    %v972 = vld [vmem:[#allocation2 + $0x48] sm:$0xff]
    %v973 = vld [vmem:[#allocation2 + $0x50] sm:$0xff]
    %v974 = vld [vmem:[#allocation2 + $0x58] sm:$0xff]
    %v975 = vld [vmem:[#allocation2 + $0x60] sm:$0xff]
    %v976 = vld [vmem:[#allocation2 + $0x68] sm:$0xff]
    %v977 = vld [vmem:[#allocation2 + $0x70] sm:$0xff]
    %v978 = vld [vmem:[#allocation2 + $0x78] sm:$0xff]
    %v979 = vld [vmem:[#allocation2 + $0x80] sm:$0xff]
    %v980 = vld [vmem:[#allocation2 + $0x88] sm:$0xff]
    %v981 = vld [vmem:[#allocation2 + $0x90] sm:$0xff]
    %v982 = vld [vmem:[#allocation2 + $0x98] sm:$0xff]
    %v983 = vld [vmem:[#allocation2 + $0xa0] sm:$0xff]
    %v984 = vld [vmem:[#allocation2 + $0xa8] sm:$0xff]
    %v985 = vld [vmem:[#allocation2 + $0xb0] sm:$0xff]
    %v986 = vld [vmem:[#allocation2 + $0xb8] sm:$0xff]
    %v987 = vld [vmem:[#allocation2 + $0xc0] sm:$0xff]
    %v988 = vld [vmem:[#allocation2 + $0xc8] sm:$0xff]
    %v989 = vld [vmem:[#allocation2 + $0xd0] sm:$0xff]
    %v990 = vld [vmem:[#allocation2 + $0xd8] sm:$0xff]
    %v991 = vld [vmem:[#allocation2 + $0xe0] sm:$0xff]
    %v992 = vld [vmem:[#allocation2 + $0xe8] sm:$0xff]
    %v993 = vld [vmem:[#allocation2 + $0xf0] sm:$0xff]
    %v994 = vld [vmem:[#allocation2 + $0xf8] sm:$0xff]
    %v995 = vld [vmem:[#allocation2 + $0x100] sm:$0xff]
    %v996 = vld [vmem:[#allocation2 + $0x108] sm:$0xff]
    %v997 = vld [vmem:[#allocation2 + $0x110] sm:$0xff]
    %v998 = vld [vmem:[#allocation2 + $0x118] sm:$0xff]
    %v999 = vld [vmem:[#allocation2 + $0x120] sm:$0xff]
    %v1000 = vld [vmem:[#allocation2 + $0x128] sm:$0xff]
    %v1001 = vld [vmem:[#allocation2 + $0x130] sm:$0xff]
    %v1002 = vld [vmem:[#allocation2 + $0x138] sm:$0xff]
    %v1003 = vld [vmem:[#allocation2 + $0x140] sm:$0xff]
    %v1004 = vld [vmem:[#allocation2 + $0x148] sm:$0xff]
    %v1005 = vld [vmem:[#allocation2 + $0x150] sm:$0xff]
    %v1006 = vld [vmem:[#allocation2 + $0x158] sm:$0xff]
    %v1007 = vld [vmem:[#allocation2 + $0x160] sm:$0xff]
    %v1008 = vld [vmem:[#allocation2 + $0x168] sm:$0xff]
    %v1009 = vld [vmem:[#allocation2 + $0x170] sm:$0xff]
    %v1010 = vld [vmem:[#allocation2 + $0x178] sm:$0xff]
    %v1011 = vld [vmem:[#allocation2 + $0x180] sm:$0xff]
    %v1012 = vld [vmem:[#allocation2 + $0x188] sm:$0xff]
    %v1013 = vld [vmem:[#allocation2 + $0x190] sm:$0xff]
    %v1014 = vld [vmem:[#allocation2 + $0x198] sm:$0xff]
    %v1015 = vld [vmem:[#allocation2 + $0x1a0] sm:$0xff]
    %v1016 = vld [vmem:[#allocation2 + $0x1a8] sm:$0xff]
    %v1017 = vld [vmem:[#allocation2 + $0x1b0] sm:$0xff]
    %v1018 = vld [vmem:[#allocation2 + $0x1b8] sm:$0xff]
    %v1019 = vld [vmem:[#allocation2 + $0x1c0] sm:$0xff]
    %v1020 = vld [vmem:[#allocation2 + $0x1c8] sm:$0xff]
    %v1021 = vld [vmem:[#allocation2 + $0x1d0] sm:$0xff]
    %v1022 = vld [vmem:[#allocation2 + $0x1d8] sm:$0xff]
    %v1023 = vld [vmem:[#allocation2 + $0x1e0] sm:$0xff]
    %v1024 = vld [vmem:[#allocation2 + $0x1e8] sm:$0xff]
    %v1025 = vld [vmem:[#allocation2 + $0x1f0] sm:$0xff]
    %v1026 = vld [vmem:[#allocation2 + $0x1f8] sm:$0xff]
    %v1027 = vld [vmem:[#allocation2 + $0x200] sm:$0xff]
    %v1028 = vld [vmem:[#allocation2 + $0x208] sm:$0xff]
    %v1029 = vld [vmem:[#allocation2 + $0x210] sm:$0xff]
    %v1030 = vld [vmem:[#allocation2 + $0x218] sm:$0xff]
    %v1031 = vld [vmem:[#allocation2 + $0x220] sm:$0xff]
    %v1032 = vld [vmem:[#allocation2 + $0x228] sm:$0xff]
    %v1033 = vld [vmem:[#allocation2 + $0x230] sm:$0xff]
    %v1034 = vld [vmem:[#allocation2 + $0x238] sm:$0xff]
    %v1035 = vld [vmem:[#allocation2 + $0x240] sm:$0xff]
    %v1036 = vld [vmem:[#allocation2 + $0x248] sm:$0xff]
    %v1037 = vld [vmem:[#allocation2 + $0x250] sm:$0xff]
    %v1038 = vld [vmem:[#allocation2 + $0x258] sm:$0xff]
    %v1039 = vld [vmem:[#allocation2 + $0x260] sm:$0xff]
    %v1040 = vld [vmem:[#allocation2 + $0x268] sm:$0xff]
    %v1041 = vld [vmem:[#allocation2 + $0x270] sm:$0xff]
    %v1042 = vld [vmem:[#allocation2 + $0x278] sm:$0xff]
    %v1043 = vld [vmem:[#allocation2 + $0x280] sm:$0xff]
    %v1044 = vld [vmem:[#allocation2 + $0x288] sm:$0xff]
    %v1045 = vld [vmem:[#allocation2 + $0x290] sm:$0xff]
    %v1046 = vld [vmem:[#allocation2 + $0x298] sm:$0xff]
    %v1047 = vld [vmem:[#allocation2 + $0x2a0] sm:$0xff]
    %v1048 = vld [vmem:[#allocation2 + $0x2a8] sm:$0xff]
    %v1049 = vld [vmem:[#allocation2 + $0x2b0] sm:$0xff]
    %v1050 = vld [vmem:[#allocation2 + $0x2b8] sm:$0xff]
    %v1051 = vld [vmem:[#allocation2 + $0x2c0] sm:$0xff]
    %v1052 = vld [vmem:[#allocation2 + $0x2c8] sm:$0xff]
    %v1053 = vld [vmem:[#allocation2 + $0x2d0] sm:$0xff]
    %v1054 = vld [vmem:[#allocation2 + $0x2d8] sm:$0xff]
    %v1055 = vld [vmem:[#allocation2 + $0x2e0] sm:$0xff]
    %v1056 = vld [vmem:[#allocation2 + $0x2e8] sm:$0xff]
    %v1057 = vld [vmem:[#allocation2 + $0x2f0] sm:$0xff]
    %v1058 = vld [vmem:[#allocation2 + $0x2f8] sm:$0xff]
    %v1059 = vld [vmem:[#allocation2 + $0x300] sm:$0xff]
    %v1060 = vld [vmem:[#allocation2 + $0x308] sm:$0xff]
    %v1061 = vld [vmem:[#allocation2 + $0x310] sm:$0xff]
    %v1062 = vld [vmem:[#allocation2 + $0x318] sm:$0xff]
    %v1063 = vld [vmem:[#allocation2 + $0x320] sm:$0xff]
    %v1064 = vld [vmem:[#allocation2 + $0x328] sm:$0xff]
    %v1065 = vld [vmem:[#allocation2 + $0x330] sm:$0xff]
    %v1066 = vld [vmem:[#allocation2 + $0x338] sm:$0xff]
    %v1067 = vld [vmem:[#allocation2 + $0x340] sm:$0xff]
    %v1068 = vld [vmem:[#allocation2 + $0x348] sm:$0xff]
    %v1069 = vld [vmem:[#allocation2 + $0x350] sm:$0xff]
    %v1070 = vld [vmem:[#allocation2 + $0x358] sm:$0xff]
    %v1071 = vld [vmem:[#allocation2 + $0x360] sm:$0xff]
    %v1072 = vld [vmem:[#allocation2 + $0x368] sm:$0xff]
    %v1073 = vld [vmem:[#allocation2 + $0x370] sm:$0xff]
    %v1074 = vld [vmem:[#allocation2 + $0x378] sm:$0xff]
    %v1075 = vld [vmem:[#allocation2 + $0x380] sm:$0xff]
    %v1076 = vld [vmem:[#allocation2 + $0x388] sm:$0xff]
    %v1077 = vld [vmem:[#allocation2 + $0x390] sm:$0xff]
    %v1078 = vld [vmem:[#allocation2 + $0x398] sm:$0xff]
    %v1079 = vld [vmem:[#allocation2 + $0x3a0] sm:$0xff]
    %v1080 = vld [vmem:[#allocation2 + $0x3a8] sm:$0xff]
    %v1081 = vld [vmem:[#allocation2 + $0x3b0] sm:$0xff]
    %v1082 = vld [vmem:[#allocation2 + $0x3b8] sm:$0xff]
    %v1083 = vld [vmem:[#allocation2 + $0x3c0] sm:$0xff]
    %v1084 = vld [vmem:[#allocation2 + $0x3c8] sm:$0xff]
    %v1085 = vld [vmem:[#allocation2 + $0x3d0] sm:$0xff]
    %v1086 = vld [vmem:[#allocation2 + $0x3d8] sm:$0xff]
    %v1087 = vld [vmem:[#allocation2 + $0x3e0] sm:$0xff]
    %v1088 = vld [vmem:[#allocation2 + $0x3e8] sm:$0xff]
    %v1089 = vld [vmem:[#allocation2 + $0x3f0] sm:$0xff]
    %v1090 = vld [vmem:[#allocation2 + $0x3f8] sm:$0xff]
    %v1091 = vld [vmem:[#allocation2 + $0x400] sm:$0xff]
    %v1092 = vld [vmem:[#allocation2 + $0x408] sm:$0xff]
    %v1093 = vld [vmem:[#allocation2 + $0x410] sm:$0xff]
    %v1094 = vld [vmem:[#allocation2 + $0x418] sm:$0xff]
    %v1095 = vld [vmem:[#allocation2 + $0x420] sm:$0xff]
    %v1096 = vld [vmem:[#allocation2 + $0x428] sm:$0xff]
    %v1097 = vld [vmem:[#allocation2 + $0x430] sm:$0xff]
    %v1098 = vld [vmem:[#allocation2 + $0x438] sm:$0xff]
    %v1099 = vld [vmem:[#allocation2 + $0x440] sm:$0xff]
    %v1100 = vld [vmem:[#allocation2 + $0x448] sm:$0xff]
    %v1101 = vld [vmem:[#allocation2 + $0x450] sm:$0xff]
    %v1102 = vld [vmem:[#allocation2 + $0x458] sm:$0xff]
    %v1103 = vld [vmem:[#allocation2 + $0x460] sm:$0xff]
    %v1104 = vld [vmem:[#allocation2 + $0x468] sm:$0xff]
    %v1105 = vld [vmem:[#allocation2 + $0x470] sm:$0xff]
    %v1106 = vld [vmem:[#allocation2 + $0x478] sm:$0xff]
    %v1107 = vld [vmem:[#allocation2 + $0x480] sm:$0xff]
    %v1108 = vld [vmem:[#allocation2 + $0x488] sm:$0xff]
    %v1109 = vld [vmem:[#allocation2 + $0x490] sm:$0xff]
    %v1110 = vld [vmem:[#allocation2 + $0x498] sm:$0xff]
    %v1111 = vld [vmem:[#allocation2 + $0x4a0] sm:$0xff]
    %v1112 = vld [vmem:[#allocation2 + $0x4a8] sm:$0xff]
    %v1113 = vld [vmem:[#allocation2 + $0x4b0] sm:$0xff]
    %v1114 = vld [vmem:[#allocation2 + $0x4b8] sm:$0xff]
    %v1115 = vld [vmem:[#allocation2 + $0x4c0] sm:$0xff]
    %v1116 = vld [vmem:[#allocation2 + $0x4c8] sm:$0xff]
    %v1117 = vld [vmem:[#allocation2 + $0x4d0] sm:$0xff]
    %v1118 = vld [vmem:[#allocation2 + $0x4d8] sm:$0xff]
    %v1119 = vld [vmem:[#allocation2 + $0x4e0] sm:$0xff]
    %v1120 = vld [vmem:[#allocation2 + $0x4e8] sm:$0xff]
    %v1121 = vld [vmem:[#allocation2 + $0x4f0] sm:$0xff]
    %v1122 = vld [vmem:[#allocation2 + $0x4f8] sm:$0xff]
    %v1123 = vld [vmem:[#allocation2 + $0x500] sm:$0xff]
    %v1124 = vld [vmem:[#allocation2 + $0x508] sm:$0xff]
    %v1125 = vld [vmem:[#allocation2 + $0x510] sm:$0xff]
    %v1126 = vld [vmem:[#allocation2 + $0x518] sm:$0xff]
    %v1127 = vld [vmem:[#allocation2 + $0x520] sm:$0xff]
    %v1128 = vld [vmem:[#allocation2 + $0x528] sm:$0xff]
    %v1129 = vld [vmem:[#allocation2 + $0x530] sm:$0xff]
    %v1130 = vld [vmem:[#allocation2 + $0x538] sm:$0xff]
    %v1131 = vld [vmem:[#allocation2 + $0x540] sm:$0xff]
    %v1132 = vld [vmem:[#allocation2 + $0x548] sm:$0xff]
    %v1133 = vld [vmem:[#allocation2 + $0x550] sm:$0xff]
    %v1134 = vld [vmem:[#allocation2 + $0x558] sm:$0xff]
    %v1135 = vld [vmem:[#allocation2 + $0x560] sm:$0xff]
    %v1136 = vld [vmem:[#allocation2 + $0x568] sm:$0xff]
    %v1137 = vld [vmem:[#allocation2 + $0x570] sm:$0xff]
    %v1138 = vld [vmem:[#allocation2 + $0x578] sm:$0xff]
    %v1139 = vld [vmem:[#allocation2 + $0x580] sm:$0xff]
    %v1140 = vld [vmem:[#allocation2 + $0x588] sm:$0xff]
    %v1141 = vld [vmem:[#allocation2 + $0x590] sm:$0xff]
    %v1142 = vld [vmem:[#allocation2 + $0x598] sm:$0xff]
    %v1143 = vld [vmem:[#allocation2 + $0x5a0] sm:$0xff]
    %v1144 = vld [vmem:[#allocation2 + $0x5a8] sm:$0xff]
    %v1145 = vld [vmem:[#allocation2 + $0x5b0] sm:$0xff]
    %v1146 = vld [vmem:[#allocation2 + $0x5b8] sm:$0xff]
    %v1147 = vld [vmem:[#allocation2 + $0x5c0] sm:$0xff]
    %v1148 = vld [vmem:[#allocation2 + $0x5c8] sm:$0xff]
    %v1149 = vld [vmem:[#allocation2 + $0x5d0] sm:$0xff]
    %v1150 = vld [vmem:[#allocation2 + $0x5d8] sm:$0xff]
    %v1151 = vld [vmem:[#allocation2 + $0x5e0] sm:$0xff]
    %v1152 = vld [vmem:[#allocation2 + $0x5e8] sm:$0xff]
    %v1153 = vld [vmem:[#allocation2 + $0x5f0] sm:$0xff]
    %v1154 = vld [vmem:[#allocation2 + $0x5f8] sm:$0xff]
    %v1155 = vld [vmem:[#allocation2 + $0x600] sm:$0xff]
    %v1156 = vld [vmem:[#allocation2 + $0x608] sm:$0xff]
    %v1157 = vld [vmem:[#allocation2 + $0x610] sm:$0xff]
    %v1158 = vld [vmem:[#allocation2 + $0x618] sm:$0xff]
    %v1159 = vld [vmem:[#allocation2 + $0x620] sm:$0xff]
    %v1160 = vld [vmem:[#allocation2 + $0x628] sm:$0xff]
    %v1161 = vld [vmem:[#allocation2 + $0x630] sm:$0xff]
    %v1162 = vld [vmem:[#allocation2 + $0x638] sm:$0xff]
    %v1163 = vld [vmem:[#allocation2 + $0x640] sm:$0xff]
    %v1164 = vld [vmem:[#allocation2 + $0x648] sm:$0xff]
    %v1165 = vld [vmem:[#allocation2 + $0x650] sm:$0xff]
    %v1166 = vld [vmem:[#allocation2 + $0x658] sm:$0xff]
    %v1167 = vld [vmem:[#allocation2 + $0x660] sm:$0xff]
    %v1168 = vld [vmem:[#allocation2 + $0x668] sm:$0xff]
    %v1169 = vld [vmem:[#allocation2 + $0x670] sm:$0xff]
    %v1170 = vld [vmem:[#allocation2 + $0x678] sm:$0xff]
    %v1171 = vld [vmem:[#allocation2 + $0x680] sm:$0xff]
    %v1172 = vld [vmem:[#allocation2 + $0x688] sm:$0xff]
    %v1173 = vld [vmem:[#allocation2 + $0x690] sm:$0xff]
    %v1174 = vld [vmem:[#allocation2 + $0x698] sm:$0xff]
    %v1175 = vld [vmem:[#allocation2 + $0x6a0] sm:$0xff]
    %v1176 = vld [vmem:[#allocation2 + $0x6a8] sm:$0xff]
    %v1177 = vld [vmem:[#allocation2 + $0x6b0] sm:$0xff]
    %v1178 = vld [vmem:[#allocation2 + $0x6b8] sm:$0xff]
    %v1179 = vld [vmem:[#allocation2 + $0x6c0] sm:$0xff]
    %v1180 = vld [vmem:[#allocation2 + $0x6c8] sm:$0xff]
    %v1181 = vld [vmem:[#allocation2 + $0x6d0] sm:$0xff]
    %v1182 = vld [vmem:[#allocation2 + $0x6d8] sm:$0xff]
    %v1183 = vld [vmem:[#allocation2 + $0x6e0] sm:$0xff]
    %v1184 = vld [vmem:[#allocation2 + $0x6e8] sm:$0xff]
    %v1185 = vld [vmem:[#allocation2 + $0x6f0] sm:$0xff]
    %v1186 = vld [vmem:[#allocation2 + $0x6f8] sm:$0xff]
    %v1187 = vld [vmem:[#allocation2 + $0x700] sm:$0xff]
    %v1188 = vld [vmem:[#allocation2 + $0x708] sm:$0xff]
    %v1189 = vld [vmem:[#allocation2 + $0x710] sm:$0xff]
    %v1190 = vld [vmem:[#allocation2 + $0x718] sm:$0xff]
    %v1191 = vld [vmem:[#allocation2 + $0x720] sm:$0xff]
    %v1192 = vld [vmem:[#allocation2 + $0x728] sm:$0xff]
    %v1193 = vld [vmem:[#allocation2 + $0x730] sm:$0xff]
    %v1194 = vld [vmem:[#allocation2 + $0x738] sm:$0xff]
    %v1195 = vld [vmem:[#allocation2 + $0x740] sm:$0xff]
    %v1196 = vld [vmem:[#allocation2 + $0x748] sm:$0xff]
    %v1197 = vld [vmem:[#allocation2 + $0x750] sm:$0xff]
    %v1198 = vld [vmem:[#allocation2 + $0x758] sm:$0xff]
    %v1199 = vld [vmem:[#allocation2 + $0x760] sm:$0xff]
    %v1200 = vld [vmem:[#allocation2 + $0x768] sm:$0xff]
    %v1201 = vld [vmem:[#allocation2 + $0x770] sm:$0xff]
    %v1202 = vld [vmem:[#allocation2 + $0x778] sm:$0xff]
    %v1203 = vld [vmem:[#allocation2 + $0x780] sm:$0xff]
    %v1204 = vld [vmem:[#allocation2 + $0x788] sm:$0xff]
    %v1205 = vld [vmem:[#allocation2 + $0x790] sm:$0xff]
    %v1206 = vld [vmem:[#allocation2 + $0x798] sm:$0xff]
    %v1207 = vld [vmem:[#allocation2 + $0x7a0] sm:$0xff]
    %v1208 = vld [vmem:[#allocation2 + $0x7a8] sm:$0xff]
    %v1209 = vld [vmem:[#allocation2 + $0x7b0] sm:$0xff]
    %v1210 = vld [vmem:[#allocation2 + $0x7b8] sm:$0xff]
    %v1211 = vld [vmem:[#allocation2 + $0x7c0] sm:$0xff]
    %v1212 = vld [vmem:[#allocation2 + $0x7c8] sm:$0xff]
    %v1213 = vld [vmem:[#allocation2 + $0x7d0] sm:$0xff]
    %v1214 = vld [vmem:[#allocation2 + $0x7d8] sm:$0xff]
    %v1215 = vld [vmem:[#allocation2 + $0x7e0] sm:$0xff]
    %v1216 = vld [vmem:[#allocation2 + $0x7e8] sm:$0xff]
    %v1217 = vld [vmem:[#allocation2 + $0x7f0] sm:$0xff]
    %v1218 = vld [vmem:[#allocation2 + $0x7f8] sm:$0xff]
    %v1219 = vunpack.c.l.bf16 %v963
    %v1220 = vunpack.c.h.bf16 %v963
    %v1221 = vunpack.c.l.bf16 %v964
    %v1222 = vunpack.c.h.bf16 %v964
    %v1223 = vunpack.c.l.bf16 %v965
    %v1224 = vunpack.c.h.bf16 %v965
    %v1225 = vunpack.c.l.bf16 %v966
    %v1226 = vunpack.c.h.bf16 %v966
    %v1227 = vunpack.c.l.bf16 %v967
    %v1228 = vunpack.c.h.bf16 %v967
    %v1229 = vunpack.c.l.bf16 %v968
    %v1230 = vunpack.c.h.bf16 %v968
    %v1231 = vunpack.c.l.bf16 %v969
    %v1232 = vunpack.c.h.bf16 %v969
    %v1233 = vunpack.c.l.bf16 %v970
    %v1234 = vunpack.c.h.bf16 %v970
    %v1235 = vunpack.c.l.bf16 %v971
    %v1236 = vunpack.c.h.bf16 %v971
    %v1237 = vunpack.c.l.bf16 %v972
    %v1238 = vunpack.c.h.bf16 %v972
    %v1239 = vunpack.c.l.bf16 %v973
    %v1240 = vunpack.c.h.bf16 %v973
    %v1241 = vunpack.c.l.bf16 %v974
    %v1242 = vunpack.c.h.bf16 %v974
    %v1243 = vunpack.c.l.bf16 %v975
    %v1244 = vunpack.c.h.bf16 %v975
    %v1245 = vunpack.c.l.bf16 %v976
    %v1246 = vunpack.c.h.bf16 %v976
    %v1247 = vunpack.c.l.bf16 %v977
    %v1248 = vunpack.c.h.bf16 %v977
    %v1249 = vunpack.c.l.bf16 %v978
    %v1250 = vunpack.c.h.bf16 %v978
    %v1251 = vunpack.c.l.bf16 %v979
    %v1252 = vunpack.c.h.bf16 %v979
    %v1253 = vunpack.c.l.bf16 %v980
    %v1254 = vunpack.c.h.bf16 %v980
    %v1255 = vunpack.c.l.bf16 %v981
    %v1256 = vunpack.c.h.bf16 %v981
    %v1257 = vunpack.c.l.bf16 %v982
    %v1258 = vunpack.c.h.bf16 %v982
    %v1259 = vunpack.c.l.bf16 %v983
    %v1260 = vunpack.c.h.bf16 %v983
    %v1261 = vunpack.c.l.bf16 %v984
    %v1262 = vunpack.c.h.bf16 %v984
    %v1263 = vunpack.c.l.bf16 %v985
    %v1264 = vunpack.c.h.bf16 %v985
    %v1265 = vunpack.c.l.bf16 %v986
    %v1266 = vunpack.c.h.bf16 %v986
    %v1267 = vunpack.c.l.bf16 %v987
    %v1268 = vunpack.c.h.bf16 %v987
    %v1269 = vunpack.c.l.bf16 %v988
    %v1270 = vunpack.c.h.bf16 %v988
    %v1271 = vunpack.c.l.bf16 %v989
    %v1272 = vunpack.c.h.bf16 %v989
    %v1273 = vunpack.c.l.bf16 %v990
    %v1274 = vunpack.c.h.bf16 %v990
    %v1275 = vunpack.c.l.bf16 %v991
    %v1276 = vunpack.c.h.bf16 %v991
    %v1277 = vunpack.c.l.bf16 %v992
    %v1278 = vunpack.c.h.bf16 %v992
    %v1279 = vunpack.c.l.bf16 %v993
    %v1280 = vunpack.c.h.bf16 %v993
    %v1281 = vunpack.c.l.bf16 %v994
    %v1282 = vunpack.c.h.bf16 %v994
    %v1283 = vunpack.c.l.bf16 %v995
    %v1284 = vunpack.c.h.bf16 %v995
    %v1285 = vunpack.c.l.bf16 %v996
    %v1286 = vunpack.c.h.bf16 %v996
    %v1287 = vunpack.c.l.bf16 %v997
    %v1288 = vunpack.c.h.bf16 %v997
    %v1289 = vunpack.c.l.bf16 %v998
    %v1290 = vunpack.c.h.bf16 %v998
    %v1291 = vunpack.c.l.bf16 %v999
    %v1292 = vunpack.c.h.bf16 %v999
    %v1293 = vunpack.c.l.bf16 %v1000
    %v1294 = vunpack.c.h.bf16 %v1000
    %v1295 = vunpack.c.l.bf16 %v1001
    %v1296 = vunpack.c.h.bf16 %v1001
    %v1297 = vunpack.c.l.bf16 %v1002
    %v1298 = vunpack.c.h.bf16 %v1002
    %v1299 = vunpack.c.l.bf16 %v1003
    %v1300 = vunpack.c.h.bf16 %v1003
    %v1301 = vunpack.c.l.bf16 %v1004
    %v1302 = vunpack.c.h.bf16 %v1004
    %v1303 = vunpack.c.l.bf16 %v1005
    %v1304 = vunpack.c.h.bf16 %v1005
    %v1305 = vunpack.c.l.bf16 %v1006
    %v1306 = vunpack.c.h.bf16 %v1006
    %v1307 = vunpack.c.l.bf16 %v1007
    %v1308 = vunpack.c.h.bf16 %v1007
    %v1309 = vunpack.c.l.bf16 %v1008
    %v1310 = vunpack.c.h.bf16 %v1008
    %v1311 = vunpack.c.l.bf16 %v1009
    %v1312 = vunpack.c.h.bf16 %v1009
    %v1313 = vunpack.c.l.bf16 %v1010
    %v1314 = vunpack.c.h.bf16 %v1010
    %v1315 = vunpack.c.l.bf16 %v1011
    %v1316 = vunpack.c.h.bf16 %v1011
    %v1317 = vunpack.c.l.bf16 %v1012
    %v1318 = vunpack.c.h.bf16 %v1012
    %v1319 = vunpack.c.l.bf16 %v1013
    %v1320 = vunpack.c.h.bf16 %v1013
    %v1321 = vunpack.c.l.bf16 %v1014
    %v1322 = vunpack.c.h.bf16 %v1014
    %v1323 = vunpack.c.l.bf16 %v1015
    %v1324 = vunpack.c.h.bf16 %v1015
    %v1325 = vunpack.c.l.bf16 %v1016
    %v1326 = vunpack.c.h.bf16 %v1016
    %v1327 = vunpack.c.l.bf16 %v1017
    %v1328 = vunpack.c.h.bf16 %v1017
    %v1329 = vunpack.c.l.bf16 %v1018
    %v1330 = vunpack.c.h.bf16 %v1018
    %v1331 = vunpack.c.l.bf16 %v1019
    %v1332 = vunpack.c.h.bf16 %v1019
    %v1333 = vunpack.c.l.bf16 %v1020
    %v1334 = vunpack.c.h.bf16 %v1020
    %v1335 = vunpack.c.l.bf16 %v1021
    %v1336 = vunpack.c.h.bf16 %v1021
    %v1337 = vunpack.c.l.bf16 %v1022
    %v1338 = vunpack.c.h.bf16 %v1022
    %v1339 = vunpack.c.l.bf16 %v1023
    %v1340 = vunpack.c.h.bf16 %v1023
    %v1341 = vunpack.c.l.bf16 %v1024
    %v1342 = vunpack.c.h.bf16 %v1024
    %v1343 = vunpack.c.l.bf16 %v1025
    %v1344 = vunpack.c.h.bf16 %v1025
    %v1345 = vunpack.c.l.bf16 %v1026
    %v1346 = vunpack.c.h.bf16 %v1026
    %v1347 = vunpack.c.l.bf16 %v1027
    %v1348 = vunpack.c.h.bf16 %v1027
    %v1349 = vunpack.c.l.bf16 %v1028
    %v1350 = vunpack.c.h.bf16 %v1028
    %v1351 = vunpack.c.l.bf16 %v1029
    %v1352 = vunpack.c.h.bf16 %v1029
    %v1353 = vunpack.c.l.bf16 %v1030
    %v1354 = vunpack.c.h.bf16 %v1030
    %v1355 = vunpack.c.l.bf16 %v1031
    %v1356 = vunpack.c.h.bf16 %v1031
    %v1357 = vunpack.c.l.bf16 %v1032
    %v1358 = vunpack.c.h.bf16 %v1032
    %v1359 = vunpack.c.l.bf16 %v1033
    %v1360 = vunpack.c.h.bf16 %v1033
    %v1361 = vunpack.c.l.bf16 %v1034
    %v1362 = vunpack.c.h.bf16 %v1034
    %v1363 = vunpack.c.l.bf16 %v1035
    %v1364 = vunpack.c.h.bf16 %v1035
    %v1365 = vunpack.c.l.bf16 %v1036
    %v1366 = vunpack.c.h.bf16 %v1036
    %v1367 = vunpack.c.l.bf16 %v1037
    %v1368 = vunpack.c.h.bf16 %v1037
    %v1369 = vunpack.c.l.bf16 %v1038
    %v1370 = vunpack.c.h.bf16 %v1038
    %v1371 = vunpack.c.l.bf16 %v1039
    %v1372 = vunpack.c.h.bf16 %v1039
    %v1373 = vunpack.c.l.bf16 %v1040
    %v1374 = vunpack.c.h.bf16 %v1040
    %v1375 = vunpack.c.l.bf16 %v1041
    %v1376 = vunpack.c.h.bf16 %v1041
    %v1377 = vunpack.c.l.bf16 %v1042
    %v1378 = vunpack.c.h.bf16 %v1042
    %v1379 = vunpack.c.l.bf16 %v1043
    %v1380 = vunpack.c.h.bf16 %v1043
    %v1381 = vunpack.c.l.bf16 %v1044
    %v1382 = vunpack.c.h.bf16 %v1044
    %v1383 = vunpack.c.l.bf16 %v1045
    %v1384 = vunpack.c.h.bf16 %v1045
    %v1385 = vunpack.c.l.bf16 %v1046
    %v1386 = vunpack.c.h.bf16 %v1046
    %v1387 = vunpack.c.l.bf16 %v1047
    %v1388 = vunpack.c.h.bf16 %v1047
    %v1389 = vunpack.c.l.bf16 %v1048
    %v1390 = vunpack.c.h.bf16 %v1048
    %v1391 = vunpack.c.l.bf16 %v1049
    %v1392 = vunpack.c.h.bf16 %v1049
    %v1393 = vunpack.c.l.bf16 %v1050
    %v1394 = vunpack.c.h.bf16 %v1050
    %v1395 = vunpack.c.l.bf16 %v1051
    %v1396 = vunpack.c.h.bf16 %v1051
    %v1397 = vunpack.c.l.bf16 %v1052
    %v1398 = vunpack.c.h.bf16 %v1052
    %v1399 = vunpack.c.l.bf16 %v1053
    %v1400 = vunpack.c.h.bf16 %v1053
    %v1401 = vunpack.c.l.bf16 %v1054
    %v1402 = vunpack.c.h.bf16 %v1054
    %v1403 = vunpack.c.l.bf16 %v1055
    %v1404 = vunpack.c.h.bf16 %v1055
    %v1405 = vunpack.c.l.bf16 %v1056
    %v1406 = vunpack.c.h.bf16 %v1056
    %v1407 = vunpack.c.l.bf16 %v1057
    %v1408 = vunpack.c.h.bf16 %v1057
    %v1409 = vunpack.c.l.bf16 %v1058
    %v1410 = vunpack.c.h.bf16 %v1058
    %v1411 = vunpack.c.l.bf16 %v1059
    %v1412 = vunpack.c.h.bf16 %v1059
    %v1413 = vunpack.c.l.bf16 %v1060
    %v1414 = vunpack.c.h.bf16 %v1060
    %v1415 = vunpack.c.l.bf16 %v1061
    %v1416 = vunpack.c.h.bf16 %v1061
    %v1417 = vunpack.c.l.bf16 %v1062
    %v1418 = vunpack.c.h.bf16 %v1062
    %v1419 = vunpack.c.l.bf16 %v1063
    %v1420 = vunpack.c.h.bf16 %v1063
    %v1421 = vunpack.c.l.bf16 %v1064
    %v1422 = vunpack.c.h.bf16 %v1064
    %v1423 = vunpack.c.l.bf16 %v1065
    %v1424 = vunpack.c.h.bf16 %v1065
    %v1425 = vunpack.c.l.bf16 %v1066
    %v1426 = vunpack.c.h.bf16 %v1066
    %v1427 = vunpack.c.l.bf16 %v1067
    %v1428 = vunpack.c.h.bf16 %v1067
    %v1429 = vunpack.c.l.bf16 %v1068
    %v1430 = vunpack.c.h.bf16 %v1068
    %v1431 = vunpack.c.l.bf16 %v1069
    %v1432 = vunpack.c.h.bf16 %v1069
    %v1433 = vunpack.c.l.bf16 %v1070
    %v1434 = vunpack.c.h.bf16 %v1070
    %v1435 = vunpack.c.l.bf16 %v1071
    %v1436 = vunpack.c.h.bf16 %v1071
    %v1437 = vunpack.c.l.bf16 %v1072
    %v1438 = vunpack.c.h.bf16 %v1072
    %v1439 = vunpack.c.l.bf16 %v1073
    %v1440 = vunpack.c.h.bf16 %v1073
    %v1441 = vunpack.c.l.bf16 %v1074
    %v1442 = vunpack.c.h.bf16 %v1074
    %v1443 = vunpack.c.l.bf16 %v1075
    %v1444 = vunpack.c.h.bf16 %v1075
    %v1445 = vunpack.c.l.bf16 %v1076
    %v1446 = vunpack.c.h.bf16 %v1076
    %v1447 = vunpack.c.l.bf16 %v1077
    %v1448 = vunpack.c.h.bf16 %v1077
    %v1449 = vunpack.c.l.bf16 %v1078
    %v1450 = vunpack.c.h.bf16 %v1078
    %v1451 = vunpack.c.l.bf16 %v1079
    %v1452 = vunpack.c.h.bf16 %v1079
    %v1453 = vunpack.c.l.bf16 %v1080
    %v1454 = vunpack.c.h.bf16 %v1080
    %v1455 = vunpack.c.l.bf16 %v1081
    %v1456 = vunpack.c.h.bf16 %v1081
    %v1457 = vunpack.c.l.bf16 %v1082
    %v1458 = vunpack.c.h.bf16 %v1082
    %v1459 = vunpack.c.l.bf16 %v1083
    %v1460 = vunpack.c.h.bf16 %v1083
    %v1461 = vunpack.c.l.bf16 %v1084
    %v1462 = vunpack.c.h.bf16 %v1084
    %v1463 = vunpack.c.l.bf16 %v1085
    %v1464 = vunpack.c.h.bf16 %v1085
    %v1465 = vunpack.c.l.bf16 %v1086
    %v1466 = vunpack.c.h.bf16 %v1086
    %v1467 = vunpack.c.l.bf16 %v1087
    %v1468 = vunpack.c.h.bf16 %v1087
    %v1469 = vunpack.c.l.bf16 %v1088
    %v1470 = vunpack.c.h.bf16 %v1088
    %v1471 = vunpack.c.l.bf16 %v1089
    %v1472 = vunpack.c.h.bf16 %v1089
    %v1473 = vunpack.c.l.bf16 %v1090
    %v1474 = vunpack.c.h.bf16 %v1090
    %v1475 = vunpack.c.l.bf16 %v1091
    %v1476 = vunpack.c.h.bf16 %v1091
    %v1477 = vunpack.c.l.bf16 %v1092
    %v1478 = vunpack.c.h.bf16 %v1092
    %v1479 = vunpack.c.l.bf16 %v1093
    %v1480 = vunpack.c.h.bf16 %v1093
    %v1481 = vunpack.c.l.bf16 %v1094
    %v1482 = vunpack.c.h.bf16 %v1094
    %v1483 = vunpack.c.l.bf16 %v1095
    %v1484 = vunpack.c.h.bf16 %v1095
    %v1485 = vunpack.c.l.bf16 %v1096
    %v1486 = vunpack.c.h.bf16 %v1096
    %v1487 = vunpack.c.l.bf16 %v1097
    %v1488 = vunpack.c.h.bf16 %v1097
    %v1489 = vunpack.c.l.bf16 %v1098
    %v1490 = vunpack.c.h.bf16 %v1098
    %v1491 = vunpack.c.l.bf16 %v1099
    %v1492 = vunpack.c.h.bf16 %v1099
    %v1493 = vunpack.c.l.bf16 %v1100
    %v1494 = vunpack.c.h.bf16 %v1100
    %v1495 = vunpack.c.l.bf16 %v1101
    %v1496 = vunpack.c.h.bf16 %v1101
    %v1497 = vunpack.c.l.bf16 %v1102
    %v1498 = vunpack.c.h.bf16 %v1102
    %v1499 = vunpack.c.l.bf16 %v1103
    %v1500 = vunpack.c.h.bf16 %v1103
    %v1501 = vunpack.c.l.bf16 %v1104
    %v1502 = vunpack.c.h.bf16 %v1104
    %v1503 = vunpack.c.l.bf16 %v1105
    %v1504 = vunpack.c.h.bf16 %v1105
    %v1505 = vunpack.c.l.bf16 %v1106
    %v1506 = vunpack.c.h.bf16 %v1106
    %v1507 = vunpack.c.l.bf16 %v1107
    %v1508 = vunpack.c.h.bf16 %v1107
    %v1509 = vunpack.c.l.bf16 %v1108
    %v1510 = vunpack.c.h.bf16 %v1108
    %v1511 = vunpack.c.l.bf16 %v1109
    %v1512 = vunpack.c.h.bf16 %v1109
    %v1513 = vunpack.c.l.bf16 %v1110
    %v1514 = vunpack.c.h.bf16 %v1110
    %v1515 = vunpack.c.l.bf16 %v1111
    %v1516 = vunpack.c.h.bf16 %v1111
    %v1517 = vunpack.c.l.bf16 %v1112
    %v1518 = vunpack.c.h.bf16 %v1112
    %v1519 = vunpack.c.l.bf16 %v1113
    %v1520 = vunpack.c.h.bf16 %v1113
    %v1521 = vunpack.c.l.bf16 %v1114
    %v1522 = vunpack.c.h.bf16 %v1114
    %v1523 = vunpack.c.l.bf16 %v1115
    %v1524 = vunpack.c.h.bf16 %v1115
    %v1525 = vunpack.c.l.bf16 %v1116
    %v1526 = vunpack.c.h.bf16 %v1116
    %v1527 = vunpack.c.l.bf16 %v1117
    %v1528 = vunpack.c.h.bf16 %v1117
    %v1529 = vunpack.c.l.bf16 %v1118
    %v1530 = vunpack.c.h.bf16 %v1118
    %v1531 = vunpack.c.l.bf16 %v1119
    %v1532 = vunpack.c.h.bf16 %v1119
    %v1533 = vunpack.c.l.bf16 %v1120
    %v1534 = vunpack.c.h.bf16 %v1120
    %v1535 = vunpack.c.l.bf16 %v1121
    %v1536 = vunpack.c.h.bf16 %v1121
    %v1537 = vunpack.c.l.bf16 %v1122
    %v1538 = vunpack.c.h.bf16 %v1122
    %v1539 = vunpack.c.l.bf16 %v1123
    %v1540 = vunpack.c.h.bf16 %v1123
    %v1541 = vunpack.c.l.bf16 %v1124
    %v1542 = vunpack.c.h.bf16 %v1124
    %v1543 = vunpack.c.l.bf16 %v1125
    %v1544 = vunpack.c.h.bf16 %v1125
    %v1545 = vunpack.c.l.bf16 %v1126
    %v1546 = vunpack.c.h.bf16 %v1126
    %v1547 = vunpack.c.l.bf16 %v1127
    %v1548 = vunpack.c.h.bf16 %v1127
    %v1549 = vunpack.c.l.bf16 %v1128
    %v1550 = vunpack.c.h.bf16 %v1128
    %v1551 = vunpack.c.l.bf16 %v1129
    %v1552 = vunpack.c.h.bf16 %v1129
    %v1553 = vunpack.c.l.bf16 %v1130
    %v1554 = vunpack.c.h.bf16 %v1130
    %v1555 = vunpack.c.l.bf16 %v1131
    %v1556 = vunpack.c.h.bf16 %v1131
    %v1557 = vunpack.c.l.bf16 %v1132
    %v1558 = vunpack.c.h.bf16 %v1132
    %v1559 = vunpack.c.l.bf16 %v1133
    %v1560 = vunpack.c.h.bf16 %v1133
    %v1561 = vunpack.c.l.bf16 %v1134
    %v1562 = vunpack.c.h.bf16 %v1134
    %v1563 = vunpack.c.l.bf16 %v1135
    %v1564 = vunpack.c.h.bf16 %v1135
    %v1565 = vunpack.c.l.bf16 %v1136
    %v1566 = vunpack.c.h.bf16 %v1136
    %v1567 = vunpack.c.l.bf16 %v1137
    %v1568 = vunpack.c.h.bf16 %v1137
    %v1569 = vunpack.c.l.bf16 %v1138
    %v1570 = vunpack.c.h.bf16 %v1138
    %v1571 = vunpack.c.l.bf16 %v1139
    %v1572 = vunpack.c.h.bf16 %v1139
    %v1573 = vunpack.c.l.bf16 %v1140
    %v1574 = vunpack.c.h.bf16 %v1140
    %v1575 = vunpack.c.l.bf16 %v1141
    %v1576 = vunpack.c.h.bf16 %v1141
    %v1577 = vunpack.c.l.bf16 %v1142
    %v1578 = vunpack.c.h.bf16 %v1142
    %v1579 = vunpack.c.l.bf16 %v1143
    %v1580 = vunpack.c.h.bf16 %v1143
    %v1581 = vunpack.c.l.bf16 %v1144
    %v1582 = vunpack.c.h.bf16 %v1144
    %v1583 = vunpack.c.l.bf16 %v1145
    %v1584 = vunpack.c.h.bf16 %v1145
    %v1585 = vunpack.c.l.bf16 %v1146
    %v1586 = vunpack.c.h.bf16 %v1146
    %v1587 = vunpack.c.l.bf16 %v1147
    %v1588 = vunpack.c.h.bf16 %v1147
    %v1589 = vunpack.c.l.bf16 %v1148
    %v1590 = vunpack.c.h.bf16 %v1148
    %v1591 = vunpack.c.l.bf16 %v1149
    %v1592 = vunpack.c.h.bf16 %v1149
    %v1593 = vunpack.c.l.bf16 %v1150
    %v1594 = vunpack.c.h.bf16 %v1150
    %v1595 = vunpack.c.l.bf16 %v1151
    %v1596 = vunpack.c.h.bf16 %v1151
    %v1597 = vunpack.c.l.bf16 %v1152
    %v1598 = vunpack.c.h.bf16 %v1152
    %v1599 = vunpack.c.l.bf16 %v1153
    %v1600 = vunpack.c.h.bf16 %v1153
    %v1601 = vunpack.c.l.bf16 %v1154
    %v1602 = vunpack.c.h.bf16 %v1154
    %v1603 = vunpack.c.l.bf16 %v1155
    %v1604 = vunpack.c.h.bf16 %v1155
    %v1605 = vunpack.c.l.bf16 %v1156
    %v1606 = vunpack.c.h.bf16 %v1156
    %v1607 = vunpack.c.l.bf16 %v1157
    %v1608 = vunpack.c.h.bf16 %v1157
    %v1609 = vunpack.c.l.bf16 %v1158
    %v1610 = vunpack.c.h.bf16 %v1158
    %v1611 = vunpack.c.l.bf16 %v1159
    %v1612 = vunpack.c.h.bf16 %v1159
    %v1613 = vunpack.c.l.bf16 %v1160
    %v1614 = vunpack.c.h.bf16 %v1160
    %v1615 = vunpack.c.l.bf16 %v1161
    %v1616 = vunpack.c.h.bf16 %v1161
    %v1617 = vunpack.c.l.bf16 %v1162
    %v1618 = vunpack.c.h.bf16 %v1162
    %v1619 = vunpack.c.l.bf16 %v1163
    %v1620 = vunpack.c.h.bf16 %v1163
    %v1621 = vunpack.c.l.bf16 %v1164
    %v1622 = vunpack.c.h.bf16 %v1164
    %v1623 = vunpack.c.l.bf16 %v1165
    %v1624 = vunpack.c.h.bf16 %v1165
    %v1625 = vunpack.c.l.bf16 %v1166
    %v1626 = vunpack.c.h.bf16 %v1166
    %v1627 = vunpack.c.l.bf16 %v1167
    %v1628 = vunpack.c.h.bf16 %v1167
    %v1629 = vunpack.c.l.bf16 %v1168
    %v1630 = vunpack.c.h.bf16 %v1168
    %v1631 = vunpack.c.l.bf16 %v1169
    %v1632 = vunpack.c.h.bf16 %v1169
    %v1633 = vunpack.c.l.bf16 %v1170
    %v1634 = vunpack.c.h.bf16 %v1170
    %v1635 = vunpack.c.l.bf16 %v1171
    %v1636 = vunpack.c.h.bf16 %v1171
    %v1637 = vunpack.c.l.bf16 %v1172
    %v1638 = vunpack.c.h.bf16 %v1172
    %v1639 = vunpack.c.l.bf16 %v1173
    %v1640 = vunpack.c.h.bf16 %v1173
    %v1641 = vunpack.c.l.bf16 %v1174
    %v1642 = vunpack.c.h.bf16 %v1174
    %v1643 = vunpack.c.l.bf16 %v1175
    %v1644 = vunpack.c.h.bf16 %v1175
    %v1645 = vunpack.c.l.bf16 %v1176
    %v1646 = vunpack.c.h.bf16 %v1176
    %v1647 = vunpack.c.l.bf16 %v1177
    %v1648 = vunpack.c.h.bf16 %v1177
    %v1649 = vunpack.c.l.bf16 %v1178
    %v1650 = vunpack.c.h.bf16 %v1178
    %v1651 = vunpack.c.l.bf16 %v1179
    %v1652 = vunpack.c.h.bf16 %v1179
    %v1653 = vunpack.c.l.bf16 %v1180
    %v1654 = vunpack.c.h.bf16 %v1180
    %v1655 = vunpack.c.l.bf16 %v1181
    %v1656 = vunpack.c.h.bf16 %v1181
    %v1657 = vunpack.c.l.bf16 %v1182
    %v1658 = vunpack.c.h.bf16 %v1182
    %v1659 = vunpack.c.l.bf16 %v1183
    %v1660 = vunpack.c.h.bf16 %v1183
    %v1661 = vunpack.c.l.bf16 %v1184
    %v1662 = vunpack.c.h.bf16 %v1184
    %v1663 = vunpack.c.l.bf16 %v1185
    %v1664 = vunpack.c.h.bf16 %v1185
    %v1665 = vunpack.c.l.bf16 %v1186
    %v1666 = vunpack.c.h.bf16 %v1186
    %v1667 = vunpack.c.l.bf16 %v1187
    %v1668 = vunpack.c.h.bf16 %v1187
    %v1669 = vunpack.c.l.bf16 %v1188
    %v1670 = vunpack.c.h.bf16 %v1188
    %v1671 = vunpack.c.l.bf16 %v1189
    %v1672 = vunpack.c.h.bf16 %v1189
    %v1673 = vunpack.c.l.bf16 %v1190
    %v1674 = vunpack.c.h.bf16 %v1190
    %v1675 = vunpack.c.l.bf16 %v1191
    %v1676 = vunpack.c.h.bf16 %v1191
    %v1677 = vunpack.c.l.bf16 %v1192
    %v1678 = vunpack.c.h.bf16 %v1192
    %v1679 = vunpack.c.l.bf16 %v1193
    %v1680 = vunpack.c.h.bf16 %v1193
    %v1681 = vunpack.c.l.bf16 %v1194
    %v1682 = vunpack.c.h.bf16 %v1194
    %v1683 = vunpack.c.l.bf16 %v1195
    %v1684 = vunpack.c.h.bf16 %v1195
    %v1685 = vunpack.c.l.bf16 %v1196
    %v1686 = vunpack.c.h.bf16 %v1196
    %v1687 = vunpack.c.l.bf16 %v1197
    %v1688 = vunpack.c.h.bf16 %v1197
    %v1689 = vunpack.c.l.bf16 %v1198
    %v1690 = vunpack.c.h.bf16 %v1198
    %v1691 = vunpack.c.l.bf16 %v1199
    %v1692 = vunpack.c.h.bf16 %v1199
    %v1693 = vunpack.c.l.bf16 %v1200
    %v1694 = vunpack.c.h.bf16 %v1200
    %v1695 = vunpack.c.l.bf16 %v1201
    %v1696 = vunpack.c.h.bf16 %v1201
    %v1697 = vunpack.c.l.bf16 %v1202
    %v1698 = vunpack.c.h.bf16 %v1202
    %v1699 = vunpack.c.l.bf16 %v1203
    %v1700 = vunpack.c.h.bf16 %v1203
    %v1701 = vunpack.c.l.bf16 %v1204
    %v1702 = vunpack.c.h.bf16 %v1204
    %v1703 = vunpack.c.l.bf16 %v1205
    %v1704 = vunpack.c.h.bf16 %v1205
    %v1705 = vunpack.c.l.bf16 %v1206
    %v1706 = vunpack.c.h.bf16 %v1206
    %v1707 = vunpack.c.l.bf16 %v1207
    %v1708 = vunpack.c.h.bf16 %v1207
    %v1709 = vunpack.c.l.bf16 %v1208
    %v1710 = vunpack.c.h.bf16 %v1208
    %v1711 = vunpack.c.l.bf16 %v1209
    %v1712 = vunpack.c.h.bf16 %v1209
    %v1713 = vunpack.c.l.bf16 %v1210
    %v1714 = vunpack.c.h.bf16 %v1210
    %v1715 = vunpack.c.l.bf16 %v1211
    %v1716 = vunpack.c.h.bf16 %v1211
    %v1717 = vunpack.c.l.bf16 %v1212
    %v1718 = vunpack.c.h.bf16 %v1212
    %v1719 = vunpack.c.l.bf16 %v1213
    %v1720 = vunpack.c.h.bf16 %v1213
    %v1721 = vunpack.c.l.bf16 %v1214
    %v1722 = vunpack.c.h.bf16 %v1214
    %v1723 = vunpack.c.l.bf16 %v1215
    %v1724 = vunpack.c.h.bf16 %v1215
    %v1725 = vunpack.c.l.bf16 %v1216
    %v1726 = vunpack.c.h.bf16 %v1216
    %v1727 = vunpack.c.l.bf16 %v1217
    %v1728 = vunpack.c.h.bf16 %v1217
    %v1729 = vunpack.c.l.bf16 %v1218
    %v1730 = vunpack.c.h.bf16 %v1218
    %1731 = vmatpush.msra.mxu0 %v1339
    %1732 = vmatpush.msra.mxu0 %v1331
    %1733 = vmatpush.msra.mxu0 %v1323
    %1734 = vmatpush.msra.mxu0 %v1315
    %1735 = vmatpush.msra.mxu0 %v1307
    %1736 = vmatpush.msra.mxu0 %v1299
    %1737 = vmatpush.msra.mxu0 %v1291
    %1738 = vmatpush.msra.mxu0 %v1283
    %1739 = vmatpush.msra.mxu0 %v1275
    %1740 = vmatpush.msra.mxu0 %v1267
    %1741 = vmatpush.msra.mxu0 %v1259
    %1742 = vmatpush.msra.mxu0 %v1251
    %1743 = vmatpush.msra.mxu0 %v1243
    %1744 = vmatpush.msra.mxu0 %v1235
    %1745 = vmatpush.msra.mxu0 %v1227
    %1746 = vmatpush.msra.mxu0 %v1219
    %1747 = vmatmul.f32.gmra.mxu0 %v955
    %v1748 = vpop.f32.mrf.mxu0
    %v1749 = vadd.f32 0.0, %v1748
    %1750 = vdwg.mxu0
    %1751 = vmatpush.msra.mxu0 %v1467
    %1752 = vmatpush.msra.mxu0 %v1459
    %1753 = vmatpush.msra.mxu0 %v1451
    %1754 = vmatpush.msra.mxu0 %v1443
    %1755 = vmatpush.msra.mxu0 %v1435
    %1756 = vmatpush.msra.mxu0 %v1427
    %1757 = vmatpush.msra.mxu0 %v1419
    %1758 = vmatpush.msra.mxu0 %v1411
    %1759 = vmatpush.msra.mxu0 %v1403
    %1760 = vmatpush.msra.mxu0 %v1395
    %1761 = vmatpush.msra.mxu0 %v1387
    %1762 = vmatpush.msra.mxu0 %v1379
    %1763 = vmatpush.msra.mxu0 %v1371
    %1764 = vmatpush.msra.mxu0 %v1363
    %1765 = vmatpush.msra.mxu0 %v1355
    %1766 = vmatpush.msra.mxu0 %v1347
    %1767 = vmatmul.f32.gmra.mxu0 %v956
    %v1768 = vpop.f32.mrf.mxu0
    %v1769 = vadd.f32 %v1749, %v1768
    %1770 = vdwg.mxu0
    %1771 = vmatpush.msra.mxu0 %v1595
    %1772 = vmatpush.msra.mxu0 %v1587
    %1773 = vmatpush.msra.mxu0 %v1579
    %1774 = vmatpush.msra.mxu0 %v1571
    %1775 = vmatpush.msra.mxu0 %v1563
    %1776 = vmatpush.msra.mxu0 %v1555
    %1777 = vmatpush.msra.mxu0 %v1547
    %1778 = vmatpush.msra.mxu0 %v1539
    %1779 = vmatpush.msra.mxu0 %v1531
    %1780 = vmatpush.msra.mxu0 %v1523
    %1781 = vmatpush.msra.mxu0 %v1515
    %1782 = vmatpush.msra.mxu0 %v1507
    %1783 = vmatpush.msra.mxu0 %v1499
    %1784 = vmatpush.msra.mxu0 %v1491
    %1785 = vmatpush.msra.mxu0 %v1483
    %1786 = vmatpush.msra.mxu0 %v1475
    %1787 = vmatmul.f32.gmra.mxu0 %v957
    %v1788 = vpop.f32.mrf.mxu0
    %v1789 = vadd.f32 %v1769, %v1788
    %1790 = vdwg.mxu0
    %1791 = vmatpush.msra.mxu0 %v1723
    %1792 = vmatpush.msra.mxu0 %v1715
    %1793 = vmatpush.msra.mxu0 %v1707
    %1794 = vmatpush.msra.mxu0 %v1699
    %1795 = vmatpush.msra.mxu0 %v1691
    %1796 = vmatpush.msra.mxu0 %v1683
    %1797 = vmatpush.msra.mxu0 %v1675
    %1798 = vmatpush.msra.mxu0 %v1667
    %1799 = vmatpush.msra.mxu0 %v1659
    %1800 = vmatpush.msra.mxu0 %v1651
    %1801 = vmatpush.msra.mxu0 %v1643
    %1802 = vmatpush.msra.mxu0 %v1635
    %1803 = vmatpush.msra.mxu0 %v1627
    %1804 = vmatpush.msra.mxu0 %v1619
    %1805 = vmatpush.msra.mxu0 %v1611
    %1806 = vmatpush.msra.mxu0 %v1603
    %1807 = vmatmul.f32.gmra.mxu0 %v958
    %v1808 = vpop.f32.mrf.mxu0
    %v1809 = vadd.f32 %v1789, %v1808
    %1810 = vdwg.mxu0
    %1811 = vmatpush.msra.mxu0 %v1340
    %1812 = vmatpush.msra.mxu0 %v1332
    %1813 = vmatpush.msra.mxu0 %v1324
    %1814 = vmatpush.msra.mxu0 %v1316
    %1815 = vmatpush.msra.mxu0 %v1308
    %1816 = vmatpush.msra.mxu0 %v1300
    %1817 = vmatpush.msra.mxu0 %v1292
    %1818 = vmatpush.msra.mxu0 %v1284
    %1819 = vmatpush.msra.mxu0 %v1276
    %1820 = vmatpush.msra.mxu0 %v1268
    %1821 = vmatpush.msra.mxu0 %v1260
    %1822 = vmatpush.msra.mxu0 %v1252
    %1823 = vmatpush.msra.mxu0 %v1244
    %1824 = vmatpush.msra.mxu0 %v1236
    %1825 = vmatpush.msra.mxu0 %v1228
    %1826 = vmatpush.msra.mxu0 %v1220
    %1827 = vmatmul.f32.gmra.mxu0 %v955
    %v1828 = vpop.f32.mrf.mxu0
    %v1829 = vadd.f32 0.0, %v1828
    %1830 = vdwg.mxu0
    %1831 = vmatpush.msra.mxu0 %v1468
    %1832 = vmatpush.msra.mxu0 %v1460
    %1833 = vmatpush.msra.mxu0 %v1452
    %1834 = vmatpush.msra.mxu0 %v1444
    %1835 = vmatpush.msra.mxu0 %v1436
    %1836 = vmatpush.msra.mxu0 %v1428
    %1837 = vmatpush.msra.mxu0 %v1420
    %1838 = vmatpush.msra.mxu0 %v1412
    %1839 = vmatpush.msra.mxu0 %v1404
    %1840 = vmatpush.msra.mxu0 %v1396
    %1841 = vmatpush.msra.mxu0 %v1388
    %1842 = vmatpush.msra.mxu0 %v1380
    %1843 = vmatpush.msra.mxu0 %v1372
    %1844 = vmatpush.msra.mxu0 %v1364
    %1845 = vmatpush.msra.mxu0 %v1356
    %1846 = vmatpush.msra.mxu0 %v1348
    %1847 = vmatmul.f32.gmra.mxu0 %v956
    %v1848 = vpop.f32.mrf.mxu0
    %v1849 = vadd.f32 %v1829, %v1848
    %1850 = vdwg.mxu0
    %1851 = vmatpush.msra.mxu0 %v1596
    %1852 = vmatpush.msra.mxu0 %v1588
    %1853 = vmatpush.msra.mxu0 %v1580
    %1854 = vmatpush.msra.mxu0 %v1572
    %1855 = vmatpush.msra.mxu0 %v1564
    %1856 = vmatpush.msra.mxu0 %v1556
    %1857 = vmatpush.msra.mxu0 %v1548
    %1858 = vmatpush.msra.mxu0 %v1540
    %1859 = vmatpush.msra.mxu0 %v1532
    %1860 = vmatpush.msra.mxu0 %v1524
    %1861 = vmatpush.msra.mxu0 %v1516
    %1862 = vmatpush.msra.mxu0 %v1508
    %1863 = vmatpush.msra.mxu0 %v1500
    %1864 = vmatpush.msra.mxu0 %v1492
    %1865 = vmatpush.msra.mxu0 %v1484
    %1866 = vmatpush.msra.mxu0 %v1476
    %1867 = vmatmul.f32.gmra.mxu0 %v957
    %v1868 = vpop.f32.mrf.mxu0
    %v1869 = vadd.f32 %v1849, %v1868
    %1870 = vdwg.mxu0
    %1871 = vmatpush.msra.mxu0 %v1724
    %1872 = vmatpush.msra.mxu0 %v1716
    %1873 = vmatpush.msra.mxu0 %v1708
    %1874 = vmatpush.msra.mxu0 %v1700
    %1875 = vmatpush.msra.mxu0 %v1692
    %1876 = vmatpush.msra.mxu0 %v1684
    %1877 = vmatpush.msra.mxu0 %v1676
    %1878 = vmatpush.msra.mxu0 %v1668
    %1879 = vmatpush.msra.mxu0 %v1660
    %1880 = vmatpush.msra.mxu0 %v1652
    %1881 = vmatpush.msra.mxu0 %v1644
    %1882 = vmatpush.msra.mxu0 %v1636
    %1883 = vmatpush.msra.mxu0 %v1628
    %1884 = vmatpush.msra.mxu0 %v1620
    %1885 = vmatpush.msra.mxu0 %v1612
    %1886 = vmatpush.msra.mxu0 %v1604
    %1887 = vmatmul.f32.gmra.mxu0 %v958
    %v1888 = vpop.f32.mrf.mxu0
    %v1889 = vadd.f32 %v1869, %v1888
    %1890 = vdwg.mxu0
    %1891 = vmatpush.msra.mxu0 %v1341
    %1892 = vmatpush.msra.mxu0 %v1333
    %1893 = vmatpush.msra.mxu0 %v1325
    %1894 = vmatpush.msra.mxu0 %v1317
    %1895 = vmatpush.msra.mxu0 %v1309
    %1896 = vmatpush.msra.mxu0 %v1301
    %1897 = vmatpush.msra.mxu0 %v1293
    %1898 = vmatpush.msra.mxu0 %v1285
    %1899 = vmatpush.msra.mxu0 %v1277
    %1900 = vmatpush.msra.mxu0 %v1269
    %1901 = vmatpush.msra.mxu0 %v1261
    %1902 = vmatpush.msra.mxu0 %v1253
    %1903 = vmatpush.msra.mxu0 %v1245
    %1904 = vmatpush.msra.mxu0 %v1237
    %1905 = vmatpush.msra.mxu0 %v1229
    %1906 = vmatpush.msra.mxu0 %v1221
    %1907 = vmatmul.f32.gmra.mxu0 %v955
    %v1908 = vpop.f32.mrf.mxu0
    %v1909 = vadd.f32 0.0, %v1908
    %1910 = vdwg.mxu0
    %1911 = vmatpush.msra.mxu0 %v1469
    %1912 = vmatpush.msra.mxu0 %v1461
    %1913 = vmatpush.msra.mxu0 %v1453
    %1914 = vmatpush.msra.mxu0 %v1445
    %1915 = vmatpush.msra.mxu0 %v1437
    %1916 = vmatpush.msra.mxu0 %v1429
    %1917 = vmatpush.msra.mxu0 %v1421
    %1918 = vmatpush.msra.mxu0 %v1413
    %1919 = vmatpush.msra.mxu0 %v1405
    %1920 = vmatpush.msra.mxu0 %v1397
    %1921 = vmatpush.msra.mxu0 %v1389
    %1922 = vmatpush.msra.mxu0 %v1381
    %1923 = vmatpush.msra.mxu0 %v1373
    %1924 = vmatpush.msra.mxu0 %v1365
    %1925 = vmatpush.msra.mxu0 %v1357
    %1926 = vmatpush.msra.mxu0 %v1349
    %1927 = vmatmul.f32.gmra.mxu0 %v956
    %v1928 = vpop.f32.mrf.mxu0
    %v1929 = vadd.f32 %v1909, %v1928
    %1930 = vdwg.mxu0
    %1931 = vmatpush.msra.mxu0 %v1597
    %1932 = vmatpush.msra.mxu0 %v1589
    %1933 = vmatpush.msra.mxu0 %v1581
    %1934 = vmatpush.msra.mxu0 %v1573
    %1935 = vmatpush.msra.mxu0 %v1565
    %1936 = vmatpush.msra.mxu0 %v1557
    %1937 = vmatpush.msra.mxu0 %v1549
    %1938 = vmatpush.msra.mxu0 %v1541
    %1939 = vmatpush.msra.mxu0 %v1533
    %1940 = vmatpush.msra.mxu0 %v1525
    %1941 = vmatpush.msra.mxu0 %v1517
    %1942 = vmatpush.msra.mxu0 %v1509
    %1943 = vmatpush.msra.mxu0 %v1501
    %1944 = vmatpush.msra.mxu0 %v1493
    %1945 = vmatpush.msra.mxu0 %v1485
    %1946 = vmatpush.msra.mxu0 %v1477
    %1947 = vmatmul.f32.gmra.mxu0 %v957
    %v1948 = vpop.f32.mrf.mxu0
    %v1949 = vadd.f32 %v1929, %v1948
    %1950 = vdwg.mxu0
    %1951 = vmatpush.msra.mxu0 %v1725
    %1952 = vmatpush.msra.mxu0 %v1717
    %1953 = vmatpush.msra.mxu0 %v1709
    %1954 = vmatpush.msra.mxu0 %v1701
    %1955 = vmatpush.msra.mxu0 %v1693
    %1956 = vmatpush.msra.mxu0 %v1685
    %1957 = vmatpush.msra.mxu0 %v1677
    %1958 = vmatpush.msra.mxu0 %v1669
    %1959 = vmatpush.msra.mxu0 %v1661
    %1960 = vmatpush.msra.mxu0 %v1653
    %1961 = vmatpush.msra.mxu0 %v1645
    %1962 = vmatpush.msra.mxu0 %v1637
    %1963 = vmatpush.msra.mxu0 %v1629
    %1964 = vmatpush.msra.mxu0 %v1621
    %1965 = vmatpush.msra.mxu0 %v1613
    %1966 = vmatpush.msra.mxu0 %v1605
    %1967 = vmatmul.f32.gmra.mxu0 %v958
    %v1968 = vpop.f32.mrf.mxu0
    %v1969 = vadd.f32 %v1949, %v1968
    %1970 = vdwg.mxu0
    %1971 = vmatpush.msra.mxu0 %v1342
    %1972 = vmatpush.msra.mxu0 %v1334
    %1973 = vmatpush.msra.mxu0 %v1326
    %1974 = vmatpush.msra.mxu0 %v1318
    %1975 = vmatpush.msra.mxu0 %v1310
    %1976 = vmatpush.msra.mxu0 %v1302
    %1977 = vmatpush.msra.mxu0 %v1294
    %1978 = vmatpush.msra.mxu0 %v1286
    %1979 = vmatpush.msra.mxu0 %v1278
    %1980 = vmatpush.msra.mxu0 %v1270
    %1981 = vmatpush.msra.mxu0 %v1262
    %1982 = vmatpush.msra.mxu0 %v1254
    %1983 = vmatpush.msra.mxu0 %v1246
    %1984 = vmatpush.msra.mxu0 %v1238
    %1985 = vmatpush.msra.mxu0 %v1230
    %1986 = vmatpush.msra.mxu0 %v1222
    %1987 = vmatmul.f32.gmra.mxu0 %v955
    %v1988 = vpop.f32.mrf.mxu0
    %v1989 = vadd.f32 0.0, %v1988
    %1990 = vdwg.mxu0
    %1991 = vmatpush.msra.mxu0 %v1470
    %1992 = vmatpush.msra.mxu0 %v1462
    %1993 = vmatpush.msra.mxu0 %v1454
    %1994 = vmatpush.msra.mxu0 %v1446
    %1995 = vmatpush.msra.mxu0 %v1438
    %1996 = vmatpush.msra.mxu0 %v1430
    %1997 = vmatpush.msra.mxu0 %v1422
    %1998 = vmatpush.msra.mxu0 %v1414
    %1999 = vmatpush.msra.mxu0 %v1406
    %2000 = vmatpush.msra.mxu0 %v1398
    %2001 = vmatpush.msra.mxu0 %v1390
    %2002 = vmatpush.msra.mxu0 %v1382
    %2003 = vmatpush.msra.mxu0 %v1374
    %2004 = vmatpush.msra.mxu0 %v1366
    %2005 = vmatpush.msra.mxu0 %v1358
    %2006 = vmatpush.msra.mxu0 %v1350
    %2007 = vmatmul.f32.gmra.mxu0 %v956
    %v2008 = vpop.f32.mrf.mxu0
    %v2009 = vadd.f32 %v1989, %v2008
    %2010 = vdwg.mxu0
    %2011 = vmatpush.msra.mxu0 %v1598
    %2012 = vmatpush.msra.mxu0 %v1590
    %2013 = vmatpush.msra.mxu0 %v1582
    %2014 = vmatpush.msra.mxu0 %v1574
    %2015 = vmatpush.msra.mxu0 %v1566
    %2016 = vmatpush.msra.mxu0 %v1558
    %2017 = vmatpush.msra.mxu0 %v1550
    %2018 = vmatpush.msra.mxu0 %v1542
    %2019 = vmatpush.msra.mxu0 %v1534
    %2020 = vmatpush.msra.mxu0 %v1526
    %2021 = vmatpush.msra.mxu0 %v1518
    %2022 = vmatpush.msra.mxu0 %v1510
    %2023 = vmatpush.msra.mxu0 %v1502
    %2024 = vmatpush.msra.mxu0 %v1494
    %2025 = vmatpush.msra.mxu0 %v1486
    %2026 = vmatpush.msra.mxu0 %v1478
    %2027 = vmatmul.f32.gmra.mxu0 %v957
    %v2028 = vpop.f32.mrf.mxu0
    %v2029 = vadd.f32 %v2009, %v2028
    %2030 = vdwg.mxu0
    %2031 = vmatpush.msra.mxu0 %v1726
    %2032 = vmatpush.msra.mxu0 %v1718
    %2033 = vmatpush.msra.mxu0 %v1710
    %2034 = vmatpush.msra.mxu0 %v1702
    %2035 = vmatpush.msra.mxu0 %v1694
    %2036 = vmatpush.msra.mxu0 %v1686
    %2037 = vmatpush.msra.mxu0 %v1678
    %2038 = vmatpush.msra.mxu0 %v1670
    %2039 = vmatpush.msra.mxu0 %v1662
    %2040 = vmatpush.msra.mxu0 %v1654
    %2041 = vmatpush.msra.mxu0 %v1646
    %2042 = vmatpush.msra.mxu0 %v1638
    %2043 = vmatpush.msra.mxu0 %v1630
    %2044 = vmatpush.msra.mxu0 %v1622
    %2045 = vmatpush.msra.mxu0 %v1614
    %2046 = vmatpush.msra.mxu0 %v1606
    %2047 = vmatmul.f32.gmra.mxu0 %v958
    %v2048 = vpop.f32.mrf.mxu0
    %v2049 = vadd.f32 %v2029, %v2048
    %2050 = vdwg.mxu0
    %2051 = vmatpush.msra.mxu0 %v1343
    %2052 = vmatpush.msra.mxu0 %v1335
    %2053 = vmatpush.msra.mxu0 %v1327
    %2054 = vmatpush.msra.mxu0 %v1319
    %2055 = vmatpush.msra.mxu0 %v1311
    %2056 = vmatpush.msra.mxu0 %v1303
    %2057 = vmatpush.msra.mxu0 %v1295
    %2058 = vmatpush.msra.mxu0 %v1287
    %2059 = vmatpush.msra.mxu0 %v1279
    %2060 = vmatpush.msra.mxu0 %v1271
    %2061 = vmatpush.msra.mxu0 %v1263
    %2062 = vmatpush.msra.mxu0 %v1255
    %2063 = vmatpush.msra.mxu0 %v1247
    %2064 = vmatpush.msra.mxu0 %v1239
    %2065 = vmatpush.msra.mxu0 %v1231
    %2066 = vmatpush.msra.mxu0 %v1223
    %2067 = vmatmul.f32.gmra.mxu0 %v955
    %v2068 = vpop.f32.mrf.mxu0
    %v2069 = vadd.f32 0.0, %v2068
    %2070 = vdwg.mxu0
    %2071 = vmatpush.msra.mxu0 %v1471
    %2072 = vmatpush.msra.mxu0 %v1463
    %2073 = vmatpush.msra.mxu0 %v1455
    %2074 = vmatpush.msra.mxu0 %v1447
    %2075 = vmatpush.msra.mxu0 %v1439
    %2076 = vmatpush.msra.mxu0 %v1431
    %2077 = vmatpush.msra.mxu0 %v1423
    %2078 = vmatpush.msra.mxu0 %v1415
    %2079 = vmatpush.msra.mxu0 %v1407
    %2080 = vmatpush.msra.mxu0 %v1399
    %2081 = vmatpush.msra.mxu0 %v1391
    %2082 = vmatpush.msra.mxu0 %v1383
    %2083 = vmatpush.msra.mxu0 %v1375
    %2084 = vmatpush.msra.mxu0 %v1367
    %2085 = vmatpush.msra.mxu0 %v1359
    %2086 = vmatpush.msra.mxu0 %v1351
    %2087 = vmatmul.f32.gmra.mxu0 %v956
    %v2088 = vpop.f32.mrf.mxu0
    %v2089 = vadd.f32 %v2069, %v2088
    %2090 = vdwg.mxu0
    %2091 = vmatpush.msra.mxu0 %v1599
    %2092 = vmatpush.msra.mxu0 %v1591
    %2093 = vmatpush.msra.mxu0 %v1583
    %2094 = vmatpush.msra.mxu0 %v1575
    %2095 = vmatpush.msra.mxu0 %v1567
    %2096 = vmatpush.msra.mxu0 %v1559
    %2097 = vmatpush.msra.mxu0 %v1551
    %2098 = vmatpush.msra.mxu0 %v1543
    %2099 = vmatpush.msra.mxu0 %v1535
    %2100 = vmatpush.msra.mxu0 %v1527
    %2101 = vmatpush.msra.mxu0 %v1519
    %2102 = vmatpush.msra.mxu0 %v1511
    %2103 = vmatpush.msra.mxu0 %v1503
    %2104 = vmatpush.msra.mxu0 %v1495
    %2105 = vmatpush.msra.mxu0 %v1487
    %2106 = vmatpush.msra.mxu0 %v1479
    %2107 = vmatmul.f32.gmra.mxu0 %v957
    %v2108 = vpop.f32.mrf.mxu0
    %v2109 = vadd.f32 %v2089, %v2108
    %2110 = vdwg.mxu0
    %2111 = vmatpush.msra.mxu0 %v1727
    %2112 = vmatpush.msra.mxu0 %v1719
    %2113 = vmatpush.msra.mxu0 %v1711
    %2114 = vmatpush.msra.mxu0 %v1703
    %2115 = vmatpush.msra.mxu0 %v1695
    %2116 = vmatpush.msra.mxu0 %v1687
    %2117 = vmatpush.msra.mxu0 %v1679
    %2118 = vmatpush.msra.mxu0 %v1671
    %2119 = vmatpush.msra.mxu0 %v1663
    %2120 = vmatpush.msra.mxu0 %v1655
    %2121 = vmatpush.msra.mxu0 %v1647
    %2122 = vmatpush.msra.mxu0 %v1639
    %2123 = vmatpush.msra.mxu0 %v1631
    %2124 = vmatpush.msra.mxu0 %v1623
    %2125 = vmatpush.msra.mxu0 %v1615
    %2126 = vmatpush.msra.mxu0 %v1607
    %2127 = vmatmul.f32.gmra.mxu0 %v958
    %v2128 = vpop.f32.mrf.mxu0
    %v2129 = vadd.f32 %v2109, %v2128
    %2130 = vdwg.mxu0
    %2131 = vmatpush.msra.mxu0 %v1344
    %2132 = vmatpush.msra.mxu0 %v1336
    %2133 = vmatpush.msra.mxu0 %v1328
    %2134 = vmatpush.msra.mxu0 %v1320
    %2135 = vmatpush.msra.mxu0 %v1312
    %2136 = vmatpush.msra.mxu0 %v1304
    %2137 = vmatpush.msra.mxu0 %v1296
    %2138 = vmatpush.msra.mxu0 %v1288
    %2139 = vmatpush.msra.mxu0 %v1280
    %2140 = vmatpush.msra.mxu0 %v1272
    %2141 = vmatpush.msra.mxu0 %v1264
    %2142 = vmatpush.msra.mxu0 %v1256
    %2143 = vmatpush.msra.mxu0 %v1248
    %2144 = vmatpush.msra.mxu0 %v1240
    %2145 = vmatpush.msra.mxu0 %v1232
    %2146 = vmatpush.msra.mxu0 %v1224
    %2147 = vmatmul.f32.gmra.mxu0 %v955
    %v2148 = vpop.f32.mrf.mxu0
    %v2149 = vadd.f32 0.0, %v2148
    %2150 = vdwg.mxu0
    %2151 = vmatpush.msra.mxu0 %v1472
    %2152 = vmatpush.msra.mxu0 %v1464
    %2153 = vmatpush.msra.mxu0 %v1456
    %2154 = vmatpush.msra.mxu0 %v1448
    %2155 = vmatpush.msra.mxu0 %v1440
    %2156 = vmatpush.msra.mxu0 %v1432
    %2157 = vmatpush.msra.mxu0 %v1424
    %2158 = vmatpush.msra.mxu0 %v1416
    %2159 = vmatpush.msra.mxu0 %v1408
    %2160 = vmatpush.msra.mxu0 %v1400
    %2161 = vmatpush.msra.mxu0 %v1392
    %2162 = vmatpush.msra.mxu0 %v1384
    %2163 = vmatpush.msra.mxu0 %v1376
    %2164 = vmatpush.msra.mxu0 %v1368
    %2165 = vmatpush.msra.mxu0 %v1360
    %2166 = vmatpush.msra.mxu0 %v1352
    %2167 = vmatmul.f32.gmra.mxu0 %v956
    %v2168 = vpop.f32.mrf.mxu0
    %v2169 = vadd.f32 %v2149, %v2168
    %2170 = vdwg.mxu0
    %2171 = vmatpush.msra.mxu0 %v1600
    %2172 = vmatpush.msra.mxu0 %v1592
    %2173 = vmatpush.msra.mxu0 %v1584
    %2174 = vmatpush.msra.mxu0 %v1576
    %2175 = vmatpush.msra.mxu0 %v1568
    %2176 = vmatpush.msra.mxu0 %v1560
    %2177 = vmatpush.msra.mxu0 %v1552
    %2178 = vmatpush.msra.mxu0 %v1544
    %2179 = vmatpush.msra.mxu0 %v1536
    %2180 = vmatpush.msra.mxu0 %v1528
    %2181 = vmatpush.msra.mxu0 %v1520
    %2182 = vmatpush.msra.mxu0 %v1512
    %2183 = vmatpush.msra.mxu0 %v1504
    %2184 = vmatpush.msra.mxu0 %v1496
    %2185 = vmatpush.msra.mxu0 %v1488
    %2186 = vmatpush.msra.mxu0 %v1480
    %2187 = vmatmul.f32.gmra.mxu0 %v957
    %v2188 = vpop.f32.mrf.mxu0
    %v2189 = vadd.f32 %v2169, %v2188
    %2190 = vdwg.mxu0
    %2191 = vmatpush.msra.mxu0 %v1728
    %2192 = vmatpush.msra.mxu0 %v1720
    %2193 = vmatpush.msra.mxu0 %v1712
    %2194 = vmatpush.msra.mxu0 %v1704
    %2195 = vmatpush.msra.mxu0 %v1696
    %2196 = vmatpush.msra.mxu0 %v1688
    %2197 = vmatpush.msra.mxu0 %v1680
    %2198 = vmatpush.msra.mxu0 %v1672
    %2199 = vmatpush.msra.mxu0 %v1664
    %2200 = vmatpush.msra.mxu0 %v1656
    %2201 = vmatpush.msra.mxu0 %v1648
    %2202 = vmatpush.msra.mxu0 %v1640
    %2203 = vmatpush.msra.mxu0 %v1632
    %2204 = vmatpush.msra.mxu0 %v1624
    %2205 = vmatpush.msra.mxu0 %v1616
    %2206 = vmatpush.msra.mxu0 %v1608
    %2207 = vmatmul.f32.gmra.mxu0 %v958
    %v2208 = vpop.f32.mrf.mxu0
    %v2209 = vadd.f32 %v2189, %v2208
    %2210 = vdwg.mxu0
    %2211 = vmatpush.msra.mxu0 %v1345
    %2212 = vmatpush.msra.mxu0 %v1337
    %2213 = vmatpush.msra.mxu0 %v1329
    %2214 = vmatpush.msra.mxu0 %v1321
    %2215 = vmatpush.msra.mxu0 %v1313
    %2216 = vmatpush.msra.mxu0 %v1305
    %2217 = vmatpush.msra.mxu0 %v1297
    %2218 = vmatpush.msra.mxu0 %v1289
    %2219 = vmatpush.msra.mxu0 %v1281
    %2220 = vmatpush.msra.mxu0 %v1273
    %2221 = vmatpush.msra.mxu0 %v1265
    %2222 = vmatpush.msra.mxu0 %v1257
    %2223 = vmatpush.msra.mxu0 %v1249
    %2224 = vmatpush.msra.mxu0 %v1241
    %2225 = vmatpush.msra.mxu0 %v1233
    %2226 = vmatpush.msra.mxu0 %v1225
    %2227 = vmatmul.f32.gmra.mxu0 %v955
    %v2228 = vpop.f32.mrf.mxu0
    %v2229 = vadd.f32 0.0, %v2228
    %2230 = vdwg.mxu0
    %2231 = vmatpush.msra.mxu0 %v1473
    %2232 = vmatpush.msra.mxu0 %v1465
    %2233 = vmatpush.msra.mxu0 %v1457
    %2234 = vmatpush.msra.mxu0 %v1449
    %2235 = vmatpush.msra.mxu0 %v1441
    %2236 = vmatpush.msra.mxu0 %v1433
    %2237 = vmatpush.msra.mxu0 %v1425
    %2238 = vmatpush.msra.mxu0 %v1417
    %2239 = vmatpush.msra.mxu0 %v1409
    %2240 = vmatpush.msra.mxu0 %v1401
    %2241 = vmatpush.msra.mxu0 %v1393
    %2242 = vmatpush.msra.mxu0 %v1385
    %2243 = vmatpush.msra.mxu0 %v1377
    %2244 = vmatpush.msra.mxu0 %v1369
    %2245 = vmatpush.msra.mxu0 %v1361
    %2246 = vmatpush.msra.mxu0 %v1353
    %2247 = vmatmul.f32.gmra.mxu0 %v956
    %v2248 = vpop.f32.mrf.mxu0
    %v2249 = vadd.f32 %v2229, %v2248
    %2250 = vdwg.mxu0
    %2251 = vmatpush.msra.mxu0 %v1601
    %2252 = vmatpush.msra.mxu0 %v1593
    %2253 = vmatpush.msra.mxu0 %v1585
    %2254 = vmatpush.msra.mxu0 %v1577
    %2255 = vmatpush.msra.mxu0 %v1569
    %2256 = vmatpush.msra.mxu0 %v1561
    %2257 = vmatpush.msra.mxu0 %v1553
    %2258 = vmatpush.msra.mxu0 %v1545
    %2259 = vmatpush.msra.mxu0 %v1537
    %2260 = vmatpush.msra.mxu0 %v1529
    %2261 = vmatpush.msra.mxu0 %v1521
    %2262 = vmatpush.msra.mxu0 %v1513
    %2263 = vmatpush.msra.mxu0 %v1505
    %2264 = vmatpush.msra.mxu0 %v1497
    %2265 = vmatpush.msra.mxu0 %v1489
    %2266 = vmatpush.msra.mxu0 %v1481
    %2267 = vmatmul.f32.gmra.mxu0 %v957
    %v2268 = vpop.f32.mrf.mxu0
    %v2269 = vadd.f32 %v2249, %v2268
    %2270 = vdwg.mxu0
    %2271 = vmatpush.msra.mxu0 %v1729
    %2272 = vmatpush.msra.mxu0 %v1721
    %2273 = vmatpush.msra.mxu0 %v1713
    %2274 = vmatpush.msra.mxu0 %v1705
    %2275 = vmatpush.msra.mxu0 %v1697
    %2276 = vmatpush.msra.mxu0 %v1689
    %2277 = vmatpush.msra.mxu0 %v1681
    %2278 = vmatpush.msra.mxu0 %v1673
    %2279 = vmatpush.msra.mxu0 %v1665
    %2280 = vmatpush.msra.mxu0 %v1657
    %2281 = vmatpush.msra.mxu0 %v1649
    %2282 = vmatpush.msra.mxu0 %v1641
    %2283 = vmatpush.msra.mxu0 %v1633
    %2284 = vmatpush.msra.mxu0 %v1625
    %2285 = vmatpush.msra.mxu0 %v1617
    %2286 = vmatpush.msra.mxu0 %v1609
    %2287 = vmatmul.f32.gmra.mxu0 %v958
    %v2288 = vpop.f32.mrf.mxu0
    %v2289 = vadd.f32 %v2269, %v2288
    %2290 = vdwg.mxu0
    %2291 = vmatpush.msra.mxu0 %v1346
    %2292 = vmatpush.msra.mxu0 %v1338
    %2293 = vmatpush.msra.mxu0 %v1330
    %2294 = vmatpush.msra.mxu0 %v1322
    %2295 = vmatpush.msra.mxu0 %v1314
    %2296 = vmatpush.msra.mxu0 %v1306
    %2297 = vmatpush.msra.mxu0 %v1298
    %2298 = vmatpush.msra.mxu0 %v1290
    %2299 = vmatpush.msra.mxu0 %v1282
    %2300 = vmatpush.msra.mxu0 %v1274
    %2301 = vmatpush.msra.mxu0 %v1266
    %2302 = vmatpush.msra.mxu0 %v1258
    %2303 = vmatpush.msra.mxu0 %v1250
    %2304 = vmatpush.msra.mxu0 %v1242
    %2305 = vmatpush.msra.mxu0 %v1234
    %2306 = vmatpush.msra.mxu0 %v1226
    %2307 = vmatmul.f32.gmra.mxu0 %v955
    %v2308 = vpop.f32.mrf.mxu0
    %v2309 = vadd.f32 0.0, %v2308
    %2310 = vdwg.mxu0
    %2311 = vmatpush.msra.mxu0 %v1474
    %2312 = vmatpush.msra.mxu0 %v1466
    %2313 = vmatpush.msra.mxu0 %v1458
    %2314 = vmatpush.msra.mxu0 %v1450
    %2315 = vmatpush.msra.mxu0 %v1442
    %2316 = vmatpush.msra.mxu0 %v1434
    %2317 = vmatpush.msra.mxu0 %v1426
    %2318 = vmatpush.msra.mxu0 %v1418
    %2319 = vmatpush.msra.mxu0 %v1410
    %2320 = vmatpush.msra.mxu0 %v1402
    %2321 = vmatpush.msra.mxu0 %v1394
    %2322 = vmatpush.msra.mxu0 %v1386
    %2323 = vmatpush.msra.mxu0 %v1378
    %2324 = vmatpush.msra.mxu0 %v1370
    %2325 = vmatpush.msra.mxu0 %v1362
    %2326 = vmatpush.msra.mxu0 %v1354
    %2327 = vmatmul.f32.gmra.mxu0 %v956
    %v2328 = vpop.f32.mrf.mxu0
    %v2329 = vadd.f32 %v2309, %v2328
    %2330 = vdwg.mxu0
    %2331 = vmatpush.msra.mxu0 %v1602
    %2332 = vmatpush.msra.mxu0 %v1594
    %2333 = vmatpush.msra.mxu0 %v1586
    %2334 = vmatpush.msra.mxu0 %v1578
    %2335 = vmatpush.msra.mxu0 %v1570
    %2336 = vmatpush.msra.mxu0 %v1562
    %2337 = vmatpush.msra.mxu0 %v1554
    %2338 = vmatpush.msra.mxu0 %v1546
    %2339 = vmatpush.msra.mxu0 %v1538
    %2340 = vmatpush.msra.mxu0 %v1530
    %2341 = vmatpush.msra.mxu0 %v1522
    %2342 = vmatpush.msra.mxu0 %v1514
    %2343 = vmatpush.msra.mxu0 %v1506
    %2344 = vmatpush.msra.mxu0 %v1498
    %2345 = vmatpush.msra.mxu0 %v1490
    %2346 = vmatpush.msra.mxu0 %v1482
    %2347 = vmatmul.f32.gmra.mxu0 %v957
    %v2348 = vpop.f32.mrf.mxu0
    %v2349 = vadd.f32 %v2329, %v2348
    %2350 = vdwg.mxu0
    %2351 = vmatpush.msra.mxu0 %v1730
    %2352 = vmatpush.msra.mxu0 %v1722
    %2353 = vmatpush.msra.mxu0 %v1714
    %2354 = vmatpush.msra.mxu0 %v1706
    %2355 = vmatpush.msra.mxu0 %v1698
    %2356 = vmatpush.msra.mxu0 %v1690
    %2357 = vmatpush.msra.mxu0 %v1682
    %2358 = vmatpush.msra.mxu0 %v1674
    %2359 = vmatpush.msra.mxu0 %v1666
    %2360 = vmatpush.msra.mxu0 %v1658
    %2361 = vmatpush.msra.mxu0 %v1650
    %2362 = vmatpush.msra.mxu0 %v1642
    %2363 = vmatpush.msra.mxu0 %v1634
    %2364 = vmatpush.msra.mxu0 %v1626
    %2365 = vmatpush.msra.mxu0 %v1618
    %2366 = vmatpush.msra.mxu0 %v1610
    %2367 = vmatmul.f32.gmra.mxu0 %v958
    %v2368 = vpop.f32.mrf.mxu0
    %v2369 = vadd.f32 %v2349, %v2368
    %2370 = vdwg.mxu0
    %v2371 = vld [vmem:[#allocation18] sm:$0xff]
    %v2372 = vld [vmem:[#allocation19] sm:$0xff]
    %v2373 = vrot.slane %v1809, 4
    %v2374 = vadd.f32 %v1809, %v2373
    %v2375 = vrot.slane %v2374, 2
    %v2376 = vadd.f32 %v2374, %v2375
    %v2377 = vrot.slane %v2376, 1
    %v2378 = vadd.f32 %v2376, %v2377
    %v2379 = vrot.slane %v1889, 4
    %v2380 = vadd.f32 %v1889, %v2379
    %v2381 = vrot.slane %v2380, 2
    %v2382 = vadd.f32 %v2380, %v2381
    %v2383 = vrot.slane %v2382, 1
    %v2384 = vadd.f32 %v2382, %v2383
    %v2385 = vrot.slane %v1969, 4
    %v2386 = vadd.f32 %v1969, %v2385
    %v2387 = vrot.slane %v2386, 2
    %v2388 = vadd.f32 %v2386, %v2387
    %v2389 = vrot.slane %v2388, 1
    %v2390 = vadd.f32 %v2388, %v2389
    %v2391 = vrot.slane %v2049, 4
    %v2392 = vadd.f32 %v2049, %v2391
    %v2393 = vrot.slane %v2392, 2
    %v2394 = vadd.f32 %v2392, %v2393
    %v2395 = vrot.slane %v2394, 1
    %v2396 = vadd.f32 %v2394, %v2395
    %v2397 = vrot.slane %v2129, 4
    %v2398 = vadd.f32 %v2129, %v2397
    %v2399 = vrot.slane %v2398, 2
    %v2400 = vadd.f32 %v2398, %v2399
    %v2401 = vrot.slane %v2400, 1
    %v2402 = vadd.f32 %v2400, %v2401
    %v2403 = vrot.slane %v2209, 4
    %v2404 = vadd.f32 %v2209, %v2403
    %v2405 = vrot.slane %v2404, 2
    %v2406 = vadd.f32 %v2404, %v2405
    %v2407 = vrot.slane %v2406, 1
    %v2408 = vadd.f32 %v2406, %v2407
    %v2409 = vrot.slane %v2289, 4
    %v2410 = vadd.f32 %v2289, %v2409
    %v2411 = vrot.slane %v2410, 2
    %v2412 = vadd.f32 %v2410, %v2411
    %v2413 = vrot.slane %v2412, 1
    %v2414 = vadd.f32 %v2412, %v2413
    %v2415 = vrot.slane %v2369, 4
    %v2416 = vadd.f32 %v2369, %v2415
    %v2417 = vrot.slane %v2416, 2
    %v2418 = vadd.f32 %v2416, %v2417
    %v2419 = vrot.slane %v2418, 1
    %v2420 = vadd.f32 %v2418, %v2419
    %v2421 = vmul.f32 %v2378, %v390
    %v2422 = vmul.f32 %v2384, %v390
    %v2423 = vmul.f32 %v2390, %v390
    %v2424 = vmul.f32 %v2396, %v390
    %v2425 = vmul.f32 %v2402, %v390
    %v2426 = vmul.f32 %v2408, %v390
    %v2427 = vmul.f32 %v2414, %v390
    %v2428 = vmul.f32 %v2420, %v390
    %v2429 = vsub.f32 %v1809, %v2421
    %v2430 = vsub.f32 %v1889, %v2422
    %v2431 = vsub.f32 %v1969, %v2423
    %v2432 = vsub.f32 %v2049, %v2424
    %v2433 = vsub.f32 %v2129, %v2425
    %v2434 = vsub.f32 %v2209, %v2426
    %v2435 = vsub.f32 %v2289, %v2427
    %v2436 = vsub.f32 %v2369, %v2428
    %v2437 = vmul.f32 %v2429, %v2429
    %v2438 = vmul.f32 %v2430, %v2430
    %v2439 = vmul.f32 %v2431, %v2431
    %v2440 = vmul.f32 %v2432, %v2432
    %v2441 = vmul.f32 %v2433, %v2433
    %v2442 = vmul.f32 %v2434, %v2434
    %v2443 = vmul.f32 %v2435, %v2435
    %v2444 = vmul.f32 %v2436, %v2436
    %v2445 = vrot.slane %v2437, 4
    %v2446 = vadd.f32 %v2437, %v2445
    %v2447 = vrot.slane %v2446, 2
    %v2448 = vadd.f32 %v2446, %v2447
    %v2449 = vrot.slane %v2448, 1
    %v2450 = vadd.f32 %v2448, %v2449
    %v2451 = vrot.slane %v2438, 4
    %v2452 = vadd.f32 %v2438, %v2451
    %v2453 = vrot.slane %v2452, 2
    %v2454 = vadd.f32 %v2452, %v2453
    %v2455 = vrot.slane %v2454, 1
    %v2456 = vadd.f32 %v2454, %v2455
    %v2457 = vrot.slane %v2439, 4
    %v2458 = vadd.f32 %v2439, %v2457
    %v2459 = vrot.slane %v2458, 2
    %v2460 = vadd.f32 %v2458, %v2459
    %v2461 = vrot.slane %v2460, 1
    %v2462 = vadd.f32 %v2460, %v2461
    %v2463 = vrot.slane %v2440, 4
    %v2464 = vadd.f32 %v2440, %v2463
    %v2465 = vrot.slane %v2464, 2
    %v2466 = vadd.f32 %v2464, %v2465
    %v2467 = vrot.slane %v2466, 1
    %v2468 = vadd.f32 %v2466, %v2467
    %v2469 = vrot.slane %v2441, 4
    %v2470 = vadd.f32 %v2441, %v2469
    %v2471 = vrot.slane %v2470, 2
    %v2472 = vadd.f32 %v2470, %v2471
    %v2473 = vrot.slane %v2472, 1
    %v2474 = vadd.f32 %v2472, %v2473
    %v2475 = vrot.slane %v2442, 4
    %v2476 = vadd.f32 %v2442, %v2475
    %v2477 = vrot.slane %v2476, 2
    %v2478 = vadd.f32 %v2476, %v2477
    %v2479 = vrot.slane %v2478, 1
    %v2480 = vadd.f32 %v2478, %v2479
    %v2481 = vrot.slane %v2443, 4
    %v2482 = vadd.f32 %v2443, %v2481
    %v2483 = vrot.slane %v2482, 2
    %v2484 = vadd.f32 %v2482, %v2483
    %v2485 = vrot.slane %v2484, 1
    %v2486 = vadd.f32 %v2484, %v2485
    %v2487 = vrot.slane %v2444, 4
    %v2488 = vadd.f32 %v2444, %v2487
    %v2489 = vrot.slane %v2488, 2
    %v2490 = vadd.f32 %v2488, %v2489
    %v2491 = vrot.slane %v2490, 1
    %v2492 = vadd.f32 %v2490, %v2491
    %v2493 = vmul.f32 %v2450, %v390
    %v2494 = vmul.f32 %v2456, %v390
    %v2495 = vmul.f32 %v2462, %v390
    %v2496 = vmul.f32 %v2468, %v390
    %v2497 = vmul.f32 %v2474, %v390
    %v2498 = vmul.f32 %v2480, %v390
    %v2499 = vmul.f32 %v2486, %v390
    %v2500 = vmul.f32 %v2492, %v390
    %v2501 = vadd.f32 %v2493, 0.8
    %v2502 = vadd.f32 %v2494, 0.8
    %v2503 = vadd.f32 %v2495, 0.8
    %v2504 = vadd.f32 %v2496, 0.8
    %v2505 = vadd.f32 %v2497, 0.8
    %v2506 = vadd.f32 %v2498, 0.8
    %v2507 = vadd.f32 %v2499, 0.8
    %v2508 = vadd.f32 %v2500, 0.8
    %v2509 = vrsqrt.pop %v2501
    %v2510 = vmul.f32 %v2509, %v2501
    %v2511 = vmul.f32 %v2510, %v2509
    %v2512 = vmul.f32 0.5, %v2511
    %v2513 = vsub.f32 1.5, %v2512
    %v2514 = vmul.f32 %v2509, %v2513
    %vm2515 = vweird.f32 %v2501
    %vm2516 = vweird.f32 %v2509
    %vm2517 = vmor %vm2515, %vm2516
    %v2518 = vsel %vm2517, %v2509, %v2514
    %v2519 = vrsqrt.pop %v2502
    %v2520 = vmul.f32 %v2519, %v2502
    %v2521 = vmul.f32 %v2520, %v2519
    %v2522 = vmul.f32 0.5, %v2521
    %v2523 = vsub.f32 1.5, %v2522
    %v2524 = vmul.f32 %v2519, %v2523
    %vm2525 = vweird.f32 %v2502
    %vm2526 = vweird.f32 %v2519
    %vm2527 = vmor %vm2525, %vm2526
    %v2528 = vsel %vm2527, %v2519, %v2524
    %v2529 = vrsqrt.pop %v2503
    %v2530 = vmul.f32 %v2529, %v2503
    %v2531 = vmul.f32 %v2530, %v2529
    %v2532 = vmul.f32 0.5, %v2531
    %v2533 = vsub.f32 1.5, %v2532
    %v2534 = vmul.f32 %v2529, %v2533
    %vm2535 = vweird.f32 %v2503
    %vm2536 = vweird.f32 %v2529
    %vm2537 = vmor %vm2535, %vm2536
    %v2538 = vsel %vm2537, %v2529, %v2534
    %v2539 = vrsqrt.pop %v2504
    %v2540 = vmul.f32 %v2539, %v2504
    %v2541 = vmul.f32 %v2540, %v2539
    %v2542 = vmul.f32 0.5, %v2541
    %v2543 = vsub.f32 1.5, %v2542
    %v2544 = vmul.f32 %v2539, %v2543
    %vm2545 = vweird.f32 %v2504
    %vm2546 = vweird.f32 %v2539
    %vm2547 = vmor %vm2545, %vm2546
    %v2548 = vsel %vm2547, %v2539, %v2544
    %v2549 = vrsqrt.pop %v2505
    %v2550 = vmul.f32 %v2549, %v2505
    %v2551 = vmul.f32 %v2550, %v2549
    %v2552 = vmul.f32 0.5, %v2551
    %v2553 = vsub.f32 1.5, %v2552
    %v2554 = vmul.f32 %v2549, %v2553
    %vm2555 = vweird.f32 %v2505
    %vm2556 = vweird.f32 %v2549
    %vm2557 = vmor %vm2555, %vm2556
    %v2558 = vsel %vm2557, %v2549, %v2554
    %v2559 = vrsqrt.pop %v2506
    %v2560 = vmul.f32 %v2559, %v2506
    %v2561 = vmul.f32 %v2560, %v2559
    %v2562 = vmul.f32 0.5, %v2561
    %v2563 = vsub.f32 1.5, %v2562
    %v2564 = vmul.f32 %v2559, %v2563
    %vm2565 = vweird.f32 %v2506
    %vm2566 = vweird.f32 %v2559
    %vm2567 = vmor %vm2565, %vm2566
    %v2568 = vsel %vm2567, %v2559, %v2564
    %v2569 = vrsqrt.pop %v2507
    %v2570 = vmul.f32 %v2569, %v2507
    %v2571 = vmul.f32 %v2570, %v2569
    %v2572 = vmul.f32 0.5, %v2571
    %v2573 = vsub.f32 1.5, %v2572
    %v2574 = vmul.f32 %v2569, %v2573
    %vm2575 = vweird.f32 %v2507
    %vm2576 = vweird.f32 %v2569
    %vm2577 = vmor %vm2575, %vm2576
    %v2578 = vsel %vm2577, %v2569, %v2574
    %v2579 = vrsqrt.pop %v2508
    %v2580 = vmul.f32 %v2579, %v2508
    %v2581 = vmul.f32 %v2580, %v2579
    %v2582 = vmul.f32 0.5, %v2581
    %v2583 = vsub.f32 1.5, %v2582
    %v2584 = vmul.f32 %v2579, %v2583
    %vm2585 = vweird.f32 %v2508
    %vm2586 = vweird.f32 %v2579
    %vm2587 = vmor %vm2585, %vm2586
    %v2588 = vsel %vm2587, %v2579, %v2584
    %v2589 = vmul.f32 %v2429, %v2518
    %v2590 = vmul.f32 %v2430, %v2528
    %v2591 = vmul.f32 %v2431, %v2538
    %v2592 = vmul.f32 %v2432, %v2548
    %v2593 = vmul.f32 %v2433, %v2558
    %v2594 = vmul.f32 %v2434, %v2568
    %v2595 = vmul.f32 %v2435, %v2578
    %v2596 = vmul.f32 %v2436, %v2588
    %v2598 = vperm.slane %v2371, 0
    %v2599 = vperm.slane %v2371, 1
    %v2600 = vperm.slane %v2371, 2
    %v2601 = vperm.slane %v2371, 3
    %v2602 = vperm.slane %v2371, 4
    %v2603 = vperm.slane %v2371, 5
    %v2604 = vperm.slane %v2371, 6
    %v2605 = vperm.slane %v2371, 7
    %v2614 = vmul.f32 %v2589, %v2598
    %v2615 = vmul.f32 %v2590, %v2599
    %v2616 = vmul.f32 %v2591, %v2600
    %v2617 = vmul.f32 %v2592, %v2601
    %v2618 = vmul.f32 %v2593, %v2602
    %v2619 = vmul.f32 %v2594, %v2603
    %v2620 = vmul.f32 %v2595, %v2604
    %v2621 = vmul.f32 %v2596, %v2605
    %v2623 = vperm.slane %v2372, 0
    %v2624 = vperm.slane %v2372, 1
    %v2625 = vperm.slane %v2372, 2
    %v2626 = vperm.slane %v2372, 3
    %v2627 = vperm.slane %v2372, 4
    %v2628 = vperm.slane %v2372, 5
    %v2629 = vperm.slane %v2372, 6
    %v2630 = vperm.slane %v2372, 7
    %v2639 = vadd.f32 %v2614, %v2623
    %v2640 = vadd.f32 %v2615, %v2624
    %v2641 = vadd.f32 %v2616, %v2625
    %v2642 = vadd.f32 %v2617, %v2626
    %v2643 = vadd.f32 %v2618, %v2627
    %v2644 = vadd.f32 %v2619, %v2628
    %v2645 = vadd.f32 %v2620, %v2629
    %v2646 = vadd.f32 %v2621, %v2630
    %vm2647 = vcmp.gt.f32.partialorder %v2639, 0.0
    %vm2648 = vcmp.gt.f32.partialorder %v2640, 0.0
    %vm2649 = vcmp.gt.f32.partialorder %v2641, 0.0
    %vm2650 = vcmp.gt.f32.partialorder %v2642, 0.0
    %vm2651 = vcmp.gt.f32.partialorder %v2643, 0.0
    %vm2652 = vcmp.gt.f32.partialorder %v2644, 0.0
    %vm2653 = vcmp.gt.f32.partialorder %v2645, 0.0
    %vm2654 = vcmp.gt.f32.partialorder %v2646, 0.0
    %v2655 = vmul.f32 %v2639, 0.2
    %v2656 = vmul.f32 %v2640, 0.2
    %v2657 = vmul.f32 %v2641, 0.2
    %v2658 = vmul.f32 %v2642, 0.2
    %v2659 = vmul.f32 %v2643, 0.2
    %v2660 = vmul.f32 %v2644, 0.2
    %v2661 = vmul.f32 %v2645, 0.2
    %v2662 = vmul.f32 %v2646, 0.2
    %v2663 = vsel %vm2647, %v2639, %v2655
    %v2664 = vsel %vm2648, %v2640, %v2656
    %v2665 = vsel %vm2649, %v2641, %v2657
    %v2666 = vsel %vm2650, %v2642, %v2658
    %v2667 = vsel %vm2651, %v2643, %v2659
    %v2668 = vsel %vm2652, %v2644, %v2660
    %v2669 = vsel %vm2653, %v2645, %v2661
    %v2670 = vsel %vm2654, %v2646, %v2662
    %s2671 = smul.u32 4, 128
    %s2672 = smul.u32 %s2671, 7
    %s2673 = sshll.u32 %s2672, 4
    %2674 = dma.done %s211, %s2673
    %v2675 = vld [vmem:[#allocation3] sm:$0xff]
    %v2676 = vld [vmem:[#allocation3 + $0x8] sm:$0xff]
    %v2677 = vld [vmem:[#allocation3 + $0x10] sm:$0xff]
    %v2678 = vld [vmem:[#allocation3 + $0x18] sm:$0xf]
    %v2679 = vld [vmem:[#allocation3 + $0x1c] sm:$0xff]
    %v2680 = vld [vmem:[#allocation3 + $0x24] sm:$0xff]
    %v2681 = vld [vmem:[#allocation3 + $0x2c] sm:$0xff]
    %v2682 = vld [vmem:[#allocation3 + $0x34] sm:$0xf]
    %v2683 = vld [vmem:[#allocation3 + $0x38] sm:$0xff]
    %v2684 = vld [vmem:[#allocation3 + $0x40] sm:$0xff]
    %v2685 = vld [vmem:[#allocation3 + $0x48] sm:$0xff]
    %v2686 = vld [vmem:[#allocation3 + $0x50] sm:$0xf]
    %v2687 = vld [vmem:[#allocation3 + $0x54] sm:$0xff]
    %v2688 = vld [vmem:[#allocation3 + $0x5c] sm:$0xff]
    %v2689 = vld [vmem:[#allocation3 + $0x64] sm:$0xff]
    %v2690 = vld [vmem:[#allocation3 + $0x6c] sm:$0xf]
    %v2691 = vld [vmem:[#allocation3 + $0x70] sm:$0xff]
    %v2692 = vld [vmem:[#allocation3 + $0x78] sm:$0xff]
    %v2693 = vld [vmem:[#allocation3 + $0x80] sm:$0xff]
    %v2694 = vld [vmem:[#allocation3 + $0x88] sm:$0xf]
    %v2695 = vld [vmem:[#allocation3 + $0x8c] sm:$0xff]
    %v2696 = vld [vmem:[#allocation3 + $0x94] sm:$0xff]
    %v2697 = vld [vmem:[#allocation3 + $0x9c] sm:$0xff]
    %v2698 = vld [vmem:[#allocation3 + $0xa4] sm:$0xf]
    %v2699 = vld [vmem:[#allocation3 + $0xa8] sm:$0xff]
    %v2700 = vld [vmem:[#allocation3 + $0xb0] sm:$0xff]
    %v2701 = vld [vmem:[#allocation3 + $0xb8] sm:$0xff]
    %v2702 = vld [vmem:[#allocation3 + $0xc0] sm:$0xf]
    %v2703 = vld [vmem:[#allocation3 + $0xc4] sm:$0xff]
    %v2704 = vld [vmem:[#allocation3 + $0xcc] sm:$0xff]
    %v2705 = vld [vmem:[#allocation3 + $0xd4] sm:$0xff]
    %v2706 = vld [vmem:[#allocation3 + $0xdc] sm:$0xf]
    %v2707 = vld [vmem:[#allocation3 + $0xe0] sm:$0xff]
    %v2708 = vld [vmem:[#allocation3 + $0xe8] sm:$0xff]
    %v2709 = vld [vmem:[#allocation3 + $0xf0] sm:$0xff]
    %v2710 = vld [vmem:[#allocation3 + $0xf8] sm:$0xf]
    %v2711 = vld [vmem:[#allocation3 + $0xfc] sm:$0xff]
    %v2712 = vld [vmem:[#allocation3 + $0x104] sm:$0xff]
    %v2713 = vld [vmem:[#allocation3 + $0x10c] sm:$0xff]
    %v2714 = vld [vmem:[#allocation3 + $0x114] sm:$0xf]
    %v2715 = vld [vmem:[#allocation3 + $0x118] sm:$0xff]
    %v2716 = vld [vmem:[#allocation3 + $0x120] sm:$0xff]
    %v2717 = vld [vmem:[#allocation3 + $0x128] sm:$0xff]
    %v2718 = vld [vmem:[#allocation3 + $0x130] sm:$0xf]
    %v2719 = vld [vmem:[#allocation3 + $0x134] sm:$0xff]
    %v2720 = vld [vmem:[#allocation3 + $0x13c] sm:$0xff]
    %v2721 = vld [vmem:[#allocation3 + $0x144] sm:$0xff]
    %v2722 = vld [vmem:[#allocation3 + $0x14c] sm:$0xf]
    %v2723 = vld [vmem:[#allocation3 + $0x150] sm:$0xff]
    %v2724 = vld [vmem:[#allocation3 + $0x158] sm:$0xff]
    %v2725 = vld [vmem:[#allocation3 + $0x160] sm:$0xff]
    %v2726 = vld [vmem:[#allocation3 + $0x168] sm:$0xf]
    %v2727 = vld [vmem:[#allocation3 + $0x16c] sm:$0xff]
    %v2728 = vld [vmem:[#allocation3 + $0x174] sm:$0xff]
    %v2729 = vld [vmem:[#allocation3 + $0x17c] sm:$0xff]
    %v2730 = vld [vmem:[#allocation3 + $0x184] sm:$0xf]
    %v2731 = vld [vmem:[#allocation3 + $0x188] sm:$0xff]
    %v2732 = vld [vmem:[#allocation3 + $0x190] sm:$0xff]
    %v2733 = vld [vmem:[#allocation3 + $0x198] sm:$0xff]
    %v2734 = vld [vmem:[#allocation3 + $0x1a0] sm:$0xf]
    %v2735 = vld [vmem:[#allocation3 + $0x1a4] sm:$0xff]
    %v2736 = vld [vmem:[#allocation3 + $0x1ac] sm:$0xff]
    %v2737 = vld [vmem:[#allocation3 + $0x1b4] sm:$0xff]
    %v2738 = vld [vmem:[#allocation3 + $0x1bc] sm:$0xf]
    %v2739 = vld [vmem:[#allocation3 + $0x1c0] sm:$0xff]
    %v2740 = vld [vmem:[#allocation3 + $0x1c8] sm:$0xff]
    %v2741 = vld [vmem:[#allocation3 + $0x1d0] sm:$0xff]
    %v2742 = vld [vmem:[#allocation3 + $0x1d8] sm:$0xf]
    %v2743 = vld [vmem:[#allocation3 + $0x1dc] sm:$0xff]
    %v2744 = vld [vmem:[#allocation3 + $0x1e4] sm:$0xff]
    %v2745 = vld [vmem:[#allocation3 + $0x1ec] sm:$0xff]
    %v2746 = vld [vmem:[#allocation3 + $0x1f4] sm:$0xf]
    %v2747 = vld [vmem:[#allocation3 + $0x1f8] sm:$0xff]
    %v2748 = vld [vmem:[#allocation3 + $0x200] sm:$0xff]
    %v2749 = vld [vmem:[#allocation3 + $0x208] sm:$0xff]
    %v2750 = vld [vmem:[#allocation3 + $0x210] sm:$0xf]
    %v2751 = vld [vmem:[#allocation3 + $0x214] sm:$0xff]
    %v2752 = vld [vmem:[#allocation3 + $0x21c] sm:$0xff]
    %v2753 = vld [vmem:[#allocation3 + $0x224] sm:$0xff]
    %v2754 = vld [vmem:[#allocation3 + $0x22c] sm:$0xf]
    %v2755 = vld [vmem:[#allocation3 + $0x230] sm:$0xff]
    %v2756 = vld [vmem:[#allocation3 + $0x238] sm:$0xff]
    %v2757 = vld [vmem:[#allocation3 + $0x240] sm:$0xff]
    %v2758 = vld [vmem:[#allocation3 + $0x248] sm:$0xf]
    %v2759 = vld [vmem:[#allocation3 + $0x24c] sm:$0xff]
    %v2760 = vld [vmem:[#allocation3 + $0x254] sm:$0xff]
    %v2761 = vld [vmem:[#allocation3 + $0x25c] sm:$0xff]
    %v2762 = vld [vmem:[#allocation3 + $0x264] sm:$0xf]
    %v2763 = vld [vmem:[#allocation3 + $0x268] sm:$0xff]
    %v2764 = vld [vmem:[#allocation3 + $0x270] sm:$0xff]
    %v2765 = vld [vmem:[#allocation3 + $0x278] sm:$0xff]
    %v2766 = vld [vmem:[#allocation3 + $0x280] sm:$0xf]
    %v2767 = vld [vmem:[#allocation3 + $0x284] sm:$0xff]
    %v2768 = vld [vmem:[#allocation3 + $0x28c] sm:$0xff]
    %v2769 = vld [vmem:[#allocation3 + $0x294] sm:$0xff]
    %v2770 = vld [vmem:[#allocation3 + $0x29c] sm:$0xf]
    %v2771 = vld [vmem:[#allocation3 + $0x2a0] sm:$0xff]
    %v2772 = vld [vmem:[#allocation3 + $0x2a8] sm:$0xff]
    %v2773 = vld [vmem:[#allocation3 + $0x2b0] sm:$0xff]
    %v2774 = vld [vmem:[#allocation3 + $0x2b8] sm:$0xf]
    %v2775 = vld [vmem:[#allocation3 + $0x2bc] sm:$0xff]
    %v2776 = vld [vmem:[#allocation3 + $0x2c4] sm:$0xff]
    %v2777 = vld [vmem:[#allocation3 + $0x2cc] sm:$0xff]
    %v2778 = vld [vmem:[#allocation3 + $0x2d4] sm:$0xf]
    %v2779 = vld [vmem:[#allocation3 + $0x2d8] sm:$0xff]
    %v2780 = vld [vmem:[#allocation3 + $0x2e0] sm:$0xff]
    %v2781 = vld [vmem:[#allocation3 + $0x2e8] sm:$0xff]
    %v2782 = vld [vmem:[#allocation3 + $0x2f0] sm:$0xf]
    %v2783 = vld [vmem:[#allocation3 + $0x2f4] sm:$0xff]
    %v2784 = vld [vmem:[#allocation3 + $0x2fc] sm:$0xff]
    %v2785 = vld [vmem:[#allocation3 + $0x304] sm:$0xff]
    %v2786 = vld [vmem:[#allocation3 + $0x30c] sm:$0xf]
    %v2787 = vld [vmem:[#allocation3 + $0x310] sm:$0xff]
    %v2788 = vld [vmem:[#allocation3 + $0x318] sm:$0xff]
    %v2789 = vld [vmem:[#allocation3 + $0x320] sm:$0xff]
    %v2790 = vld [vmem:[#allocation3 + $0x328] sm:$0xf]
    %v2791 = vld [vmem:[#allocation3 + $0x32c] sm:$0xff]
    %v2792 = vld [vmem:[#allocation3 + $0x334] sm:$0xff]
    %v2793 = vld [vmem:[#allocation3 + $0x33c] sm:$0xff]
    %v2794 = vld [vmem:[#allocation3 + $0x344] sm:$0xf]
    %v2795 = vld [vmem:[#allocation3 + $0x348] sm:$0xff]
    %v2796 = vld [vmem:[#allocation3 + $0x350] sm:$0xff]
    %v2797 = vld [vmem:[#allocation3 + $0x358] sm:$0xff]
    %v2798 = vld [vmem:[#allocation3 + $0x360] sm:$0xf]
    %v2799 = vld [vmem:[#allocation3 + $0x364] sm:$0xff]
    %v2800 = vld [vmem:[#allocation3 + $0x36c] sm:$0xff]
    %v2801 = vld [vmem:[#allocation3 + $0x374] sm:$0xff]
    %v2802 = vld [vmem:[#allocation3 + $0x37c] sm:$0xf]
    %v2803 = vld [vmem:[#allocation3 + $0x380] sm:$0xff]
    %v2804 = vld [vmem:[#allocation3 + $0x388] sm:$0xff]
    %v2805 = vld [vmem:[#allocation3 + $0x390] sm:$0xff]
    %v2806 = vld [vmem:[#allocation3 + $0x398] sm:$0xf]
    %v2807 = vld [vmem:[#allocation3 + $0x39c] sm:$0xff]
    %v2808 = vld [vmem:[#allocation3 + $0x3a4] sm:$0xff]
    %v2809 = vld [vmem:[#allocation3 + $0x3ac] sm:$0xff]
    %v2810 = vld [vmem:[#allocation3 + $0x3b4] sm:$0xf]
    %v2811 = vld [vmem:[#allocation3 + $0x3b8] sm:$0xff]
    %v2812 = vld [vmem:[#allocation3 + $0x3c0] sm:$0xff]
    %v2813 = vld [vmem:[#allocation3 + $0x3c8] sm:$0xff]
    %v2814 = vld [vmem:[#allocation3 + $0x3d0] sm:$0xf]
    %v2815 = vld [vmem:[#allocation3 + $0x3d4] sm:$0xff]
    %v2816 = vld [vmem:[#allocation3 + $0x3dc] sm:$0xff]
    %v2817 = vld [vmem:[#allocation3 + $0x3e4] sm:$0xff]
    %v2818 = vld [vmem:[#allocation3 + $0x3ec] sm:$0xf]
    %v2819 = vld [vmem:[#allocation3 + $0x3f0] sm:$0xff]
    %v2820 = vld [vmem:[#allocation3 + $0x3f8] sm:$0xff]
    %v2821 = vld [vmem:[#allocation3 + $0x400] sm:$0xff]
    %v2822 = vld [vmem:[#allocation3 + $0x408] sm:$0xf]
    %v2823 = vld [vmem:[#allocation3 + $0x40c] sm:$0xff]
    %v2824 = vld [vmem:[#allocation3 + $0x414] sm:$0xff]
    %v2825 = vld [vmem:[#allocation3 + $0x41c] sm:$0xff]
    %v2826 = vld [vmem:[#allocation3 + $0x424] sm:$0xf]
    %v2827 = vld [vmem:[#allocation3 + $0x428] sm:$0xff]
    %v2828 = vld [vmem:[#allocation3 + $0x430] sm:$0xff]
    %v2829 = vld [vmem:[#allocation3 + $0x438] sm:$0xff]
    %v2830 = vld [vmem:[#allocation3 + $0x440] sm:$0xf]
    %v2831 = vld [vmem:[#allocation3 + $0x444] sm:$0xff]
    %v2832 = vld [vmem:[#allocation3 + $0x44c] sm:$0xff]
    %v2833 = vld [vmem:[#allocation3 + $0x454] sm:$0xff]
    %v2834 = vld [vmem:[#allocation3 + $0x45c] sm:$0xf]
    %v2835 = vld [vmem:[#allocation3 + $0x460] sm:$0xff]
    %v2836 = vld [vmem:[#allocation3 + $0x468] sm:$0xff]
    %v2837 = vld [vmem:[#allocation3 + $0x470] sm:$0xff]
    %v2838 = vld [vmem:[#allocation3 + $0x478] sm:$0xf]
    %v2839 = vld [vmem:[#allocation3 + $0x47c] sm:$0xff]
    %v2840 = vld [vmem:[#allocation3 + $0x484] sm:$0xff]
    %v2841 = vld [vmem:[#allocation3 + $0x48c] sm:$0xff]
    %v2842 = vld [vmem:[#allocation3 + $0x494] sm:$0xf]
    %v2843 = vld [vmem:[#allocation3 + $0x498] sm:$0xff]
    %v2844 = vld [vmem:[#allocation3 + $0x4a0] sm:$0xff]
    %v2845 = vld [vmem:[#allocation3 + $0x4a8] sm:$0xff]
    %v2846 = vld [vmem:[#allocation3 + $0x4b0] sm:$0xf]
    %v2847 = vld [vmem:[#allocation3 + $0x4b4] sm:$0xff]
    %v2848 = vld [vmem:[#allocation3 + $0x4bc] sm:$0xff]
    %v2849 = vld [vmem:[#allocation3 + $0x4c4] sm:$0xff]
    %v2850 = vld [vmem:[#allocation3 + $0x4cc] sm:$0xf]
    %v2851 = vld [vmem:[#allocation3 + $0x4d0] sm:$0xff]
    %v2852 = vld [vmem:[#allocation3 + $0x4d8] sm:$0xff]
    %v2853 = vld [vmem:[#allocation3 + $0x4e0] sm:$0xff]
    %v2854 = vld [vmem:[#allocation3 + $0x4e8] sm:$0xf]
    %v2855 = vld [vmem:[#allocation3 + $0x4ec] sm:$0xff]
    %v2856 = vld [vmem:[#allocation3 + $0x4f4] sm:$0xff]
    %v2857 = vld [vmem:[#allocation3 + $0x4fc] sm:$0xff]
    %v2858 = vld [vmem:[#allocation3 + $0x504] sm:$0xf]
    %v2859 = vld [vmem:[#allocation3 + $0x508] sm:$0xff]
    %v2860 = vld [vmem:[#allocation3 + $0x510] sm:$0xff]
    %v2861 = vld [vmem:[#allocation3 + $0x518] sm:$0xff]
    %v2862 = vld [vmem:[#allocation3 + $0x520] sm:$0xf]
    %v2863 = vld [vmem:[#allocation3 + $0x524] sm:$0xff]
    %v2864 = vld [vmem:[#allocation3 + $0x52c] sm:$0xff]
    %v2865 = vld [vmem:[#allocation3 + $0x534] sm:$0xff]
    %v2866 = vld [vmem:[#allocation3 + $0x53c] sm:$0xf]
    %v2867 = vld [vmem:[#allocation3 + $0x540] sm:$0xff]
    %v2868 = vld [vmem:[#allocation3 + $0x548] sm:$0xff]
    %v2869 = vld [vmem:[#allocation3 + $0x550] sm:$0xff]
    %v2870 = vld [vmem:[#allocation3 + $0x558] sm:$0xf]
    %v2871 = vld [vmem:[#allocation3 + $0x55c] sm:$0xff]
    %v2872 = vld [vmem:[#allocation3 + $0x564] sm:$0xff]
    %v2873 = vld [vmem:[#allocation3 + $0x56c] sm:$0xff]
    %v2874 = vld [vmem:[#allocation3 + $0x574] sm:$0xf]
    %v2875 = vld [vmem:[#allocation3 + $0x578] sm:$0xff]
    %v2876 = vld [vmem:[#allocation3 + $0x580] sm:$0xff]
    %v2877 = vld [vmem:[#allocation3 + $0x588] sm:$0xff]
    %v2878 = vld [vmem:[#allocation3 + $0x590] sm:$0xf]
    %v2879 = vld [vmem:[#allocation3 + $0x594] sm:$0xff]
    %v2880 = vld [vmem:[#allocation3 + $0x59c] sm:$0xff]
    %v2881 = vld [vmem:[#allocation3 + $0x5a4] sm:$0xff]
    %v2882 = vld [vmem:[#allocation3 + $0x5ac] sm:$0xf]
    %v2883 = vld [vmem:[#allocation3 + $0x5b0] sm:$0xff]
    %v2884 = vld [vmem:[#allocation3 + $0x5b8] sm:$0xff]
    %v2885 = vld [vmem:[#allocation3 + $0x5c0] sm:$0xff]
    %v2886 = vld [vmem:[#allocation3 + $0x5c8] sm:$0xf]
    %v2887 = vld [vmem:[#allocation3 + $0x5cc] sm:$0xff]
    %v2888 = vld [vmem:[#allocation3 + $0x5d4] sm:$0xff]
    %v2889 = vld [vmem:[#allocation3 + $0x5dc] sm:$0xff]
    %v2890 = vld [vmem:[#allocation3 + $0x5e4] sm:$0xf]
    %v2891 = vld [vmem:[#allocation3 + $0x5e8] sm:$0xff]
    %v2892 = vld [vmem:[#allocation3 + $0x5f0] sm:$0xff]
    %v2893 = vld [vmem:[#allocation3 + $0x5f8] sm:$0xff]
    %v2894 = vld [vmem:[#allocation3 + $0x600] sm:$0xf]
    %v2895 = vld [vmem:[#allocation3 + $0x604] sm:$0xff]
    %v2896 = vld [vmem:[#allocation3 + $0x60c] sm:$0xff]
    %v2897 = vld [vmem:[#allocation3 + $0x614] sm:$0xff]
    %v2898 = vld [vmem:[#allocation3 + $0x61c] sm:$0xf]
    %v2899 = vld [vmem:[#allocation3 + $0x620] sm:$0xff]
    %v2900 = vld [vmem:[#allocation3 + $0x628] sm:$0xff]
    %v2901 = vld [vmem:[#allocation3 + $0x630] sm:$0xff]
    %v2902 = vld [vmem:[#allocation3 + $0x638] sm:$0xf]
    %v2903 = vld [vmem:[#allocation3 + $0x63c] sm:$0xff]
    %v2904 = vld [vmem:[#allocation3 + $0x644] sm:$0xff]
    %v2905 = vld [vmem:[#allocation3 + $0x64c] sm:$0xff]
    %v2906 = vld [vmem:[#allocation3 + $0x654] sm:$0xf]
    %v2907 = vld [vmem:[#allocation3 + $0x658] sm:$0xff]
    %v2908 = vld [vmem:[#allocation3 + $0x660] sm:$0xff]
    %v2909 = vld [vmem:[#allocation3 + $0x668] sm:$0xff]
    %v2910 = vld [vmem:[#allocation3 + $0x670] sm:$0xf]
    %v2911 = vld [vmem:[#allocation3 + $0x674] sm:$0xff]
    %v2912 = vld [vmem:[#allocation3 + $0x67c] sm:$0xff]
    %v2913 = vld [vmem:[#allocation3 + $0x684] sm:$0xff]
    %v2914 = vld [vmem:[#allocation3 + $0x68c] sm:$0xf]
    %v2915 = vld [vmem:[#allocation3 + $0x690] sm:$0xff]
    %v2916 = vld [vmem:[#allocation3 + $0x698] sm:$0xff]
    %v2917 = vld [vmem:[#allocation3 + $0x6a0] sm:$0xff]
    %v2918 = vld [vmem:[#allocation3 + $0x6a8] sm:$0xf]
    %v2919 = vld [vmem:[#allocation3 + $0x6ac] sm:$0xff]
    %v2920 = vld [vmem:[#allocation3 + $0x6b4] sm:$0xff]
    %v2921 = vld [vmem:[#allocation3 + $0x6bc] sm:$0xff]
    %v2922 = vld [vmem:[#allocation3 + $0x6c4] sm:$0xf]
    %v2923 = vld [vmem:[#allocation3 + $0x6c8] sm:$0xff]
    %v2924 = vld [vmem:[#allocation3 + $0x6d0] sm:$0xff]
    %v2925 = vld [vmem:[#allocation3 + $0x6d8] sm:$0xff]
    %v2926 = vld [vmem:[#allocation3 + $0x6e0] sm:$0xf]
    %v2927 = vld [vmem:[#allocation3 + $0x6e4] sm:$0xff]
    %v2928 = vld [vmem:[#allocation3 + $0x6ec] sm:$0xff]
    %v2929 = vld [vmem:[#allocation3 + $0x6f4] sm:$0xff]
    %v2930 = vld [vmem:[#allocation3 + $0x6fc] sm:$0xf]
    %v2931 = vld [vmem:[#allocation3 + $0x700] sm:$0xff]
    %v2932 = vld [vmem:[#allocation3 + $0x708] sm:$0xff]
    %v2933 = vld [vmem:[#allocation3 + $0x710] sm:$0xff]
    %v2934 = vld [vmem:[#allocation3 + $0x718] sm:$0xf]
    %v2935 = vld [vmem:[#allocation3 + $0x71c] sm:$0xff]
    %v2936 = vld [vmem:[#allocation3 + $0x724] sm:$0xff]
    %v2937 = vld [vmem:[#allocation3 + $0x72c] sm:$0xff]
    %v2938 = vld [vmem:[#allocation3 + $0x734] sm:$0xf]
    %v2939 = vld [vmem:[#allocation3 + $0x738] sm:$0xff]
    %v2940 = vld [vmem:[#allocation3 + $0x740] sm:$0xff]
    %v2941 = vld [vmem:[#allocation3 + $0x748] sm:$0xff]
    %v2942 = vld [vmem:[#allocation3 + $0x750] sm:$0xf]
    %v2943 = vld [vmem:[#allocation3 + $0x754] sm:$0xff]
    %v2944 = vld [vmem:[#allocation3 + $0x75c] sm:$0xff]
    %v2945 = vld [vmem:[#allocation3 + $0x764] sm:$0xff]
    %v2946 = vld [vmem:[#allocation3 + $0x76c] sm:$0xf]
    %v2947 = vld [vmem:[#allocation3 + $0x770] sm:$0xff]
    %v2948 = vld [vmem:[#allocation3 + $0x778] sm:$0xff]
    %v2949 = vld [vmem:[#allocation3 + $0x780] sm:$0xff]
    %v2950 = vld [vmem:[#allocation3 + $0x788] sm:$0xf]
    %v2951 = vld [vmem:[#allocation3 + $0x78c] sm:$0xff]
    %v2952 = vld [vmem:[#allocation3 + $0x794] sm:$0xff]
    %v2953 = vld [vmem:[#allocation3 + $0x79c] sm:$0xff]
    %v2954 = vld [vmem:[#allocation3 + $0x7a4] sm:$0xf]
    %v2955 = vld [vmem:[#allocation3 + $0x7a8] sm:$0xff]
    %v2956 = vld [vmem:[#allocation3 + $0x7b0] sm:$0xff]
    %v2957 = vld [vmem:[#allocation3 + $0x7b8] sm:$0xff]
    %v2958 = vld [vmem:[#allocation3 + $0x7c0] sm:$0xf]
    %v2959 = vld [vmem:[#allocation3 + $0x7c4] sm:$0xff]
    %v2960 = vld [vmem:[#allocation3 + $0x7cc] sm:$0xff]
    %v2961 = vld [vmem:[#allocation3 + $0x7d4] sm:$0xff]
    %v2962 = vld [vmem:[#allocation3 + $0x7dc] sm:$0xf]
    %v2963 = vld [vmem:[#allocation3 + $0x7e0] sm:$0xff]
    %v2964 = vld [vmem:[#allocation3 + $0x7e8] sm:$0xff]
    %v2965 = vld [vmem:[#allocation3 + $0x7f0] sm:$0xff]
    %v2966 = vld [vmem:[#allocation3 + $0x7f8] sm:$0xf]
    %v2967 = vld [vmem:[#allocation3 + $0x7fc] sm:$0xff]
    %v2968 = vld [vmem:[#allocation3 + $0x804] sm:$0xff]
    %v2969 = vld [vmem:[#allocation3 + $0x80c] sm:$0xff]
    %v2970 = vld [vmem:[#allocation3 + $0x814] sm:$0xf]
    %v2971 = vld [vmem:[#allocation3 + $0x818] sm:$0xff]
    %v2972 = vld [vmem:[#allocation3 + $0x820] sm:$0xff]
    %v2973 = vld [vmem:[#allocation3 + $0x828] sm:$0xff]
    %v2974 = vld [vmem:[#allocation3 + $0x830] sm:$0xf]
    %v2975 = vld [vmem:[#allocation3 + $0x834] sm:$0xff]
    %v2976 = vld [vmem:[#allocation3 + $0x83c] sm:$0xff]
    %v2977 = vld [vmem:[#allocation3 + $0x844] sm:$0xff]
    %v2978 = vld [vmem:[#allocation3 + $0x84c] sm:$0xf]
    %v2979 = vld [vmem:[#allocation3 + $0x850] sm:$0xff]
    %v2980 = vld [vmem:[#allocation3 + $0x858] sm:$0xff]
    %v2981 = vld [vmem:[#allocation3 + $0x860] sm:$0xff]
    %v2982 = vld [vmem:[#allocation3 + $0x868] sm:$0xf]
    %v2983 = vld [vmem:[#allocation3 + $0x86c] sm:$0xff]
    %v2984 = vld [vmem:[#allocation3 + $0x874] sm:$0xff]
    %v2985 = vld [vmem:[#allocation3 + $0x87c] sm:$0xff]
    %v2986 = vld [vmem:[#allocation3 + $0x884] sm:$0xf]
    %v2987 = vld [vmem:[#allocation3 + $0x888] sm:$0xff]
    %v2988 = vld [vmem:[#allocation3 + $0x890] sm:$0xff]
    %v2989 = vld [vmem:[#allocation3 + $0x898] sm:$0xff]
    %v2990 = vld [vmem:[#allocation3 + $0x8a0] sm:$0xf]
    %v2991 = vld [vmem:[#allocation3 + $0x8a4] sm:$0xff]
    %v2992 = vld [vmem:[#allocation3 + $0x8ac] sm:$0xff]
    %v2993 = vld [vmem:[#allocation3 + $0x8b4] sm:$0xff]
    %v2994 = vld [vmem:[#allocation3 + $0x8bc] sm:$0xf]
    %v2995 = vld [vmem:[#allocation3 + $0x8c0] sm:$0xff]
    %v2996 = vld [vmem:[#allocation3 + $0x8c8] sm:$0xff]
    %v2997 = vld [vmem:[#allocation3 + $0x8d0] sm:$0xff]
    %v2998 = vld [vmem:[#allocation3 + $0x8d8] sm:$0xf]
    %v2999 = vld [vmem:[#allocation3 + $0x8dc] sm:$0xff]
    %v3000 = vld [vmem:[#allocation3 + $0x8e4] sm:$0xff]
    %v3001 = vld [vmem:[#allocation3 + $0x8ec] sm:$0xff]
    %v3002 = vld [vmem:[#allocation3 + $0x8f4] sm:$0xf]
    %v3003 = vld [vmem:[#allocation3 + $0x8f8] sm:$0xff]
    %v3004 = vld [vmem:[#allocation3 + $0x900] sm:$0xff]
    %v3005 = vld [vmem:[#allocation3 + $0x908] sm:$0xff]
    %v3006 = vld [vmem:[#allocation3 + $0x910] sm:$0xf]
    %v3007 = vld [vmem:[#allocation3 + $0x914] sm:$0xff]
    %v3008 = vld [vmem:[#allocation3 + $0x91c] sm:$0xff]
    %v3009 = vld [vmem:[#allocation3 + $0x924] sm:$0xff]
    %v3010 = vld [vmem:[#allocation3 + $0x92c] sm:$0xf]
    %v3011 = vld [vmem:[#allocation3 + $0x930] sm:$0xff]
    %v3012 = vld [vmem:[#allocation3 + $0x938] sm:$0xff]
    %v3013 = vld [vmem:[#allocation3 + $0x940] sm:$0xff]
    %v3014 = vld [vmem:[#allocation3 + $0x948] sm:$0xf]
    %v3015 = vld [vmem:[#allocation3 + $0x94c] sm:$0xff]
    %v3016 = vld [vmem:[#allocation3 + $0x954] sm:$0xff]
    %v3017 = vld [vmem:[#allocation3 + $0x95c] sm:$0xff]
    %v3018 = vld [vmem:[#allocation3 + $0x964] sm:$0xf]
    %v3019 = vld [vmem:[#allocation3 + $0x968] sm:$0xff]
    %v3020 = vld [vmem:[#allocation3 + $0x970] sm:$0xff]
    %v3021 = vld [vmem:[#allocation3 + $0x978] sm:$0xff]
    %v3022 = vld [vmem:[#allocation3 + $0x980] sm:$0xf]
    %v3023 = vld [vmem:[#allocation3 + $0x984] sm:$0xff]
    %v3024 = vld [vmem:[#allocation3 + $0x98c] sm:$0xff]
    %v3025 = vld [vmem:[#allocation3 + $0x994] sm:$0xff]
    %v3026 = vld [vmem:[#allocation3 + $0x99c] sm:$0xf]
    %v3027 = vld [vmem:[#allocation3 + $0x9a0] sm:$0xff]
    %v3028 = vld [vmem:[#allocation3 + $0x9a8] sm:$0xff]
    %v3029 = vld [vmem:[#allocation3 + $0x9b0] sm:$0xff]
    %v3030 = vld [vmem:[#allocation3 + $0x9b8] sm:$0xf]
    %v3031 = vld [vmem:[#allocation3 + $0x9bc] sm:$0xff]
    %v3032 = vld [vmem:[#allocation3 + $0x9c4] sm:$0xff]
    %v3033 = vld [vmem:[#allocation3 + $0x9cc] sm:$0xff]
    %v3034 = vld [vmem:[#allocation3 + $0x9d4] sm:$0xf]
    %v3035 = vld [vmem:[#allocation3 + $0x9d8] sm:$0xff]
    %v3036 = vld [vmem:[#allocation3 + $0x9e0] sm:$0xff]
    %v3037 = vld [vmem:[#allocation3 + $0x9e8] sm:$0xff]
    %v3038 = vld [vmem:[#allocation3 + $0x9f0] sm:$0xf]
    %v3039 = vld [vmem:[#allocation3 + $0x9f4] sm:$0xff]
    %v3040 = vld [vmem:[#allocation3 + $0x9fc] sm:$0xff]
    %v3041 = vld [vmem:[#allocation3 + $0xa04] sm:$0xff]
    %v3042 = vld [vmem:[#allocation3 + $0xa0c] sm:$0xf]
    %v3043 = vld [vmem:[#allocation3 + $0xa10] sm:$0xff]
    %v3044 = vld [vmem:[#allocation3 + $0xa18] sm:$0xff]
    %v3045 = vld [vmem:[#allocation3 + $0xa20] sm:$0xff]
    %v3046 = vld [vmem:[#allocation3 + $0xa28] sm:$0xf]
    %v3047 = vld [vmem:[#allocation3 + $0xa2c] sm:$0xff]
    %v3048 = vld [vmem:[#allocation3 + $0xa34] sm:$0xff]
    %v3049 = vld [vmem:[#allocation3 + $0xa3c] sm:$0xff]
    %v3050 = vld [vmem:[#allocation3 + $0xa44] sm:$0xf]
    %v3051 = vld [vmem:[#allocation3 + $0xa48] sm:$0xff]
    %v3052 = vld [vmem:[#allocation3 + $0xa50] sm:$0xff]
    %v3053 = vld [vmem:[#allocation3 + $0xa58] sm:$0xff]
    %v3054 = vld [vmem:[#allocation3 + $0xa60] sm:$0xf]
    %v3055 = vld [vmem:[#allocation3 + $0xa64] sm:$0xff]
    %v3056 = vld [vmem:[#allocation3 + $0xa6c] sm:$0xff]
    %v3057 = vld [vmem:[#allocation3 + $0xa74] sm:$0xff]
    %v3058 = vld [vmem:[#allocation3 + $0xa7c] sm:$0xf]
    %v3059 = vld [vmem:[#allocation3 + $0xa80] sm:$0xff]
    %v3060 = vld [vmem:[#allocation3 + $0xa88] sm:$0xff]
    %v3061 = vld [vmem:[#allocation3 + $0xa90] sm:$0xff]
    %v3062 = vld [vmem:[#allocation3 + $0xa98] sm:$0xf]
    %v3063 = vld [vmem:[#allocation3 + $0xa9c] sm:$0xff]
    %v3064 = vld [vmem:[#allocation3 + $0xaa4] sm:$0xff]
    %v3065 = vld [vmem:[#allocation3 + $0xaac] sm:$0xff]
    %v3066 = vld [vmem:[#allocation3 + $0xab4] sm:$0xf]
    %v3067 = vld [vmem:[#allocation3 + $0xab8] sm:$0xff]
    %v3068 = vld [vmem:[#allocation3 + $0xac0] sm:$0xff]
    %v3069 = vld [vmem:[#allocation3 + $0xac8] sm:$0xff]
    %v3070 = vld [vmem:[#allocation3 + $0xad0] sm:$0xf]
    %v3071 = vld [vmem:[#allocation3 + $0xad4] sm:$0xff]
    %v3072 = vld [vmem:[#allocation3 + $0xadc] sm:$0xff]
    %v3073 = vld [vmem:[#allocation3 + $0xae4] sm:$0xff]
    %v3074 = vld [vmem:[#allocation3 + $0xaec] sm:$0xf]
    %v3075 = vld [vmem:[#allocation3 + $0xaf0] sm:$0xff]
    %v3076 = vld [vmem:[#allocation3 + $0xaf8] sm:$0xff]
    %v3077 = vld [vmem:[#allocation3 + $0xb00] sm:$0xff]
    %v3078 = vld [vmem:[#allocation3 + $0xb08] sm:$0xf]
    %v3079 = vld [vmem:[#allocation3 + $0xb0c] sm:$0xff]
    %v3080 = vld [vmem:[#allocation3 + $0xb14] sm:$0xff]
    %v3081 = vld [vmem:[#allocation3 + $0xb1c] sm:$0xff]
    %v3082 = vld [vmem:[#allocation3 + $0xb24] sm:$0xf]
    %v3083 = vld [vmem:[#allocation3 + $0xb28] sm:$0xff]
    %v3084 = vld [vmem:[#allocation3 + $0xb30] sm:$0xff]
    %v3085 = vld [vmem:[#allocation3 + $0xb38] sm:$0xff]
    %v3086 = vld [vmem:[#allocation3 + $0xb40] sm:$0xf]
    %v3087 = vld [vmem:[#allocation3 + $0xb44] sm:$0xff]
    %v3088 = vld [vmem:[#allocation3 + $0xb4c] sm:$0xff]
    %v3089 = vld [vmem:[#allocation3 + $0xb54] sm:$0xff]
    %v3090 = vld [vmem:[#allocation3 + $0xb5c] sm:$0xf]
    %v3091 = vld [vmem:[#allocation3 + $0xb60] sm:$0xff]
    %v3092 = vld [vmem:[#allocation3 + $0xb68] sm:$0xff]
    %v3093 = vld [vmem:[#allocation3 + $0xb70] sm:$0xff]
    %v3094 = vld [vmem:[#allocation3 + $0xb78] sm:$0xf]
    %v3095 = vld [vmem:[#allocation3 + $0xb7c] sm:$0xff]
    %v3096 = vld [vmem:[#allocation3 + $0xb84] sm:$0xff]
    %v3097 = vld [vmem:[#allocation3 + $0xb8c] sm:$0xff]
    %v3098 = vld [vmem:[#allocation3 + $0xb94] sm:$0xf]
    %v3099 = vld [vmem:[#allocation3 + $0xb98] sm:$0xff]
    %v3100 = vld [vmem:[#allocation3 + $0xba0] sm:$0xff]
    %v3101 = vld [vmem:[#allocation3 + $0xba8] sm:$0xff]
    %v3102 = vld [vmem:[#allocation3 + $0xbb0] sm:$0xf]
    %v3103 = vld [vmem:[#allocation3 + $0xbb4] sm:$0xff]
    %v3104 = vld [vmem:[#allocation3 + $0xbbc] sm:$0xff]
    %v3105 = vld [vmem:[#allocation3 + $0xbc4] sm:$0xff]
    %v3106 = vld [vmem:[#allocation3 + $0xbcc] sm:$0xf]
    %v3107 = vld [vmem:[#allocation3 + $0xbd0] sm:$0xff]
    %v3108 = vld [vmem:[#allocation3 + $0xbd8] sm:$0xff]
    %v3109 = vld [vmem:[#allocation3 + $0xbe0] sm:$0xff]
    %v3110 = vld [vmem:[#allocation3 + $0xbe8] sm:$0xf]
    %v3111 = vld [vmem:[#allocation3 + $0xbec] sm:$0xff]
    %v3112 = vld [vmem:[#allocation3 + $0xbf4] sm:$0xff]
    %v3113 = vld [vmem:[#allocation3 + $0xbfc] sm:$0xff]
    %v3114 = vld [vmem:[#allocation3 + $0xc04] sm:$0xf]
    %v3115 = vld [vmem:[#allocation3 + $0xc08] sm:$0xff]
    %v3116 = vld [vmem:[#allocation3 + $0xc10] sm:$0xff]
    %v3117 = vld [vmem:[#allocation3 + $0xc18] sm:$0xff]
    %v3118 = vld [vmem:[#allocation3 + $0xc20] sm:$0xf]
    %v3119 = vld [vmem:[#allocation3 + $0xc24] sm:$0xff]
    %v3120 = vld [vmem:[#allocation3 + $0xc2c] sm:$0xff]
    %v3121 = vld [vmem:[#allocation3 + $0xc34] sm:$0xff]
    %v3122 = vld [vmem:[#allocation3 + $0xc3c] sm:$0xf]
    %v3123 = vld [vmem:[#allocation3 + $0xc40] sm:$0xff]
    %v3124 = vld [vmem:[#allocation3 + $0xc48] sm:$0xff]
    %v3125 = vld [vmem:[#allocation3 + $0xc50] sm:$0xff]
    %v3126 = vld [vmem:[#allocation3 + $0xc58] sm:$0xf]
    %v3127 = vld [vmem:[#allocation3 + $0xc5c] sm:$0xff]
    %v3128 = vld [vmem:[#allocation3 + $0xc64] sm:$0xff]
    %v3129 = vld [vmem:[#allocation3 + $0xc6c] sm:$0xff]
    %v3130 = vld [vmem:[#allocation3 + $0xc74] sm:$0xf]
    %v3131 = vld [vmem:[#allocation3 + $0xc78] sm:$0xff]
    %v3132 = vld [vmem:[#allocation3 + $0xc80] sm:$0xff]
    %v3133 = vld [vmem:[#allocation3 + $0xc88] sm:$0xff]
    %v3134 = vld [vmem:[#allocation3 + $0xc90] sm:$0xf]
    %v3135 = vld [vmem:[#allocation3 + $0xc94] sm:$0xff]
    %v3136 = vld [vmem:[#allocation3 + $0xc9c] sm:$0xff]
    %v3137 = vld [vmem:[#allocation3 + $0xca4] sm:$0xff]
    %v3138 = vld [vmem:[#allocation3 + $0xcac] sm:$0xf]
    %v3139 = vld [vmem:[#allocation3 + $0xcb0] sm:$0xff]
    %v3140 = vld [vmem:[#allocation3 + $0xcb8] sm:$0xff]
    %v3141 = vld [vmem:[#allocation3 + $0xcc0] sm:$0xff]
    %v3142 = vld [vmem:[#allocation3 + $0xcc8] sm:$0xf]
    %v3143 = vld [vmem:[#allocation3 + $0xccc] sm:$0xff]
    %v3144 = vld [vmem:[#allocation3 + $0xcd4] sm:$0xff]
    %v3145 = vld [vmem:[#allocation3 + $0xcdc] sm:$0xff]
    %v3146 = vld [vmem:[#allocation3 + $0xce4] sm:$0xf]
    %v3147 = vld [vmem:[#allocation3 + $0xce8] sm:$0xff]
    %v3148 = vld [vmem:[#allocation3 + $0xcf0] sm:$0xff]
    %v3149 = vld [vmem:[#allocation3 + $0xcf8] sm:$0xff]
    %v3150 = vld [vmem:[#allocation3 + $0xd00] sm:$0xf]
    %v3151 = vld [vmem:[#allocation3 + $0xd04] sm:$0xff]
    %v3152 = vld [vmem:[#allocation3 + $0xd0c] sm:$0xff]
    %v3153 = vld [vmem:[#allocation3 + $0xd14] sm:$0xff]
    %v3154 = vld [vmem:[#allocation3 + $0xd1c] sm:$0xf]
    %v3155 = vld [vmem:[#allocation3 + $0xd20] sm:$0xff]
    %v3156 = vld [vmem:[#allocation3 + $0xd28] sm:$0xff]
    %v3157 = vld [vmem:[#allocation3 + $0xd30] sm:$0xff]
    %v3158 = vld [vmem:[#allocation3 + $0xd38] sm:$0xf]
    %v3159 = vld [vmem:[#allocation3 + $0xd3c] sm:$0xff]
    %v3160 = vld [vmem:[#allocation3 + $0xd44] sm:$0xff]
    %v3161 = vld [vmem:[#allocation3 + $0xd4c] sm:$0xff]
    %v3162 = vld [vmem:[#allocation3 + $0xd54] sm:$0xf]
    %v3163 = vld [vmem:[#allocation3 + $0xd58] sm:$0xff]
    %v3164 = vld [vmem:[#allocation3 + $0xd60] sm:$0xff]
    %v3165 = vld [vmem:[#allocation3 + $0xd68] sm:$0xff]
    %v3166 = vld [vmem:[#allocation3 + $0xd70] sm:$0xf]
    %v3167 = vld [vmem:[#allocation3 + $0xd74] sm:$0xff]
    %v3168 = vld [vmem:[#allocation3 + $0xd7c] sm:$0xff]
    %v3169 = vld [vmem:[#allocation3 + $0xd84] sm:$0xff]
    %v3170 = vld [vmem:[#allocation3 + $0xd8c] sm:$0xf]
    %v3171 = vld [vmem:[#allocation3 + $0xd90] sm:$0xff]
    %v3172 = vld [vmem:[#allocation3 + $0xd98] sm:$0xff]
    %v3173 = vld [vmem:[#allocation3 + $0xda0] sm:$0xff]
    %v3174 = vld [vmem:[#allocation3 + $0xda8] sm:$0xf]
    %v3175 = vld [vmem:[#allocation3 + $0xdac] sm:$0xff]
    %v3176 = vld [vmem:[#allocation3 + $0xdb4] sm:$0xff]
    %v3177 = vld [vmem:[#allocation3 + $0xdbc] sm:$0xff]
    %v3178 = vld [vmem:[#allocation3 + $0xdc4] sm:$0xf]
    %v3179 = vld [vmem:[#allocation3 + $0xdc8] sm:$0xff]
    %v3180 = vld [vmem:[#allocation3 + $0xdd0] sm:$0xff]
    %v3181 = vld [vmem:[#allocation3 + $0xdd8] sm:$0xff]
    %v3182 = vld [vmem:[#allocation3 + $0xde0] sm:$0xf]
    %v3183 = vld [vmem:[#allocation3 + $0xde4] sm:$0xff]
    %v3184 = vld [vmem:[#allocation3 + $0xdec] sm:$0xff]
    %v3185 = vld [vmem:[#allocation3 + $0xdf4] sm:$0xff]
    %v3186 = vld [vmem:[#allocation3 + $0xdfc] sm:$0xf]
    %v3187 = vunpack.c.l.bf16 %v2675
    %v3188 = vunpack.c.h.bf16 %v2675
    %v3189 = vunpack.c.l.bf16 %v2676
    %v3190 = vunpack.c.h.bf16 %v2676
    %v3191 = vunpack.c.l.bf16 %v2677
    %v3192 = vunpack.c.h.bf16 %v2677
    %v3193 = vunpack.c.l.bf16 %v2678
    %v3194 = vunpack.c.l.bf16 %v2679
    %v3195 = vunpack.c.h.bf16 %v2679
    %v3196 = vunpack.c.l.bf16 %v2680
    %v3197 = vunpack.c.h.bf16 %v2680
    %v3198 = vunpack.c.l.bf16 %v2681
    %v3199 = vunpack.c.h.bf16 %v2681
    %v3200 = vunpack.c.l.bf16 %v2682
    %v3201 = vunpack.c.l.bf16 %v2683
    %v3202 = vunpack.c.h.bf16 %v2683
    %v3203 = vunpack.c.l.bf16 %v2684
    %v3204 = vunpack.c.h.bf16 %v2684
    %v3205 = vunpack.c.l.bf16 %v2685
    %v3206 = vunpack.c.h.bf16 %v2685
    %v3207 = vunpack.c.l.bf16 %v2686
    %v3208 = vunpack.c.l.bf16 %v2687
    %v3209 = vunpack.c.h.bf16 %v2687
    %v3210 = vunpack.c.l.bf16 %v2688
    %v3211 = vunpack.c.h.bf16 %v2688
    %v3212 = vunpack.c.l.bf16 %v2689
    %v3213 = vunpack.c.h.bf16 %v2689
    %v3214 = vunpack.c.l.bf16 %v2690
    %v3215 = vunpack.c.l.bf16 %v2691
    %v3216 = vunpack.c.h.bf16 %v2691
    %v3217 = vunpack.c.l.bf16 %v2692
    %v3218 = vunpack.c.h.bf16 %v2692
    %v3219 = vunpack.c.l.bf16 %v2693
    %v3220 = vunpack.c.h.bf16 %v2693
    %v3221 = vunpack.c.l.bf16 %v2694
    %v3222 = vunpack.c.l.bf16 %v2695
    %v3223 = vunpack.c.h.bf16 %v2695
    %v3224 = vunpack.c.l.bf16 %v2696
    %v3225 = vunpack.c.h.bf16 %v2696
    %v3226 = vunpack.c.l.bf16 %v2697
    %v3227 = vunpack.c.h.bf16 %v2697
    %v3228 = vunpack.c.l.bf16 %v2698
    %v3229 = vunpack.c.l.bf16 %v2699
    %v3230 = vunpack.c.h.bf16 %v2699
    %v3231 = vunpack.c.l.bf16 %v2700
    %v3232 = vunpack.c.h.bf16 %v2700
    %v3233 = vunpack.c.l.bf16 %v2701
    %v3234 = vunpack.c.h.bf16 %v2701
    %v3235 = vunpack.c.l.bf16 %v2702
    %v3236 = vunpack.c.l.bf16 %v2703
    %v3237 = vunpack.c.h.bf16 %v2703
    %v3238 = vunpack.c.l.bf16 %v2704
    %v3239 = vunpack.c.h.bf16 %v2704
    %v3240 = vunpack.c.l.bf16 %v2705
    %v3241 = vunpack.c.h.bf16 %v2705
    %v3242 = vunpack.c.l.bf16 %v2706
    %v3243 = vunpack.c.l.bf16 %v2707
    %v3244 = vunpack.c.h.bf16 %v2707
    %v3245 = vunpack.c.l.bf16 %v2708
    %v3246 = vunpack.c.h.bf16 %v2708
    %v3247 = vunpack.c.l.bf16 %v2709
    %v3248 = vunpack.c.h.bf16 %v2709
    %v3249 = vunpack.c.l.bf16 %v2710
    %v3250 = vunpack.c.l.bf16 %v2711
    %v3251 = vunpack.c.h.bf16 %v2711
    %v3252 = vunpack.c.l.bf16 %v2712
    %v3253 = vunpack.c.h.bf16 %v2712
    %v3254 = vunpack.c.l.bf16 %v2713
    %v3255 = vunpack.c.h.bf16 %v2713
    %v3256 = vunpack.c.l.bf16 %v2714
    %v3257 = vunpack.c.l.bf16 %v2715
    %v3258 = vunpack.c.h.bf16 %v2715
    %v3259 = vunpack.c.l.bf16 %v2716
    %v3260 = vunpack.c.h.bf16 %v2716
    %v3261 = vunpack.c.l.bf16 %v2717
    %v3262 = vunpack.c.h.bf16 %v2717
    %v3263 = vunpack.c.l.bf16 %v2718
    %v3264 = vunpack.c.l.bf16 %v2719
    %v3265 = vunpack.c.h.bf16 %v2719
    %v3266 = vunpack.c.l.bf16 %v2720
    %v3267 = vunpack.c.h.bf16 %v2720
    %v3268 = vunpack.c.l.bf16 %v2721
    %v3269 = vunpack.c.h.bf16 %v2721
    %v3270 = vunpack.c.l.bf16 %v2722
    %v3271 = vunpack.c.l.bf16 %v2723
    %v3272 = vunpack.c.h.bf16 %v2723
    %v3273 = vunpack.c.l.bf16 %v2724
    %v3274 = vunpack.c.h.bf16 %v2724
    %v3275 = vunpack.c.l.bf16 %v2725
    %v3276 = vunpack.c.h.bf16 %v2725
    %v3277 = vunpack.c.l.bf16 %v2726
    %v3278 = vunpack.c.l.bf16 %v2727
    %v3279 = vunpack.c.h.bf16 %v2727
    %v3280 = vunpack.c.l.bf16 %v2728
    %v3281 = vunpack.c.h.bf16 %v2728
    %v3282 = vunpack.c.l.bf16 %v2729
    %v3283 = vunpack.c.h.bf16 %v2729
    %v3284 = vunpack.c.l.bf16 %v2730
    %v3285 = vunpack.c.l.bf16 %v2731
    %v3286 = vunpack.c.h.bf16 %v2731
    %v3287 = vunpack.c.l.bf16 %v2732
    %v3288 = vunpack.c.h.bf16 %v2732
    %v3289 = vunpack.c.l.bf16 %v2733
    %v3290 = vunpack.c.h.bf16 %v2733
    %v3291 = vunpack.c.l.bf16 %v2734
    %v3292 = vunpack.c.l.bf16 %v2735
    %v3293 = vunpack.c.h.bf16 %v2735
    %v3294 = vunpack.c.l.bf16 %v2736
    %v3295 = vunpack.c.h.bf16 %v2736
    %v3296 = vunpack.c.l.bf16 %v2737
    %v3297 = vunpack.c.h.bf16 %v2737
    %v3298 = vunpack.c.l.bf16 %v2738
    %v3299 = vunpack.c.l.bf16 %v2739
    %v3300 = vunpack.c.h.bf16 %v2739
    %v3301 = vunpack.c.l.bf16 %v2740
    %v3302 = vunpack.c.h.bf16 %v2740
    %v3303 = vunpack.c.l.bf16 %v2741
    %v3304 = vunpack.c.h.bf16 %v2741
    %v3305 = vunpack.c.l.bf16 %v2742
    %v3306 = vunpack.c.l.bf16 %v2743
    %v3307 = vunpack.c.h.bf16 %v2743
    %v3308 = vunpack.c.l.bf16 %v2744
    %v3309 = vunpack.c.h.bf16 %v2744
    %v3310 = vunpack.c.l.bf16 %v2745
    %v3311 = vunpack.c.h.bf16 %v2745
    %v3312 = vunpack.c.l.bf16 %v2746
    %v3313 = vunpack.c.l.bf16 %v2747
    %v3314 = vunpack.c.h.bf16 %v2747
    %v3315 = vunpack.c.l.bf16 %v2748
    %v3316 = vunpack.c.h.bf16 %v2748
    %v3317 = vunpack.c.l.bf16 %v2749
    %v3318 = vunpack.c.h.bf16 %v2749
    %v3319 = vunpack.c.l.bf16 %v2750
    %v3320 = vunpack.c.l.bf16 %v2751
    %v3321 = vunpack.c.h.bf16 %v2751
    %v3322 = vunpack.c.l.bf16 %v2752
    %v3323 = vunpack.c.h.bf16 %v2752
    %v3324 = vunpack.c.l.bf16 %v2753
    %v3325 = vunpack.c.h.bf16 %v2753
    %v3326 = vunpack.c.l.bf16 %v2754
    %v3327 = vunpack.c.l.bf16 %v2755
    %v3328 = vunpack.c.h.bf16 %v2755
    %v3329 = vunpack.c.l.bf16 %v2756
    %v3330 = vunpack.c.h.bf16 %v2756
    %v3331 = vunpack.c.l.bf16 %v2757
    %v3332 = vunpack.c.h.bf16 %v2757
    %v3333 = vunpack.c.l.bf16 %v2758
    %v3334 = vunpack.c.l.bf16 %v2759
    %v3335 = vunpack.c.h.bf16 %v2759
    %v3336 = vunpack.c.l.bf16 %v2760
    %v3337 = vunpack.c.h.bf16 %v2760
    %v3338 = vunpack.c.l.bf16 %v2761
    %v3339 = vunpack.c.h.bf16 %v2761
    %v3340 = vunpack.c.l.bf16 %v2762
    %v3341 = vunpack.c.l.bf16 %v2763
    %v3342 = vunpack.c.h.bf16 %v2763
    %v3343 = vunpack.c.l.bf16 %v2764
    %v3344 = vunpack.c.h.bf16 %v2764
    %v3345 = vunpack.c.l.bf16 %v2765
    %v3346 = vunpack.c.h.bf16 %v2765
    %v3347 = vunpack.c.l.bf16 %v2766
    %v3348 = vunpack.c.l.bf16 %v2767
    %v3349 = vunpack.c.h.bf16 %v2767
    %v3350 = vunpack.c.l.bf16 %v2768
    %v3351 = vunpack.c.h.bf16 %v2768
    %v3352 = vunpack.c.l.bf16 %v2769
    %v3353 = vunpack.c.h.bf16 %v2769
    %v3354 = vunpack.c.l.bf16 %v2770
    %v3355 = vunpack.c.l.bf16 %v2771
    %v3356 = vunpack.c.h.bf16 %v2771
    %v3357 = vunpack.c.l.bf16 %v2772
    %v3358 = vunpack.c.h.bf16 %v2772
    %v3359 = vunpack.c.l.bf16 %v2773
    %v3360 = vunpack.c.h.bf16 %v2773
    %v3361 = vunpack.c.l.bf16 %v2774
    %v3362 = vunpack.c.l.bf16 %v2775
    %v3363 = vunpack.c.h.bf16 %v2775
    %v3364 = vunpack.c.l.bf16 %v2776
    %v3365 = vunpack.c.h.bf16 %v2776
    %v3366 = vunpack.c.l.bf16 %v2777
    %v3367 = vunpack.c.h.bf16 %v2777
    %v3368 = vunpack.c.l.bf16 %v2778
    %v3369 = vunpack.c.l.bf16 %v2779
    %v3370 = vunpack.c.h.bf16 %v2779
    %v3371 = vunpack.c.l.bf16 %v2780
    %v3372 = vunpack.c.h.bf16 %v2780
    %v3373 = vunpack.c.l.bf16 %v2781
    %v3374 = vunpack.c.h.bf16 %v2781
    %v3375 = vunpack.c.l.bf16 %v2782
    %v3376 = vunpack.c.l.bf16 %v2783
    %v3377 = vunpack.c.h.bf16 %v2783
    %v3378 = vunpack.c.l.bf16 %v2784
    %v3379 = vunpack.c.h.bf16 %v2784
    %v3380 = vunpack.c.l.bf16 %v2785
    %v3381 = vunpack.c.h.bf16 %v2785
    %v3382 = vunpack.c.l.bf16 %v2786
    %v3383 = vunpack.c.l.bf16 %v2787
    %v3384 = vunpack.c.h.bf16 %v2787
    %v3385 = vunpack.c.l.bf16 %v2788
    %v3386 = vunpack.c.h.bf16 %v2788
    %v3387 = vunpack.c.l.bf16 %v2789
    %v3388 = vunpack.c.h.bf16 %v2789
    %v3389 = vunpack.c.l.bf16 %v2790
    %v3390 = vunpack.c.l.bf16 %v2791
    %v3391 = vunpack.c.h.bf16 %v2791
    %v3392 = vunpack.c.l.bf16 %v2792
    %v3393 = vunpack.c.h.bf16 %v2792
    %v3394 = vunpack.c.l.bf16 %v2793
    %v3395 = vunpack.c.h.bf16 %v2793
    %v3396 = vunpack.c.l.bf16 %v2794
    %v3397 = vunpack.c.l.bf16 %v2795
    %v3398 = vunpack.c.h.bf16 %v2795
    %v3399 = vunpack.c.l.bf16 %v2796
    %v3400 = vunpack.c.h.bf16 %v2796
    %v3401 = vunpack.c.l.bf16 %v2797
    %v3402 = vunpack.c.h.bf16 %v2797
    %v3403 = vunpack.c.l.bf16 %v2798
    %v3404 = vunpack.c.l.bf16 %v2799
    %v3405 = vunpack.c.h.bf16 %v2799
    %v3406 = vunpack.c.l.bf16 %v2800
    %v3407 = vunpack.c.h.bf16 %v2800
    %v3408 = vunpack.c.l.bf16 %v2801
    %v3409 = vunpack.c.h.bf16 %v2801
    %v3410 = vunpack.c.l.bf16 %v2802
    %v3411 = vunpack.c.l.bf16 %v2803
    %v3412 = vunpack.c.h.bf16 %v2803
    %v3413 = vunpack.c.l.bf16 %v2804
    %v3414 = vunpack.c.h.bf16 %v2804
    %v3415 = vunpack.c.l.bf16 %v2805
    %v3416 = vunpack.c.h.bf16 %v2805
    %v3417 = vunpack.c.l.bf16 %v2806
    %v3418 = vunpack.c.l.bf16 %v2807
    %v3419 = vunpack.c.h.bf16 %v2807
    %v3420 = vunpack.c.l.bf16 %v2808
    %v3421 = vunpack.c.h.bf16 %v2808
    %v3422 = vunpack.c.l.bf16 %v2809
    %v3423 = vunpack.c.h.bf16 %v2809
    %v3424 = vunpack.c.l.bf16 %v2810
    %v3425 = vunpack.c.l.bf16 %v2811
    %v3426 = vunpack.c.h.bf16 %v2811
    %v3427 = vunpack.c.l.bf16 %v2812
    %v3428 = vunpack.c.h.bf16 %v2812
    %v3429 = vunpack.c.l.bf16 %v2813
    %v3430 = vunpack.c.h.bf16 %v2813
    %v3431 = vunpack.c.l.bf16 %v2814
    %v3432 = vunpack.c.l.bf16 %v2815
    %v3433 = vunpack.c.h.bf16 %v2815
    %v3434 = vunpack.c.l.bf16 %v2816
    %v3435 = vunpack.c.h.bf16 %v2816
    %v3436 = vunpack.c.l.bf16 %v2817
    %v3437 = vunpack.c.h.bf16 %v2817
    %v3438 = vunpack.c.l.bf16 %v2818
    %v3439 = vunpack.c.l.bf16 %v2819
    %v3440 = vunpack.c.h.bf16 %v2819
    %v3441 = vunpack.c.l.bf16 %v2820
    %v3442 = vunpack.c.h.bf16 %v2820
    %v3443 = vunpack.c.l.bf16 %v2821
    %v3444 = vunpack.c.h.bf16 %v2821
    %v3445 = vunpack.c.l.bf16 %v2822
    %v3446 = vunpack.c.l.bf16 %v2823
    %v3447 = vunpack.c.h.bf16 %v2823
    %v3448 = vunpack.c.l.bf16 %v2824
    %v3449 = vunpack.c.h.bf16 %v2824
    %v3450 = vunpack.c.l.bf16 %v2825
    %v3451 = vunpack.c.h.bf16 %v2825
    %v3452 = vunpack.c.l.bf16 %v2826
    %v3453 = vunpack.c.l.bf16 %v2827
    %v3454 = vunpack.c.h.bf16 %v2827
    %v3455 = vunpack.c.l.bf16 %v2828
    %v3456 = vunpack.c.h.bf16 %v2828
    %v3457 = vunpack.c.l.bf16 %v2829
    %v3458 = vunpack.c.h.bf16 %v2829
    %v3459 = vunpack.c.l.bf16 %v2830
    %v3460 = vunpack.c.l.bf16 %v2831
    %v3461 = vunpack.c.h.bf16 %v2831
    %v3462 = vunpack.c.l.bf16 %v2832
    %v3463 = vunpack.c.h.bf16 %v2832
    %v3464 = vunpack.c.l.bf16 %v2833
    %v3465 = vunpack.c.h.bf16 %v2833
    %v3466 = vunpack.c.l.bf16 %v2834
    %v3467 = vunpack.c.l.bf16 %v2835
    %v3468 = vunpack.c.h.bf16 %v2835
    %v3469 = vunpack.c.l.bf16 %v2836
    %v3470 = vunpack.c.h.bf16 %v2836
    %v3471 = vunpack.c.l.bf16 %v2837
    %v3472 = vunpack.c.h.bf16 %v2837
    %v3473 = vunpack.c.l.bf16 %v2838
    %v3474 = vunpack.c.l.bf16 %v2839
    %v3475 = vunpack.c.h.bf16 %v2839
    %v3476 = vunpack.c.l.bf16 %v2840
    %v3477 = vunpack.c.h.bf16 %v2840
    %v3478 = vunpack.c.l.bf16 %v2841
    %v3479 = vunpack.c.h.bf16 %v2841
    %v3480 = vunpack.c.l.bf16 %v2842
    %v3481 = vunpack.c.l.bf16 %v2843
    %v3482 = vunpack.c.h.bf16 %v2843
    %v3483 = vunpack.c.l.bf16 %v2844
    %v3484 = vunpack.c.h.bf16 %v2844
    %v3485 = vunpack.c.l.bf16 %v2845
    %v3486 = vunpack.c.h.bf16 %v2845
    %v3487 = vunpack.c.l.bf16 %v2846
    %v3488 = vunpack.c.l.bf16 %v2847
    %v3489 = vunpack.c.h.bf16 %v2847
    %v3490 = vunpack.c.l.bf16 %v2848
    %v3491 = vunpack.c.h.bf16 %v2848
    %v3492 = vunpack.c.l.bf16 %v2849
    %v3493 = vunpack.c.h.bf16 %v2849
    %v3494 = vunpack.c.l.bf16 %v2850
    %v3495 = vunpack.c.l.bf16 %v2851
    %v3496 = vunpack.c.h.bf16 %v2851
    %v3497 = vunpack.c.l.bf16 %v2852
    %v3498 = vunpack.c.h.bf16 %v2852
    %v3499 = vunpack.c.l.bf16 %v2853
    %v3500 = vunpack.c.h.bf16 %v2853
    %v3501 = vunpack.c.l.bf16 %v2854
    %v3502 = vunpack.c.l.bf16 %v2855
    %v3503 = vunpack.c.h.bf16 %v2855
    %v3504 = vunpack.c.l.bf16 %v2856
    %v3505 = vunpack.c.h.bf16 %v2856
    %v3506 = vunpack.c.l.bf16 %v2857
    %v3507 = vunpack.c.h.bf16 %v2857
    %v3508 = vunpack.c.l.bf16 %v2858
    %v3509 = vunpack.c.l.bf16 %v2859
    %v3510 = vunpack.c.h.bf16 %v2859
    %v3511 = vunpack.c.l.bf16 %v2860
    %v3512 = vunpack.c.h.bf16 %v2860
    %v3513 = vunpack.c.l.bf16 %v2861
    %v3514 = vunpack.c.h.bf16 %v2861
    %v3515 = vunpack.c.l.bf16 %v2862
    %v3516 = vunpack.c.l.bf16 %v2863
    %v3517 = vunpack.c.h.bf16 %v2863
    %v3518 = vunpack.c.l.bf16 %v2864
    %v3519 = vunpack.c.h.bf16 %v2864
    %v3520 = vunpack.c.l.bf16 %v2865
    %v3521 = vunpack.c.h.bf16 %v2865
    %v3522 = vunpack.c.l.bf16 %v2866
    %v3523 = vunpack.c.l.bf16 %v2867
    %v3524 = vunpack.c.h.bf16 %v2867
    %v3525 = vunpack.c.l.bf16 %v2868
    %v3526 = vunpack.c.h.bf16 %v2868
    %v3527 = vunpack.c.l.bf16 %v2869
    %v3528 = vunpack.c.h.bf16 %v2869
    %v3529 = vunpack.c.l.bf16 %v2870
    %v3530 = vunpack.c.l.bf16 %v2871
    %v3531 = vunpack.c.h.bf16 %v2871
    %v3532 = vunpack.c.l.bf16 %v2872
    %v3533 = vunpack.c.h.bf16 %v2872
    %v3534 = vunpack.c.l.bf16 %v2873
    %v3535 = vunpack.c.h.bf16 %v2873
    %v3536 = vunpack.c.l.bf16 %v2874
    %v3537 = vunpack.c.l.bf16 %v2875
    %v3538 = vunpack.c.h.bf16 %v2875
    %v3539 = vunpack.c.l.bf16 %v2876
    %v3540 = vunpack.c.h.bf16 %v2876
    %v3541 = vunpack.c.l.bf16 %v2877
    %v3542 = vunpack.c.h.bf16 %v2877
    %v3543 = vunpack.c.l.bf16 %v2878
    %v3544 = vunpack.c.l.bf16 %v2879
    %v3545 = vunpack.c.h.bf16 %v2879
    %v3546 = vunpack.c.l.bf16 %v2880
    %v3547 = vunpack.c.h.bf16 %v2880
    %v3548 = vunpack.c.l.bf16 %v2881
    %v3549 = vunpack.c.h.bf16 %v2881
    %v3550 = vunpack.c.l.bf16 %v2882
    %v3551 = vunpack.c.l.bf16 %v2883
    %v3552 = vunpack.c.h.bf16 %v2883
    %v3553 = vunpack.c.l.bf16 %v2884
    %v3554 = vunpack.c.h.bf16 %v2884
    %v3555 = vunpack.c.l.bf16 %v2885
    %v3556 = vunpack.c.h.bf16 %v2885
    %v3557 = vunpack.c.l.bf16 %v2886
    %v3558 = vunpack.c.l.bf16 %v2887
    %v3559 = vunpack.c.h.bf16 %v2887
    %v3560 = vunpack.c.l.bf16 %v2888
    %v3561 = vunpack.c.h.bf16 %v2888
    %v3562 = vunpack.c.l.bf16 %v2889
    %v3563 = vunpack.c.h.bf16 %v2889
    %v3564 = vunpack.c.l.bf16 %v2890
    %v3565 = vunpack.c.l.bf16 %v2891
    %v3566 = vunpack.c.h.bf16 %v2891
    %v3567 = vunpack.c.l.bf16 %v2892
    %v3568 = vunpack.c.h.bf16 %v2892
    %v3569 = vunpack.c.l.bf16 %v2893
    %v3570 = vunpack.c.h.bf16 %v2893
    %v3571 = vunpack.c.l.bf16 %v2894
    %v3572 = vunpack.c.l.bf16 %v2895
    %v3573 = vunpack.c.h.bf16 %v2895
    %v3574 = vunpack.c.l.bf16 %v2896
    %v3575 = vunpack.c.h.bf16 %v2896
    %v3576 = vunpack.c.l.bf16 %v2897
    %v3577 = vunpack.c.h.bf16 %v2897
    %v3578 = vunpack.c.l.bf16 %v2898
    %v3579 = vunpack.c.l.bf16 %v2899
    %v3580 = vunpack.c.h.bf16 %v2899
    %v3581 = vunpack.c.l.bf16 %v2900
    %v3582 = vunpack.c.h.bf16 %v2900
    %v3583 = vunpack.c.l.bf16 %v2901
    %v3584 = vunpack.c.h.bf16 %v2901
    %v3585 = vunpack.c.l.bf16 %v2902
    %v3586 = vunpack.c.l.bf16 %v2903
    %v3587 = vunpack.c.h.bf16 %v2903
    %v3588 = vunpack.c.l.bf16 %v2904
    %v3589 = vunpack.c.h.bf16 %v2904
    %v3590 = vunpack.c.l.bf16 %v2905
    %v3591 = vunpack.c.h.bf16 %v2905
    %v3592 = vunpack.c.l.bf16 %v2906
    %v3593 = vunpack.c.l.bf16 %v2907
    %v3594 = vunpack.c.h.bf16 %v2907
    %v3595 = vunpack.c.l.bf16 %v2908
    %v3596 = vunpack.c.h.bf16 %v2908
    %v3597 = vunpack.c.l.bf16 %v2909
    %v3598 = vunpack.c.h.bf16 %v2909
    %v3599 = vunpack.c.l.bf16 %v2910
    %v3600 = vunpack.c.l.bf16 %v2911
    %v3601 = vunpack.c.h.bf16 %v2911
    %v3602 = vunpack.c.l.bf16 %v2912
    %v3603 = vunpack.c.h.bf16 %v2912
    %v3604 = vunpack.c.l.bf16 %v2913
    %v3605 = vunpack.c.h.bf16 %v2913
    %v3606 = vunpack.c.l.bf16 %v2914
    %v3607 = vunpack.c.l.bf16 %v2915
    %v3608 = vunpack.c.h.bf16 %v2915
    %v3609 = vunpack.c.l.bf16 %v2916
    %v3610 = vunpack.c.h.bf16 %v2916
    %v3611 = vunpack.c.l.bf16 %v2917
    %v3612 = vunpack.c.h.bf16 %v2917
    %v3613 = vunpack.c.l.bf16 %v2918
    %v3614 = vunpack.c.l.bf16 %v2919
    %v3615 = vunpack.c.h.bf16 %v2919
    %v3616 = vunpack.c.l.bf16 %v2920
    %v3617 = vunpack.c.h.bf16 %v2920
    %v3618 = vunpack.c.l.bf16 %v2921
    %v3619 = vunpack.c.h.bf16 %v2921
    %v3620 = vunpack.c.l.bf16 %v2922
    %v3621 = vunpack.c.l.bf16 %v2923
    %v3622 = vunpack.c.h.bf16 %v2923
    %v3623 = vunpack.c.l.bf16 %v2924
    %v3624 = vunpack.c.h.bf16 %v2924
    %v3625 = vunpack.c.l.bf16 %v2925
    %v3626 = vunpack.c.h.bf16 %v2925
    %v3627 = vunpack.c.l.bf16 %v2926
    %v3628 = vunpack.c.l.bf16 %v2927
    %v3629 = vunpack.c.h.bf16 %v2927
    %v3630 = vunpack.c.l.bf16 %v2928
    %v3631 = vunpack.c.h.bf16 %v2928
    %v3632 = vunpack.c.l.bf16 %v2929
    %v3633 = vunpack.c.h.bf16 %v2929
    %v3634 = vunpack.c.l.bf16 %v2930
    %v3635 = vunpack.c.l.bf16 %v2931
    %v3636 = vunpack.c.h.bf16 %v2931
    %v3637 = vunpack.c.l.bf16 %v2932
    %v3638 = vunpack.c.h.bf16 %v2932
    %v3639 = vunpack.c.l.bf16 %v2933
    %v3640 = vunpack.c.h.bf16 %v2933
    %v3641 = vunpack.c.l.bf16 %v2934
    %v3642 = vunpack.c.l.bf16 %v2935
    %v3643 = vunpack.c.h.bf16 %v2935
    %v3644 = vunpack.c.l.bf16 %v2936
    %v3645 = vunpack.c.h.bf16 %v2936
    %v3646 = vunpack.c.l.bf16 %v2937
    %v3647 = vunpack.c.h.bf16 %v2937
    %v3648 = vunpack.c.l.bf16 %v2938
    %v3649 = vunpack.c.l.bf16 %v2939
    %v3650 = vunpack.c.h.bf16 %v2939
    %v3651 = vunpack.c.l.bf16 %v2940
    %v3652 = vunpack.c.h.bf16 %v2940
    %v3653 = vunpack.c.l.bf16 %v2941
    %v3654 = vunpack.c.h.bf16 %v2941
    %v3655 = vunpack.c.l.bf16 %v2942
    %v3656 = vunpack.c.l.bf16 %v2943
    %v3657 = vunpack.c.h.bf16 %v2943
    %v3658 = vunpack.c.l.bf16 %v2944
    %v3659 = vunpack.c.h.bf16 %v2944
    %v3660 = vunpack.c.l.bf16 %v2945
    %v3661 = vunpack.c.h.bf16 %v2945
    %v3662 = vunpack.c.l.bf16 %v2946
    %v3663 = vunpack.c.l.bf16 %v2947
    %v3664 = vunpack.c.h.bf16 %v2947
    %v3665 = vunpack.c.l.bf16 %v2948
    %v3666 = vunpack.c.h.bf16 %v2948
    %v3667 = vunpack.c.l.bf16 %v2949
    %v3668 = vunpack.c.h.bf16 %v2949
    %v3669 = vunpack.c.l.bf16 %v2950
    %v3670 = vunpack.c.l.bf16 %v2951
    %v3671 = vunpack.c.h.bf16 %v2951
    %v3672 = vunpack.c.l.bf16 %v2952
    %v3673 = vunpack.c.h.bf16 %v2952
    %v3674 = vunpack.c.l.bf16 %v2953
    %v3675 = vunpack.c.h.bf16 %v2953
    %v3676 = vunpack.c.l.bf16 %v2954
    %v3677 = vunpack.c.l.bf16 %v2955
    %v3678 = vunpack.c.h.bf16 %v2955
    %v3679 = vunpack.c.l.bf16 %v2956
    %v3680 = vunpack.c.h.bf16 %v2956
    %v3681 = vunpack.c.l.bf16 %v2957
    %v3682 = vunpack.c.h.bf16 %v2957
    %v3683 = vunpack.c.l.bf16 %v2958
    %v3684 = vunpack.c.l.bf16 %v2959
    %v3685 = vunpack.c.h.bf16 %v2959
    %v3686 = vunpack.c.l.bf16 %v2960
    %v3687 = vunpack.c.h.bf16 %v2960
    %v3688 = vunpack.c.l.bf16 %v2961
    %v3689 = vunpack.c.h.bf16 %v2961
    %v3690 = vunpack.c.l.bf16 %v2962
    %v3691 = vunpack.c.l.bf16 %v2963
    %v3692 = vunpack.c.h.bf16 %v2963
    %v3693 = vunpack.c.l.bf16 %v2964
    %v3694 = vunpack.c.h.bf16 %v2964
    %v3695 = vunpack.c.l.bf16 %v2965
    %v3696 = vunpack.c.h.bf16 %v2965
    %v3697 = vunpack.c.l.bf16 %v2966
    %v3698 = vunpack.c.l.bf16 %v2967
    %v3699 = vunpack.c.h.bf16 %v2967
    %v3700 = vunpack.c.l.bf16 %v2968
    %v3701 = vunpack.c.h.bf16 %v2968
    %v3702 = vunpack.c.l.bf16 %v2969
    %v3703 = vunpack.c.h.bf16 %v2969
    %v3704 = vunpack.c.l.bf16 %v2970
    %v3705 = vunpack.c.l.bf16 %v2971
    %v3706 = vunpack.c.h.bf16 %v2971
    %v3707 = vunpack.c.l.bf16 %v2972
    %v3708 = vunpack.c.h.bf16 %v2972
    %v3709 = vunpack.c.l.bf16 %v2973
    %v3710 = vunpack.c.h.bf16 %v2973
    %v3711 = vunpack.c.l.bf16 %v2974
    %v3712 = vunpack.c.l.bf16 %v2975
    %v3713 = vunpack.c.h.bf16 %v2975
    %v3714 = vunpack.c.l.bf16 %v2976
    %v3715 = vunpack.c.h.bf16 %v2976
    %v3716 = vunpack.c.l.bf16 %v2977
    %v3717 = vunpack.c.h.bf16 %v2977
    %v3718 = vunpack.c.l.bf16 %v2978
    %v3719 = vunpack.c.l.bf16 %v2979
    %v3720 = vunpack.c.h.bf16 %v2979
    %v3721 = vunpack.c.l.bf16 %v2980
    %v3722 = vunpack.c.h.bf16 %v2980
    %v3723 = vunpack.c.l.bf16 %v2981
    %v3724 = vunpack.c.h.bf16 %v2981
    %v3725 = vunpack.c.l.bf16 %v2982
    %v3726 = vunpack.c.l.bf16 %v2983
    %v3727 = vunpack.c.h.bf16 %v2983
    %v3728 = vunpack.c.l.bf16 %v2984
    %v3729 = vunpack.c.h.bf16 %v2984
    %v3730 = vunpack.c.l.bf16 %v2985
    %v3731 = vunpack.c.h.bf16 %v2985
    %v3732 = vunpack.c.l.bf16 %v2986
    %v3733 = vunpack.c.l.bf16 %v2987
    %v3734 = vunpack.c.h.bf16 %v2987
    %v3735 = vunpack.c.l.bf16 %v2988
    %v3736 = vunpack.c.h.bf16 %v2988
    %v3737 = vunpack.c.l.bf16 %v2989
    %v3738 = vunpack.c.h.bf16 %v2989
    %v3739 = vunpack.c.l.bf16 %v2990
    %v3740 = vunpack.c.l.bf16 %v2991
    %v3741 = vunpack.c.h.bf16 %v2991
    %v3742 = vunpack.c.l.bf16 %v2992
    %v3743 = vunpack.c.h.bf16 %v2992
    %v3744 = vunpack.c.l.bf16 %v2993
    %v3745 = vunpack.c.h.bf16 %v2993
    %v3746 = vunpack.c.l.bf16 %v2994
    %v3747 = vunpack.c.l.bf16 %v2995
    %v3748 = vunpack.c.h.bf16 %v2995
    %v3749 = vunpack.c.l.bf16 %v2996
    %v3750 = vunpack.c.h.bf16 %v2996
    %v3751 = vunpack.c.l.bf16 %v2997
    %v3752 = vunpack.c.h.bf16 %v2997
    %v3753 = vunpack.c.l.bf16 %v2998
    %v3754 = vunpack.c.l.bf16 %v2999
    %v3755 = vunpack.c.h.bf16 %v2999
    %v3756 = vunpack.c.l.bf16 %v3000
    %v3757 = vunpack.c.h.bf16 %v3000
    %v3758 = vunpack.c.l.bf16 %v3001
    %v3759 = vunpack.c.h.bf16 %v3001
    %v3760 = vunpack.c.l.bf16 %v3002
    %v3761 = vunpack.c.l.bf16 %v3003
    %v3762 = vunpack.c.h.bf16 %v3003
    %v3763 = vunpack.c.l.bf16 %v3004
    %v3764 = vunpack.c.h.bf16 %v3004
    %v3765 = vunpack.c.l.bf16 %v3005
    %v3766 = vunpack.c.h.bf16 %v3005
    %v3767 = vunpack.c.l.bf16 %v3006
    %v3768 = vunpack.c.l.bf16 %v3007
    %v3769 = vunpack.c.h.bf16 %v3007
    %v3770 = vunpack.c.l.bf16 %v3008
    %v3771 = vunpack.c.h.bf16 %v3008
    %v3772 = vunpack.c.l.bf16 %v3009
    %v3773 = vunpack.c.h.bf16 %v3009
    %v3774 = vunpack.c.l.bf16 %v3010
    %v3775 = vunpack.c.l.bf16 %v3011
    %v3776 = vunpack.c.h.bf16 %v3011
    %v3777 = vunpack.c.l.bf16 %v3012
    %v3778 = vunpack.c.h.bf16 %v3012
    %v3779 = vunpack.c.l.bf16 %v3013
    %v3780 = vunpack.c.h.bf16 %v3013
    %v3781 = vunpack.c.l.bf16 %v3014
    %v3782 = vunpack.c.l.bf16 %v3015
    %v3783 = vunpack.c.h.bf16 %v3015
    %v3784 = vunpack.c.l.bf16 %v3016
    %v3785 = vunpack.c.h.bf16 %v3016
    %v3786 = vunpack.c.l.bf16 %v3017
    %v3787 = vunpack.c.h.bf16 %v3017
    %v3788 = vunpack.c.l.bf16 %v3018
    %v3789 = vunpack.c.l.bf16 %v3019
    %v3790 = vunpack.c.h.bf16 %v3019
    %v3791 = vunpack.c.l.bf16 %v3020
    %v3792 = vunpack.c.h.bf16 %v3020
    %v3793 = vunpack.c.l.bf16 %v3021
    %v3794 = vunpack.c.h.bf16 %v3021
    %v3795 = vunpack.c.l.bf16 %v3022
    %v3796 = vunpack.c.l.bf16 %v3023
    %v3797 = vunpack.c.h.bf16 %v3023
    %v3798 = vunpack.c.l.bf16 %v3024
    %v3799 = vunpack.c.h.bf16 %v3024
    %v3800 = vunpack.c.l.bf16 %v3025
    %v3801 = vunpack.c.h.bf16 %v3025
    %v3802 = vunpack.c.l.bf16 %v3026
    %v3803 = vunpack.c.l.bf16 %v3027
    %v3804 = vunpack.c.h.bf16 %v3027
    %v3805 = vunpack.c.l.bf16 %v3028
    %v3806 = vunpack.c.h.bf16 %v3028
    %v3807 = vunpack.c.l.bf16 %v3029
    %v3808 = vunpack.c.h.bf16 %v3029
    %v3809 = vunpack.c.l.bf16 %v3030
    %v3810 = vunpack.c.l.bf16 %v3031
    %v3811 = vunpack.c.h.bf16 %v3031
    %v3812 = vunpack.c.l.bf16 %v3032
    %v3813 = vunpack.c.h.bf16 %v3032
    %v3814 = vunpack.c.l.bf16 %v3033
    %v3815 = vunpack.c.h.bf16 %v3033
    %v3816 = vunpack.c.l.bf16 %v3034
    %v3817 = vunpack.c.l.bf16 %v3035
    %v3818 = vunpack.c.h.bf16 %v3035
    %v3819 = vunpack.c.l.bf16 %v3036
    %v3820 = vunpack.c.h.bf16 %v3036
    %v3821 = vunpack.c.l.bf16 %v3037
    %v3822 = vunpack.c.h.bf16 %v3037
    %v3823 = vunpack.c.l.bf16 %v3038
    %v3824 = vunpack.c.l.bf16 %v3039
    %v3825 = vunpack.c.h.bf16 %v3039
    %v3826 = vunpack.c.l.bf16 %v3040
    %v3827 = vunpack.c.h.bf16 %v3040
    %v3828 = vunpack.c.l.bf16 %v3041
    %v3829 = vunpack.c.h.bf16 %v3041
    %v3830 = vunpack.c.l.bf16 %v3042
    %v3831 = vunpack.c.l.bf16 %v3043
    %v3832 = vunpack.c.h.bf16 %v3043
    %v3833 = vunpack.c.l.bf16 %v3044
    %v3834 = vunpack.c.h.bf16 %v3044
    %v3835 = vunpack.c.l.bf16 %v3045
    %v3836 = vunpack.c.h.bf16 %v3045
    %v3837 = vunpack.c.l.bf16 %v3046
    %v3838 = vunpack.c.l.bf16 %v3047
    %v3839 = vunpack.c.h.bf16 %v3047
    %v3840 = vunpack.c.l.bf16 %v3048
    %v3841 = vunpack.c.h.bf16 %v3048
    %v3842 = vunpack.c.l.bf16 %v3049
    %v3843 = vunpack.c.h.bf16 %v3049
    %v3844 = vunpack.c.l.bf16 %v3050
    %v3845 = vunpack.c.l.bf16 %v3051
    %v3846 = vunpack.c.h.bf16 %v3051
    %v3847 = vunpack.c.l.bf16 %v3052
    %v3848 = vunpack.c.h.bf16 %v3052
    %v3849 = vunpack.c.l.bf16 %v3053
    %v3850 = vunpack.c.h.bf16 %v3053
    %v3851 = vunpack.c.l.bf16 %v3054
    %v3852 = vunpack.c.l.bf16 %v3055
    %v3853 = vunpack.c.h.bf16 %v3055
    %v3854 = vunpack.c.l.bf16 %v3056
    %v3855 = vunpack.c.h.bf16 %v3056
    %v3856 = vunpack.c.l.bf16 %v3057
    %v3857 = vunpack.c.h.bf16 %v3057
    %v3858 = vunpack.c.l.bf16 %v3058
    %v3859 = vunpack.c.l.bf16 %v3059
    %v3860 = vunpack.c.h.bf16 %v3059
    %v3861 = vunpack.c.l.bf16 %v3060
    %v3862 = vunpack.c.h.bf16 %v3060
    %v3863 = vunpack.c.l.bf16 %v3061
    %v3864 = vunpack.c.h.bf16 %v3061
    %v3865 = vunpack.c.l.bf16 %v3062
    %v3866 = vunpack.c.l.bf16 %v3063
    %v3867 = vunpack.c.h.bf16 %v3063
    %v3868 = vunpack.c.l.bf16 %v3064
    %v3869 = vunpack.c.h.bf16 %v3064
    %v3870 = vunpack.c.l.bf16 %v3065
    %v3871 = vunpack.c.h.bf16 %v3065
    %v3872 = vunpack.c.l.bf16 %v3066
    %v3873 = vunpack.c.l.bf16 %v3067
    %v3874 = vunpack.c.h.bf16 %v3067
    %v3875 = vunpack.c.l.bf16 %v3068
    %v3876 = vunpack.c.h.bf16 %v3068
    %v3877 = vunpack.c.l.bf16 %v3069
    %v3878 = vunpack.c.h.bf16 %v3069
    %v3879 = vunpack.c.l.bf16 %v3070
    %v3880 = vunpack.c.l.bf16 %v3071
    %v3881 = vunpack.c.h.bf16 %v3071
    %v3882 = vunpack.c.l.bf16 %v3072
    %v3883 = vunpack.c.h.bf16 %v3072
    %v3884 = vunpack.c.l.bf16 %v3073
    %v3885 = vunpack.c.h.bf16 %v3073
    %v3886 = vunpack.c.l.bf16 %v3074
    %v3887 = vunpack.c.l.bf16 %v3075
    %v3888 = vunpack.c.h.bf16 %v3075
    %v3889 = vunpack.c.l.bf16 %v3076
    %v3890 = vunpack.c.h.bf16 %v3076
    %v3891 = vunpack.c.l.bf16 %v3077
    %v3892 = vunpack.c.h.bf16 %v3077
    %v3893 = vunpack.c.l.bf16 %v3078
    %v3894 = vunpack.c.l.bf16 %v3079
    %v3895 = vunpack.c.h.bf16 %v3079
    %v3896 = vunpack.c.l.bf16 %v3080
    %v3897 = vunpack.c.h.bf16 %v3080
    %v3898 = vunpack.c.l.bf16 %v3081
    %v3899 = vunpack.c.h.bf16 %v3081
    %v3900 = vunpack.c.l.bf16 %v3082
    %v3901 = vunpack.c.l.bf16 %v3083
    %v3902 = vunpack.c.h.bf16 %v3083
    %v3903 = vunpack.c.l.bf16 %v3084
    %v3904 = vunpack.c.h.bf16 %v3084
    %v3905 = vunpack.c.l.bf16 %v3085
    %v3906 = vunpack.c.h.bf16 %v3085
    %v3907 = vunpack.c.l.bf16 %v3086
    %v3908 = vunpack.c.l.bf16 %v3087
    %v3909 = vunpack.c.h.bf16 %v3087
    %v3910 = vunpack.c.l.bf16 %v3088
    %v3911 = vunpack.c.h.bf16 %v3088
    %v3912 = vunpack.c.l.bf16 %v3089
    %v3913 = vunpack.c.h.bf16 %v3089
    %v3914 = vunpack.c.l.bf16 %v3090
    %v3915 = vunpack.c.l.bf16 %v3091
    %v3916 = vunpack.c.h.bf16 %v3091
    %v3917 = vunpack.c.l.bf16 %v3092
    %v3918 = vunpack.c.h.bf16 %v3092
    %v3919 = vunpack.c.l.bf16 %v3093
    %v3920 = vunpack.c.h.bf16 %v3093
    %v3921 = vunpack.c.l.bf16 %v3094
    %v3922 = vunpack.c.l.bf16 %v3095
    %v3923 = vunpack.c.h.bf16 %v3095
    %v3924 = vunpack.c.l.bf16 %v3096
    %v3925 = vunpack.c.h.bf16 %v3096
    %v3926 = vunpack.c.l.bf16 %v3097
    %v3927 = vunpack.c.h.bf16 %v3097
    %v3928 = vunpack.c.l.bf16 %v3098
    %v3929 = vunpack.c.l.bf16 %v3099
    %v3930 = vunpack.c.h.bf16 %v3099
    %v3931 = vunpack.c.l.bf16 %v3100
    %v3932 = vunpack.c.h.bf16 %v3100
    %v3933 = vunpack.c.l.bf16 %v3101
    %v3934 = vunpack.c.h.bf16 %v3101
    %v3935 = vunpack.c.l.bf16 %v3102
    %v3936 = vunpack.c.l.bf16 %v3103
    %v3937 = vunpack.c.h.bf16 %v3103
    %v3938 = vunpack.c.l.bf16 %v3104
    %v3939 = vunpack.c.h.bf16 %v3104
    %v3940 = vunpack.c.l.bf16 %v3105
    %v3941 = vunpack.c.h.bf16 %v3105
    %v3942 = vunpack.c.l.bf16 %v3106
    %v3943 = vunpack.c.l.bf16 %v3107
    %v3944 = vunpack.c.h.bf16 %v3107
    %v3945 = vunpack.c.l.bf16 %v3108
    %v3946 = vunpack.c.h.bf16 %v3108
    %v3947 = vunpack.c.l.bf16 %v3109
    %v3948 = vunpack.c.h.bf16 %v3109
    %v3949 = vunpack.c.l.bf16 %v3110
    %v3950 = vunpack.c.l.bf16 %v3111
    %v3951 = vunpack.c.h.bf16 %v3111
    %v3952 = vunpack.c.l.bf16 %v3112
    %v3953 = vunpack.c.h.bf16 %v3112
    %v3954 = vunpack.c.l.bf16 %v3113
    %v3955 = vunpack.c.h.bf16 %v3113
    %v3956 = vunpack.c.l.bf16 %v3114
    %v3957 = vunpack.c.l.bf16 %v3115
    %v3958 = vunpack.c.h.bf16 %v3115
    %v3959 = vunpack.c.l.bf16 %v3116
    %v3960 = vunpack.c.h.bf16 %v3116
    %v3961 = vunpack.c.l.bf16 %v3117
    %v3962 = vunpack.c.h.bf16 %v3117
    %v3963 = vunpack.c.l.bf16 %v3118
    %v3964 = vunpack.c.l.bf16 %v3119
    %v3965 = vunpack.c.h.bf16 %v3119
    %v3966 = vunpack.c.l.bf16 %v3120
    %v3967 = vunpack.c.h.bf16 %v3120
    %v3968 = vunpack.c.l.bf16 %v3121
    %v3969 = vunpack.c.h.bf16 %v3121
    %v3970 = vunpack.c.l.bf16 %v3122
    %v3971 = vunpack.c.l.bf16 %v3123
    %v3972 = vunpack.c.h.bf16 %v3123
    %v3973 = vunpack.c.l.bf16 %v3124
    %v3974 = vunpack.c.h.bf16 %v3124
    %v3975 = vunpack.c.l.bf16 %v3125
    %v3976 = vunpack.c.h.bf16 %v3125
    %v3977 = vunpack.c.l.bf16 %v3126
    %v3978 = vunpack.c.l.bf16 %v3127
    %v3979 = vunpack.c.h.bf16 %v3127
    %v3980 = vunpack.c.l.bf16 %v3128
    %v3981 = vunpack.c.h.bf16 %v3128
    %v3982 = vunpack.c.l.bf16 %v3129
    %v3983 = vunpack.c.h.bf16 %v3129
    %v3984 = vunpack.c.l.bf16 %v3130
    %v3985 = vunpack.c.l.bf16 %v3131
    %v3986 = vunpack.c.h.bf16 %v3131
    %v3987 = vunpack.c.l.bf16 %v3132
    %v3988 = vunpack.c.h.bf16 %v3132
    %v3989 = vunpack.c.l.bf16 %v3133
    %v3990 = vunpack.c.h.bf16 %v3133
    %v3991 = vunpack.c.l.bf16 %v3134
    %v3992 = vunpack.c.l.bf16 %v3135
    %v3993 = vunpack.c.h.bf16 %v3135
    %v3994 = vunpack.c.l.bf16 %v3136
    %v3995 = vunpack.c.h.bf16 %v3136
    %v3996 = vunpack.c.l.bf16 %v3137
    %v3997 = vunpack.c.h.bf16 %v3137
    %v3998 = vunpack.c.l.bf16 %v3138
    %v3999 = vunpack.c.l.bf16 %v3139
    %v4000 = vunpack.c.h.bf16 %v3139
    %v4001 = vunpack.c.l.bf16 %v3140
    %v4002 = vunpack.c.h.bf16 %v3140
    %v4003 = vunpack.c.l.bf16 %v3141
    %v4004 = vunpack.c.h.bf16 %v3141
    %v4005 = vunpack.c.l.bf16 %v3142
    %v4006 = vunpack.c.l.bf16 %v3143
    %v4007 = vunpack.c.h.bf16 %v3143
    %v4008 = vunpack.c.l.bf16 %v3144
    %v4009 = vunpack.c.h.bf16 %v3144
    %v4010 = vunpack.c.l.bf16 %v3145
    %v4011 = vunpack.c.h.bf16 %v3145
    %v4012 = vunpack.c.l.bf16 %v3146
    %v4013 = vunpack.c.l.bf16 %v3147
    %v4014 = vunpack.c.h.bf16 %v3147
    %v4015 = vunpack.c.l.bf16 %v3148
    %v4016 = vunpack.c.h.bf16 %v3148
    %v4017 = vunpack.c.l.bf16 %v3149
    %v4018 = vunpack.c.h.bf16 %v3149
    %v4019 = vunpack.c.l.bf16 %v3150
    %v4020 = vunpack.c.l.bf16 %v3151
    %v4021 = vunpack.c.h.bf16 %v3151
    %v4022 = vunpack.c.l.bf16 %v3152
    %v4023 = vunpack.c.h.bf16 %v3152
    %v4024 = vunpack.c.l.bf16 %v3153
    %v4025 = vunpack.c.h.bf16 %v3153
    %v4026 = vunpack.c.l.bf16 %v3154
    %v4027 = vunpack.c.l.bf16 %v3155
    %v4028 = vunpack.c.h.bf16 %v3155
    %v4029 = vunpack.c.l.bf16 %v3156
    %v4030 = vunpack.c.h.bf16 %v3156
    %v4031 = vunpack.c.l.bf16 %v3157
    %v4032 = vunpack.c.h.bf16 %v3157
    %v4033 = vunpack.c.l.bf16 %v3158
    %v4034 = vunpack.c.l.bf16 %v3159
    %v4035 = vunpack.c.h.bf16 %v3159
    %v4036 = vunpack.c.l.bf16 %v3160
    %v4037 = vunpack.c.h.bf16 %v3160
    %v4038 = vunpack.c.l.bf16 %v3161
    %v4039 = vunpack.c.h.bf16 %v3161
    %v4040 = vunpack.c.l.bf16 %v3162
    %v4041 = vunpack.c.l.bf16 %v3163
    %v4042 = vunpack.c.h.bf16 %v3163
    %v4043 = vunpack.c.l.bf16 %v3164
    %v4044 = vunpack.c.h.bf16 %v3164
    %v4045 = vunpack.c.l.bf16 %v3165
    %v4046 = vunpack.c.h.bf16 %v3165
    %v4047 = vunpack.c.l.bf16 %v3166
    %v4048 = vunpack.c.l.bf16 %v3167
    %v4049 = vunpack.c.h.bf16 %v3167
    %v4050 = vunpack.c.l.bf16 %v3168
    %v4051 = vunpack.c.h.bf16 %v3168
    %v4052 = vunpack.c.l.bf16 %v3169
    %v4053 = vunpack.c.h.bf16 %v3169
    %v4054 = vunpack.c.l.bf16 %v3170
    %v4055 = vunpack.c.l.bf16 %v3171
    %v4056 = vunpack.c.h.bf16 %v3171
    %v4057 = vunpack.c.l.bf16 %v3172
    %v4058 = vunpack.c.h.bf16 %v3172
    %v4059 = vunpack.c.l.bf16 %v3173
    %v4060 = vunpack.c.h.bf16 %v3173
    %v4061 = vunpack.c.l.bf16 %v3174
    %v4062 = vunpack.c.l.bf16 %v3175
    %v4063 = vunpack.c.h.bf16 %v3175
    %v4064 = vunpack.c.l.bf16 %v3176
    %v4065 = vunpack.c.h.bf16 %v3176
    %v4066 = vunpack.c.l.bf16 %v3177
    %v4067 = vunpack.c.h.bf16 %v3177
    %v4068 = vunpack.c.l.bf16 %v3178
    %v4069 = vunpack.c.l.bf16 %v3179
    %v4070 = vunpack.c.h.bf16 %v3179
    %v4071 = vunpack.c.l.bf16 %v3180
    %v4072 = vunpack.c.h.bf16 %v3180
    %v4073 = vunpack.c.l.bf16 %v3181
    %v4074 = vunpack.c.h.bf16 %v3181
    %v4075 = vunpack.c.l.bf16 %v3182
    %v4076 = vunpack.c.l.bf16 %v3183
    %v4077 = vunpack.c.h.bf16 %v3183
    %v4078 = vunpack.c.l.bf16 %v3184
    %v4079 = vunpack.c.h.bf16 %v3184
    %v4080 = vunpack.c.l.bf16 %v3185
    %v4081 = vunpack.c.h.bf16 %v3185
    %v4082 = vunpack.c.l.bf16 %v3186
    %v4083 = vld [vmem:[#allocation21] sm:$0xff]
    %v4085 = vperm.slane %v4083, 0
    %v4086 = vperm.slane %v4083, 1
    %v4087 = vperm.slane %v4083, 2
    %v4088 = vperm.slane %v4083, 3
    %v4089 = vperm.slane %v4083, 4
    %v4090 = vperm.slane %v4083, 5
    %v4091 = vperm.slane %v4083, 6
    %4099 = vmatpush.msra.mxu0 %v3292
    %4100 = vmatpush.msra.mxu0 %v3285
    %4101 = vmatpush.msra.mxu0 %v3278
    %4102 = vmatpush.msra.mxu0 %v3271
    %4103 = vmatpush.msra.mxu0 %v3264
    %4104 = vmatpush.msra.mxu0 %v3257
    %4105 = vmatpush.msra.mxu0 %v3250
    %4106 = vmatpush.msra.mxu0 %v3243
    %4107 = vmatpush.msra.mxu0 %v3236
    %4108 = vmatpush.msra.mxu0 %v3229
    %4109 = vmatpush.msra.mxu0 %v3222
    %4110 = vmatpush.msra.mxu0 %v3215
    %4111 = vmatpush.msra.mxu0 %v3208
    %4112 = vmatpush.msra.mxu0 %v3201
    %4113 = vmatpush.msra.mxu0 %v3194
    %4114 = vmatpush.msra.mxu0 %v3187
    %4115 = vmatmul.f32.gmra.mxu0 %v2663
    %v4116 = vpop.f32.mrf.mxu0
    %v4117 = vadd.f32 %v4085, %v4116
    %4118 = vdwg.mxu0
    %4119 = vmatpush.msra.mxu0 %v3404
    %4120 = vmatpush.msra.mxu0 %v3397
    %4121 = vmatpush.msra.mxu0 %v3390
    %4122 = vmatpush.msra.mxu0 %v3383
    %4123 = vmatpush.msra.mxu0 %v3376
    %4124 = vmatpush.msra.mxu0 %v3369
    %4125 = vmatpush.msra.mxu0 %v3362
    %4126 = vmatpush.msra.mxu0 %v3355
    %4127 = vmatpush.msra.mxu0 %v3348
    %4128 = vmatpush.msra.mxu0 %v3341
    %4129 = vmatpush.msra.mxu0 %v3334
    %4130 = vmatpush.msra.mxu0 %v3327
    %4131 = vmatpush.msra.mxu0 %v3320
    %4132 = vmatpush.msra.mxu0 %v3313
    %4133 = vmatpush.msra.mxu0 %v3306
    %4134 = vmatpush.msra.mxu0 %v3299
    %4135 = vmatmul.f32.gmra.mxu0 %v2664
    %v4136 = vpop.f32.mrf.mxu0
    %v4137 = vadd.f32 %v4117, %v4136
    %4138 = vdwg.mxu0
    %4139 = vmatpush.msra.mxu0 %v3516
    %4140 = vmatpush.msra.mxu0 %v3509
    %4141 = vmatpush.msra.mxu0 %v3502
    %4142 = vmatpush.msra.mxu0 %v3495
    %4143 = vmatpush.msra.mxu0 %v3488
    %4144 = vmatpush.msra.mxu0 %v3481
    %4145 = vmatpush.msra.mxu0 %v3474
    %4146 = vmatpush.msra.mxu0 %v3467
    %4147 = vmatpush.msra.mxu0 %v3460
    %4148 = vmatpush.msra.mxu0 %v3453
    %4149 = vmatpush.msra.mxu0 %v3446
    %4150 = vmatpush.msra.mxu0 %v3439
    %4151 = vmatpush.msra.mxu0 %v3432
    %4152 = vmatpush.msra.mxu0 %v3425
    %4153 = vmatpush.msra.mxu0 %v3418
    %4154 = vmatpush.msra.mxu0 %v3411
    %4155 = vmatmul.f32.gmra.mxu0 %v2665
    %v4156 = vpop.f32.mrf.mxu0
    %v4157 = vadd.f32 %v4137, %v4156
    %4158 = vdwg.mxu0
    %4159 = vmatpush.msra.mxu0 %v3628
    %4160 = vmatpush.msra.mxu0 %v3621
    %4161 = vmatpush.msra.mxu0 %v3614
    %4162 = vmatpush.msra.mxu0 %v3607
    %4163 = vmatpush.msra.mxu0 %v3600
    %4164 = vmatpush.msra.mxu0 %v3593
    %4165 = vmatpush.msra.mxu0 %v3586
    %4166 = vmatpush.msra.mxu0 %v3579
    %4167 = vmatpush.msra.mxu0 %v3572
    %4168 = vmatpush.msra.mxu0 %v3565
    %4169 = vmatpush.msra.mxu0 %v3558
    %4170 = vmatpush.msra.mxu0 %v3551
    %4171 = vmatpush.msra.mxu0 %v3544
    %4172 = vmatpush.msra.mxu0 %v3537
    %4173 = vmatpush.msra.mxu0 %v3530
    %4174 = vmatpush.msra.mxu0 %v3523
    %4175 = vmatmul.f32.gmra.mxu0 %v2666
    %v4176 = vpop.f32.mrf.mxu0
    %v4177 = vadd.f32 %v4157, %v4176
    %4178 = vdwg.mxu0
    %4179 = vmatpush.msra.mxu0 %v3740
    %4180 = vmatpush.msra.mxu0 %v3733
    %4181 = vmatpush.msra.mxu0 %v3726
    %4182 = vmatpush.msra.mxu0 %v3719
    %4183 = vmatpush.msra.mxu0 %v3712
    %4184 = vmatpush.msra.mxu0 %v3705
    %4185 = vmatpush.msra.mxu0 %v3698
    %4186 = vmatpush.msra.mxu0 %v3691
    %4187 = vmatpush.msra.mxu0 %v3684
    %4188 = vmatpush.msra.mxu0 %v3677
    %4189 = vmatpush.msra.mxu0 %v3670
    %4190 = vmatpush.msra.mxu0 %v3663
    %4191 = vmatpush.msra.mxu0 %v3656
    %4192 = vmatpush.msra.mxu0 %v3649
    %4193 = vmatpush.msra.mxu0 %v3642
    %4194 = vmatpush.msra.mxu0 %v3635
    %4195 = vmatmul.f32.gmra.mxu0 %v2667
    %v4196 = vpop.f32.mrf.mxu0
    %v4197 = vadd.f32 %v4177, %v4196
    %4198 = vdwg.mxu0
    %4199 = vmatpush.msra.mxu0 %v3852
    %4200 = vmatpush.msra.mxu0 %v3845
    %4201 = vmatpush.msra.mxu0 %v3838
    %4202 = vmatpush.msra.mxu0 %v3831
    %4203 = vmatpush.msra.mxu0 %v3824
    %4204 = vmatpush.msra.mxu0 %v3817
    %4205 = vmatpush.msra.mxu0 %v3810
    %4206 = vmatpush.msra.mxu0 %v3803
    %4207 = vmatpush.msra.mxu0 %v3796
    %4208 = vmatpush.msra.mxu0 %v3789
    %4209 = vmatpush.msra.mxu0 %v3782
    %4210 = vmatpush.msra.mxu0 %v3775
    %4211 = vmatpush.msra.mxu0 %v3768
    %4212 = vmatpush.msra.mxu0 %v3761
    %4213 = vmatpush.msra.mxu0 %v3754
    %4214 = vmatpush.msra.mxu0 %v3747
    %4215 = vmatmul.f32.gmra.mxu0 %v2668
    %v4216 = vpop.f32.mrf.mxu0
    %v4217 = vadd.f32 %v4197, %v4216
    %4218 = vdwg.mxu0
    %4219 = vmatpush.msra.mxu0 %v3964
    %4220 = vmatpush.msra.mxu0 %v3957
    %4221 = vmatpush.msra.mxu0 %v3950
    %4222 = vmatpush.msra.mxu0 %v3943
    %4223 = vmatpush.msra.mxu0 %v3936
    %4224 = vmatpush.msra.mxu0 %v3929
    %4225 = vmatpush.msra.mxu0 %v3922
    %4226 = vmatpush.msra.mxu0 %v3915
    %4227 = vmatpush.msra.mxu0 %v3908
    %4228 = vmatpush.msra.mxu0 %v3901
    %4229 = vmatpush.msra.mxu0 %v3894
    %4230 = vmatpush.msra.mxu0 %v3887
    %4231 = vmatpush.msra.mxu0 %v3880
    %4232 = vmatpush.msra.mxu0 %v3873
    %4233 = vmatpush.msra.mxu0 %v3866
    %4234 = vmatpush.msra.mxu0 %v3859
    %4235 = vmatmul.f32.gmra.mxu0 %v2669
    %v4236 = vpop.f32.mrf.mxu0
    %v4237 = vadd.f32 %v4217, %v4236
    %4238 = vdwg.mxu0
    %4239 = vmatpush.msra.mxu0 %v4076
    %4240 = vmatpush.msra.mxu0 %v4069
    %4241 = vmatpush.msra.mxu0 %v4062
    %4242 = vmatpush.msra.mxu0 %v4055
    %4243 = vmatpush.msra.mxu0 %v4048
    %4244 = vmatpush.msra.mxu0 %v4041
    %4245 = vmatpush.msra.mxu0 %v4034
    %4246 = vmatpush.msra.mxu0 %v4027
    %4247 = vmatpush.msra.mxu0 %v4020
    %4248 = vmatpush.msra.mxu0 %v4013
    %4249 = vmatpush.msra.mxu0 %v4006
    %4250 = vmatpush.msra.mxu0 %v3999
    %4251 = vmatpush.msra.mxu0 %v3992
    %4252 = vmatpush.msra.mxu0 %v3985
    %4253 = vmatpush.msra.mxu0 %v3978
    %4254 = vmatpush.msra.mxu0 %v3971
    %4255 = vmatmul.f32.gmra.mxu0 %v2670
    %v4256 = vpop.f32.mrf.mxu0
    %v4257 = vadd.f32 %v4237, %v4256
    %4258 = vdwg.mxu0
    %4259 = vmatpush.msra.mxu0 %v3293
    %4260 = vmatpush.msra.mxu0 %v3286
    %4261 = vmatpush.msra.mxu0 %v3279
    %4262 = vmatpush.msra.mxu0 %v3272
    %4263 = vmatpush.msra.mxu0 %v3265
    %4264 = vmatpush.msra.mxu0 %v3258
    %4265 = vmatpush.msra.mxu0 %v3251
    %4266 = vmatpush.msra.mxu0 %v3244
    %4267 = vmatpush.msra.mxu0 %v3237
    %4268 = vmatpush.msra.mxu0 %v3230
    %4269 = vmatpush.msra.mxu0 %v3223
    %4270 = vmatpush.msra.mxu0 %v3216
    %4271 = vmatpush.msra.mxu0 %v3209
    %4272 = vmatpush.msra.mxu0 %v3202
    %4273 = vmatpush.msra.mxu0 %v3195
    %4274 = vmatpush.msra.mxu0 %v3188
    %4275 = vmatmul.f32.gmra.mxu0 %v2663
    %v4276 = vpop.f32.mrf.mxu0
    %v4277 = vadd.f32 %v4086, %v4276
    %4278 = vdwg.mxu0
    %4279 = vmatpush.msra.mxu0 %v3405
    %4280 = vmatpush.msra.mxu0 %v3398
    %4281 = vmatpush.msra.mxu0 %v3391
    %4282 = vmatpush.msra.mxu0 %v3384
    %4283 = vmatpush.msra.mxu0 %v3377
    %4284 = vmatpush.msra.mxu0 %v3370
    %4285 = vmatpush.msra.mxu0 %v3363
    %4286 = vmatpush.msra.mxu0 %v3356
    %4287 = vmatpush.msra.mxu0 %v3349
    %4288 = vmatpush.msra.mxu0 %v3342
    %4289 = vmatpush.msra.mxu0 %v3335
    %4290 = vmatpush.msra.mxu0 %v3328
    %4291 = vmatpush.msra.mxu0 %v3321
    %4292 = vmatpush.msra.mxu0 %v3314
    %4293 = vmatpush.msra.mxu0 %v3307
    %4294 = vmatpush.msra.mxu0 %v3300
    %4295 = vmatmul.f32.gmra.mxu0 %v2664
    %v4296 = vpop.f32.mrf.mxu0
    %v4297 = vadd.f32 %v4277, %v4296
    %4298 = vdwg.mxu0
    %4299 = vmatpush.msra.mxu0 %v3517
    %4300 = vmatpush.msra.mxu0 %v3510
    %4301 = vmatpush.msra.mxu0 %v3503
    %4302 = vmatpush.msra.mxu0 %v3496
    %4303 = vmatpush.msra.mxu0 %v3489
    %4304 = vmatpush.msra.mxu0 %v3482
    %4305 = vmatpush.msra.mxu0 %v3475
    %4306 = vmatpush.msra.mxu0 %v3468
    %4307 = vmatpush.msra.mxu0 %v3461
    %4308 = vmatpush.msra.mxu0 %v3454
    %4309 = vmatpush.msra.mxu0 %v3447
    %4310 = vmatpush.msra.mxu0 %v3440
    %4311 = vmatpush.msra.mxu0 %v3433
    %4312 = vmatpush.msra.mxu0 %v3426
    %4313 = vmatpush.msra.mxu0 %v3419
    %4314 = vmatpush.msra.mxu0 %v3412
    %4315 = vmatmul.f32.gmra.mxu0 %v2665
    %v4316 = vpop.f32.mrf.mxu0
    %v4317 = vadd.f32 %v4297, %v4316
    %4318 = vdwg.mxu0
    %4319 = vmatpush.msra.mxu0 %v3629
    %4320 = vmatpush.msra.mxu0 %v3622
    %4321 = vmatpush.msra.mxu0 %v3615
    %4322 = vmatpush.msra.mxu0 %v3608
    %4323 = vmatpush.msra.mxu0 %v3601
    %4324 = vmatpush.msra.mxu0 %v3594
    %4325 = vmatpush.msra.mxu0 %v3587
    %4326 = vmatpush.msra.mxu0 %v3580
    %4327 = vmatpush.msra.mxu0 %v3573
    %4328 = vmatpush.msra.mxu0 %v3566
    %4329 = vmatpush.msra.mxu0 %v3559
    %4330 = vmatpush.msra.mxu0 %v3552
    %4331 = vmatpush.msra.mxu0 %v3545
    %4332 = vmatpush.msra.mxu0 %v3538
    %4333 = vmatpush.msra.mxu0 %v3531
    %4334 = vmatpush.msra.mxu0 %v3524
    %4335 = vmatmul.f32.gmra.mxu0 %v2666
    %v4336 = vpop.f32.mrf.mxu0
    %v4337 = vadd.f32 %v4317, %v4336
    %4338 = vdwg.mxu0
    %4339 = vmatpush.msra.mxu0 %v3741
    %4340 = vmatpush.msra.mxu0 %v3734
    %4341 = vmatpush.msra.mxu0 %v3727
    %4342 = vmatpush.msra.mxu0 %v3720
    %4343 = vmatpush.msra.mxu0 %v3713
    %4344 = vmatpush.msra.mxu0 %v3706
    %4345 = vmatpush.msra.mxu0 %v3699
    %4346 = vmatpush.msra.mxu0 %v3692
    %4347 = vmatpush.msra.mxu0 %v3685
    %4348 = vmatpush.msra.mxu0 %v3678
    %4349 = vmatpush.msra.mxu0 %v3671
    %4350 = vmatpush.msra.mxu0 %v3664
    %4351 = vmatpush.msra.mxu0 %v3657
    %4352 = vmatpush.msra.mxu0 %v3650
    %4353 = vmatpush.msra.mxu0 %v3643
    %4354 = vmatpush.msra.mxu0 %v3636
    %4355 = vmatmul.f32.gmra.mxu0 %v2667
    %v4356 = vpop.f32.mrf.mxu0
    %v4357 = vadd.f32 %v4337, %v4356
    %4358 = vdwg.mxu0
    %4359 = vmatpush.msra.mxu0 %v3853
    %4360 = vmatpush.msra.mxu0 %v3846
    %4361 = vmatpush.msra.mxu0 %v3839
    %4362 = vmatpush.msra.mxu0 %v3832
    %4363 = vmatpush.msra.mxu0 %v3825
    %4364 = vmatpush.msra.mxu0 %v3818
    %4365 = vmatpush.msra.mxu0 %v3811
    %4366 = vmatpush.msra.mxu0 %v3804
    %4367 = vmatpush.msra.mxu0 %v3797
    %4368 = vmatpush.msra.mxu0 %v3790
    %4369 = vmatpush.msra.mxu0 %v3783
    %4370 = vmatpush.msra.mxu0 %v3776
    %4371 = vmatpush.msra.mxu0 %v3769
    %4372 = vmatpush.msra.mxu0 %v3762
    %4373 = vmatpush.msra.mxu0 %v3755
    %4374 = vmatpush.msra.mxu0 %v3748
    %4375 = vmatmul.f32.gmra.mxu0 %v2668
    %v4376 = vpop.f32.mrf.mxu0
    %v4377 = vadd.f32 %v4357, %v4376
    %4378 = vdwg.mxu0
    %4379 = vmatpush.msra.mxu0 %v3965
    %4380 = vmatpush.msra.mxu0 %v3958
    %4381 = vmatpush.msra.mxu0 %v3951
    %4382 = vmatpush.msra.mxu0 %v3944
    %4383 = vmatpush.msra.mxu0 %v3937
    %4384 = vmatpush.msra.mxu0 %v3930
    %4385 = vmatpush.msra.mxu0 %v3923
    %4386 = vmatpush.msra.mxu0 %v3916
    %4387 = vmatpush.msra.mxu0 %v3909
    %4388 = vmatpush.msra.mxu0 %v3902
    %4389 = vmatpush.msra.mxu0 %v3895
    %4390 = vmatpush.msra.mxu0 %v3888
    %4391 = vmatpush.msra.mxu0 %v3881
    %4392 = vmatpush.msra.mxu0 %v3874
    %4393 = vmatpush.msra.mxu0 %v3867
    %4394 = vmatpush.msra.mxu0 %v3860
    %4395 = vmatmul.f32.gmra.mxu0 %v2669
    %v4396 = vpop.f32.mrf.mxu0
    %v4397 = vadd.f32 %v4377, %v4396
    %4398 = vdwg.mxu0
    %4399 = vmatpush.msra.mxu0 %v4077
    %4400 = vmatpush.msra.mxu0 %v4070
    %4401 = vmatpush.msra.mxu0 %v4063
    %4402 = vmatpush.msra.mxu0 %v4056
    %4403 = vmatpush.msra.mxu0 %v4049
    %4404 = vmatpush.msra.mxu0 %v4042
    %4405 = vmatpush.msra.mxu0 %v4035
    %4406 = vmatpush.msra.mxu0 %v4028
    %4407 = vmatpush.msra.mxu0 %v4021
    %4408 = vmatpush.msra.mxu0 %v4014
    %4409 = vmatpush.msra.mxu0 %v4007
    %4410 = vmatpush.msra.mxu0 %v4000
    %4411 = vmatpush.msra.mxu0 %v3993
    %4412 = vmatpush.msra.mxu0 %v3986
    %4413 = vmatpush.msra.mxu0 %v3979
    %4414 = vmatpush.msra.mxu0 %v3972
    %4415 = vmatmul.f32.gmra.mxu0 %v2670
    %v4416 = vpop.f32.mrf.mxu0
    %v4417 = vadd.f32 %v4397, %v4416
    %4418 = vdwg.mxu0
    %4419 = vmatpush.msra.mxu0 %v3294
    %4420 = vmatpush.msra.mxu0 %v3287
    %4421 = vmatpush.msra.mxu0 %v3280
    %4422 = vmatpush.msra.mxu0 %v3273
    %4423 = vmatpush.msra.mxu0 %v3266
    %4424 = vmatpush.msra.mxu0 %v3259
    %4425 = vmatpush.msra.mxu0 %v3252
    %4426 = vmatpush.msra.mxu0 %v3245
    %4427 = vmatpush.msra.mxu0 %v3238
    %4428 = vmatpush.msra.mxu0 %v3231
    %4429 = vmatpush.msra.mxu0 %v3224
    %4430 = vmatpush.msra.mxu0 %v3217
    %4431 = vmatpush.msra.mxu0 %v3210
    %4432 = vmatpush.msra.mxu0 %v3203
    %4433 = vmatpush.msra.mxu0 %v3196
    %4434 = vmatpush.msra.mxu0 %v3189
    %4435 = vmatmul.f32.gmra.mxu0 %v2663
    %v4436 = vpop.f32.mrf.mxu0
    %v4437 = vadd.f32 %v4087, %v4436
    %4438 = vdwg.mxu0
    %4439 = vmatpush.msra.mxu0 %v3406
    %4440 = vmatpush.msra.mxu0 %v3399
    %4441 = vmatpush.msra.mxu0 %v3392
    %4442 = vmatpush.msra.mxu0 %v3385
    %4443 = vmatpush.msra.mxu0 %v3378
    %4444 = vmatpush.msra.mxu0 %v3371
    %4445 = vmatpush.msra.mxu0 %v3364
    %4446 = vmatpush.msra.mxu0 %v3357
    %4447 = vmatpush.msra.mxu0 %v3350
    %4448 = vmatpush.msra.mxu0 %v3343
    %4449 = vmatpush.msra.mxu0 %v3336
    %4450 = vmatpush.msra.mxu0 %v3329
    %4451 = vmatpush.msra.mxu0 %v3322
    %4452 = vmatpush.msra.mxu0 %v3315
    %4453 = vmatpush.msra.mxu0 %v3308
    %4454 = vmatpush.msra.mxu0 %v3301
    %4455 = vmatmul.f32.gmra.mxu0 %v2664
    %v4456 = vpop.f32.mrf.mxu0
    %v4457 = vadd.f32 %v4437, %v4456
    %4458 = vdwg.mxu0
    %4459 = vmatpush.msra.mxu0 %v3518
    %4460 = vmatpush.msra.mxu0 %v3511
    %4461 = vmatpush.msra.mxu0 %v3504
    %4462 = vmatpush.msra.mxu0 %v3497
    %4463 = vmatpush.msra.mxu0 %v3490
    %4464 = vmatpush.msra.mxu0 %v3483
    %4465 = vmatpush.msra.mxu0 %v3476
    %4466 = vmatpush.msra.mxu0 %v3469
    %4467 = vmatpush.msra.mxu0 %v3462
    %4468 = vmatpush.msra.mxu0 %v3455
    %4469 = vmatpush.msra.mxu0 %v3448
    %4470 = vmatpush.msra.mxu0 %v3441
    %4471 = vmatpush.msra.mxu0 %v3434
    %4472 = vmatpush.msra.mxu0 %v3427
    %4473 = vmatpush.msra.mxu0 %v3420
    %4474 = vmatpush.msra.mxu0 %v3413
    %4475 = vmatmul.f32.gmra.mxu0 %v2665
    %v4476 = vpop.f32.mrf.mxu0
    %v4477 = vadd.f32 %v4457, %v4476
    %4478 = vdwg.mxu0
    %4479 = vmatpush.msra.mxu0 %v3630
    %4480 = vmatpush.msra.mxu0 %v3623
    %4481 = vmatpush.msra.mxu0 %v3616
    %4482 = vmatpush.msra.mxu0 %v3609
    %4483 = vmatpush.msra.mxu0 %v3602
    %4484 = vmatpush.msra.mxu0 %v3595
    %4485 = vmatpush.msra.mxu0 %v3588
    %4486 = vmatpush.msra.mxu0 %v3581
    %4487 = vmatpush.msra.mxu0 %v3574
    %4488 = vmatpush.msra.mxu0 %v3567
    %4489 = vmatpush.msra.mxu0 %v3560
    %4490 = vmatpush.msra.mxu0 %v3553
    %4491 = vmatpush.msra.mxu0 %v3546
    %4492 = vmatpush.msra.mxu0 %v3539
    %4493 = vmatpush.msra.mxu0 %v3532
    %4494 = vmatpush.msra.mxu0 %v3525
    %4495 = vmatmul.f32.gmra.mxu0 %v2666
    %v4496 = vpop.f32.mrf.mxu0
    %v4497 = vadd.f32 %v4477, %v4496
    %4498 = vdwg.mxu0
    %4499 = vmatpush.msra.mxu0 %v3742
    %4500 = vmatpush.msra.mxu0 %v3735
    %4501 = vmatpush.msra.mxu0 %v3728
    %4502 = vmatpush.msra.mxu0 %v3721
    %4503 = vmatpush.msra.mxu0 %v3714
    %4504 = vmatpush.msra.mxu0 %v3707
    %4505 = vmatpush.msra.mxu0 %v3700
    %4506 = vmatpush.msra.mxu0 %v3693
    %4507 = vmatpush.msra.mxu0 %v3686
    %4508 = vmatpush.msra.mxu0 %v3679
    %4509 = vmatpush.msra.mxu0 %v3672
    %4510 = vmatpush.msra.mxu0 %v3665
    %4511 = vmatpush.msra.mxu0 %v3658
    %4512 = vmatpush.msra.mxu0 %v3651
    %4513 = vmatpush.msra.mxu0 %v3644
    %4514 = vmatpush.msra.mxu0 %v3637
    %4515 = vmatmul.f32.gmra.mxu0 %v2667
    %v4516 = vpop.f32.mrf.mxu0
    %v4517 = vadd.f32 %v4497, %v4516
    %4518 = vdwg.mxu0
    %4519 = vmatpush.msra.mxu0 %v3854
    %4520 = vmatpush.msra.mxu0 %v3847
    %4521 = vmatpush.msra.mxu0 %v3840
    %4522 = vmatpush.msra.mxu0 %v3833
    %4523 = vmatpush.msra.mxu0 %v3826
    %4524 = vmatpush.msra.mxu0 %v3819
    %4525 = vmatpush.msra.mxu0 %v3812
    %4526 = vmatpush.msra.mxu0 %v3805
    %4527 = vmatpush.msra.mxu0 %v3798
    %4528 = vmatpush.msra.mxu0 %v3791
    %4529 = vmatpush.msra.mxu0 %v3784
    %4530 = vmatpush.msra.mxu0 %v3777
    %4531 = vmatpush.msra.mxu0 %v3770
    %4532 = vmatpush.msra.mxu0 %v3763
    %4533 = vmatpush.msra.mxu0 %v3756
    %4534 = vmatpush.msra.mxu0 %v3749
    %4535 = vmatmul.f32.gmra.mxu0 %v2668
    %v4536 = vpop.f32.mrf.mxu0
    %v4537 = vadd.f32 %v4517, %v4536
    %4538 = vdwg.mxu0
    %4539 = vmatpush.msra.mxu0 %v3966
    %4540 = vmatpush.msra.mxu0 %v3959
    %4541 = vmatpush.msra.mxu0 %v3952
    %4542 = vmatpush.msra.mxu0 %v3945
    %4543 = vmatpush.msra.mxu0 %v3938
    %4544 = vmatpush.msra.mxu0 %v3931
    %4545 = vmatpush.msra.mxu0 %v3924
    %4546 = vmatpush.msra.mxu0 %v3917
    %4547 = vmatpush.msra.mxu0 %v3910
    %4548 = vmatpush.msra.mxu0 %v3903
    %4549 = vmatpush.msra.mxu0 %v3896
    %4550 = vmatpush.msra.mxu0 %v3889
    %4551 = vmatpush.msra.mxu0 %v3882
    %4552 = vmatpush.msra.mxu0 %v3875
    %4553 = vmatpush.msra.mxu0 %v3868
    %4554 = vmatpush.msra.mxu0 %v3861
    %4555 = vmatmul.f32.gmra.mxu0 %v2669
    %v4556 = vpop.f32.mrf.mxu0
    %v4557 = vadd.f32 %v4537, %v4556
    %4558 = vdwg.mxu0
    %4559 = vmatpush.msra.mxu0 %v4078
    %4560 = vmatpush.msra.mxu0 %v4071
    %4561 = vmatpush.msra.mxu0 %v4064
    %4562 = vmatpush.msra.mxu0 %v4057
    %4563 = vmatpush.msra.mxu0 %v4050
    %4564 = vmatpush.msra.mxu0 %v4043
    %4565 = vmatpush.msra.mxu0 %v4036
    %4566 = vmatpush.msra.mxu0 %v4029
    %4567 = vmatpush.msra.mxu0 %v4022
    %4568 = vmatpush.msra.mxu0 %v4015
    %4569 = vmatpush.msra.mxu0 %v4008
    %4570 = vmatpush.msra.mxu0 %v4001
    %4571 = vmatpush.msra.mxu0 %v3994
    %4572 = vmatpush.msra.mxu0 %v3987
    %4573 = vmatpush.msra.mxu0 %v3980
    %4574 = vmatpush.msra.mxu0 %v3973
    %4575 = vmatmul.f32.gmra.mxu0 %v2670
    %v4576 = vpop.f32.mrf.mxu0
    %v4577 = vadd.f32 %v4557, %v4576
    %4578 = vdwg.mxu0
    %4579 = vmatpush.msra.mxu0 %v3295
    %4580 = vmatpush.msra.mxu0 %v3288
    %4581 = vmatpush.msra.mxu0 %v3281
    %4582 = vmatpush.msra.mxu0 %v3274
    %4583 = vmatpush.msra.mxu0 %v3267
    %4584 = vmatpush.msra.mxu0 %v3260
    %4585 = vmatpush.msra.mxu0 %v3253
    %4586 = vmatpush.msra.mxu0 %v3246
    %4587 = vmatpush.msra.mxu0 %v3239
    %4588 = vmatpush.msra.mxu0 %v3232
    %4589 = vmatpush.msra.mxu0 %v3225
    %4590 = vmatpush.msra.mxu0 %v3218
    %4591 = vmatpush.msra.mxu0 %v3211
    %4592 = vmatpush.msra.mxu0 %v3204
    %4593 = vmatpush.msra.mxu0 %v3197
    %4594 = vmatpush.msra.mxu0 %v3190
    %4595 = vmatmul.f32.gmra.mxu0 %v2663
    %v4596 = vpop.f32.mrf.mxu0
    %v4597 = vadd.f32 %v4088, %v4596
    %4598 = vdwg.mxu0
    %4599 = vmatpush.msra.mxu0 %v3407
    %4600 = vmatpush.msra.mxu0 %v3400
    %4601 = vmatpush.msra.mxu0 %v3393
    %4602 = vmatpush.msra.mxu0 %v3386
    %4603 = vmatpush.msra.mxu0 %v3379
    %4604 = vmatpush.msra.mxu0 %v3372
    %4605 = vmatpush.msra.mxu0 %v3365
    %4606 = vmatpush.msra.mxu0 %v3358
    %4607 = vmatpush.msra.mxu0 %v3351
    %4608 = vmatpush.msra.mxu0 %v3344
    %4609 = vmatpush.msra.mxu0 %v3337
    %4610 = vmatpush.msra.mxu0 %v3330
    %4611 = vmatpush.msra.mxu0 %v3323
    %4612 = vmatpush.msra.mxu0 %v3316
    %4613 = vmatpush.msra.mxu0 %v3309
    %4614 = vmatpush.msra.mxu0 %v3302
    %4615 = vmatmul.f32.gmra.mxu0 %v2664
    %v4616 = vpop.f32.mrf.mxu0
    %v4617 = vadd.f32 %v4597, %v4616
    %4618 = vdwg.mxu0
    %4619 = vmatpush.msra.mxu0 %v3519
    %4620 = vmatpush.msra.mxu0 %v3512
    %4621 = vmatpush.msra.mxu0 %v3505
    %4622 = vmatpush.msra.mxu0 %v3498
    %4623 = vmatpush.msra.mxu0 %v3491
    %4624 = vmatpush.msra.mxu0 %v3484
    %4625 = vmatpush.msra.mxu0 %v3477
    %4626 = vmatpush.msra.mxu0 %v3470
    %4627 = vmatpush.msra.mxu0 %v3463
    %4628 = vmatpush.msra.mxu0 %v3456
    %4629 = vmatpush.msra.mxu0 %v3449
    %4630 = vmatpush.msra.mxu0 %v3442
    %4631 = vmatpush.msra.mxu0 %v3435
    %4632 = vmatpush.msra.mxu0 %v3428
    %4633 = vmatpush.msra.mxu0 %v3421
    %4634 = vmatpush.msra.mxu0 %v3414
    %4635 = vmatmul.f32.gmra.mxu0 %v2665
    %v4636 = vpop.f32.mrf.mxu0
    %v4637 = vadd.f32 %v4617, %v4636
    %4638 = vdwg.mxu0
    %4639 = vmatpush.msra.mxu0 %v3631
    %4640 = vmatpush.msra.mxu0 %v3624
    %4641 = vmatpush.msra.mxu0 %v3617
    %4642 = vmatpush.msra.mxu0 %v3610
    %4643 = vmatpush.msra.mxu0 %v3603
    %4644 = vmatpush.msra.mxu0 %v3596
    %4645 = vmatpush.msra.mxu0 %v3589
    %4646 = vmatpush.msra.mxu0 %v3582
    %4647 = vmatpush.msra.mxu0 %v3575
    %4648 = vmatpush.msra.mxu0 %v3568
    %4649 = vmatpush.msra.mxu0 %v3561
    %4650 = vmatpush.msra.mxu0 %v3554
    %4651 = vmatpush.msra.mxu0 %v3547
    %4652 = vmatpush.msra.mxu0 %v3540
    %4653 = vmatpush.msra.mxu0 %v3533
    %4654 = vmatpush.msra.mxu0 %v3526
    %4655 = vmatmul.f32.gmra.mxu0 %v2666
    %v4656 = vpop.f32.mrf.mxu0
    %v4657 = vadd.f32 %v4637, %v4656
    %4658 = vdwg.mxu0
    %4659 = vmatpush.msra.mxu0 %v3743
    %4660 = vmatpush.msra.mxu0 %v3736
    %4661 = vmatpush.msra.mxu0 %v3729
    %4662 = vmatpush.msra.mxu0 %v3722
    %4663 = vmatpush.msra.mxu0 %v3715
    %4664 = vmatpush.msra.mxu0 %v3708
    %4665 = vmatpush.msra.mxu0 %v3701
    %4666 = vmatpush.msra.mxu0 %v3694
    %4667 = vmatpush.msra.mxu0 %v3687
    %4668 = vmatpush.msra.mxu0 %v3680
    %4669 = vmatpush.msra.mxu0 %v3673
    %4670 = vmatpush.msra.mxu0 %v3666
    %4671 = vmatpush.msra.mxu0 %v3659
    %4672 = vmatpush.msra.mxu0 %v3652
    %4673 = vmatpush.msra.mxu0 %v3645
    %4674 = vmatpush.msra.mxu0 %v3638
    %4675 = vmatmul.f32.gmra.mxu0 %v2667
    %v4676 = vpop.f32.mrf.mxu0
    %v4677 = vadd.f32 %v4657, %v4676
    %4678 = vdwg.mxu0
    %4679 = vmatpush.msra.mxu0 %v3855
    %4680 = vmatpush.msra.mxu0 %v3848
    %4681 = vmatpush.msra.mxu0 %v3841
    %4682 = vmatpush.msra.mxu0 %v3834
    %4683 = vmatpush.msra.mxu0 %v3827
    %4684 = vmatpush.msra.mxu0 %v3820
    %4685 = vmatpush.msra.mxu0 %v3813
    %4686 = vmatpush.msra.mxu0 %v3806
    %4687 = vmatpush.msra.mxu0 %v3799
    %4688 = vmatpush.msra.mxu0 %v3792
    %4689 = vmatpush.msra.mxu0 %v3785
    %4690 = vmatpush.msra.mxu0 %v3778
    %4691 = vmatpush.msra.mxu0 %v3771
    %4692 = vmatpush.msra.mxu0 %v3764
    %4693 = vmatpush.msra.mxu0 %v3757
    %4694 = vmatpush.msra.mxu0 %v3750
    %4695 = vmatmul.f32.gmra.mxu0 %v2668
    %v4696 = vpop.f32.mrf.mxu0
    %v4697 = vadd.f32 %v4677, %v4696
    %4698 = vdwg.mxu0
    %4699 = vmatpush.msra.mxu0 %v3967
    %4700 = vmatpush.msra.mxu0 %v3960
    %4701 = vmatpush.msra.mxu0 %v3953
    %4702 = vmatpush.msra.mxu0 %v3946
    %4703 = vmatpush.msra.mxu0 %v3939
    %4704 = vmatpush.msra.mxu0 %v3932
    %4705 = vmatpush.msra.mxu0 %v3925
    %4706 = vmatpush.msra.mxu0 %v3918
    %4707 = vmatpush.msra.mxu0 %v3911
    %4708 = vmatpush.msra.mxu0 %v3904
    %4709 = vmatpush.msra.mxu0 %v3897
    %4710 = vmatpush.msra.mxu0 %v3890
    %4711 = vmatpush.msra.mxu0 %v3883
    %4712 = vmatpush.msra.mxu0 %v3876
    %4713 = vmatpush.msra.mxu0 %v3869
    %4714 = vmatpush.msra.mxu0 %v3862
    %4715 = vmatmul.f32.gmra.mxu0 %v2669
    %v4716 = vpop.f32.mrf.mxu0
    %v4717 = vadd.f32 %v4697, %v4716
    %4718 = vdwg.mxu0
    %4719 = vmatpush.msra.mxu0 %v4079
    %4720 = vmatpush.msra.mxu0 %v4072
    %4721 = vmatpush.msra.mxu0 %v4065
    %4722 = vmatpush.msra.mxu0 %v4058
    %4723 = vmatpush.msra.mxu0 %v4051
    %4724 = vmatpush.msra.mxu0 %v4044
    %4725 = vmatpush.msra.mxu0 %v4037
    %4726 = vmatpush.msra.mxu0 %v4030
    %4727 = vmatpush.msra.mxu0 %v4023
    %4728 = vmatpush.msra.mxu0 %v4016
    %4729 = vmatpush.msra.mxu0 %v4009
    %4730 = vmatpush.msra.mxu0 %v4002
    %4731 = vmatpush.msra.mxu0 %v3995
    %4732 = vmatpush.msra.mxu0 %v3988
    %4733 = vmatpush.msra.mxu0 %v3981
    %4734 = vmatpush.msra.mxu0 %v3974
    %4735 = vmatmul.f32.gmra.mxu0 %v2670
    %v4736 = vpop.f32.mrf.mxu0
    %v4737 = vadd.f32 %v4717, %v4736
    %4738 = vdwg.mxu0
    %4739 = vmatpush.msra.mxu0 %v3296
    %4740 = vmatpush.msra.mxu0 %v3289
    %4741 = vmatpush.msra.mxu0 %v3282
    %4742 = vmatpush.msra.mxu0 %v3275
    %4743 = vmatpush.msra.mxu0 %v3268
    %4744 = vmatpush.msra.mxu0 %v3261
    %4745 = vmatpush.msra.mxu0 %v3254
    %4746 = vmatpush.msra.mxu0 %v3247
    %4747 = vmatpush.msra.mxu0 %v3240
    %4748 = vmatpush.msra.mxu0 %v3233
    %4749 = vmatpush.msra.mxu0 %v3226
    %4750 = vmatpush.msra.mxu0 %v3219
    %4751 = vmatpush.msra.mxu0 %v3212
    %4752 = vmatpush.msra.mxu0 %v3205
    %4753 = vmatpush.msra.mxu0 %v3198
    %4754 = vmatpush.msra.mxu0 %v3191
    %4755 = vmatmul.f32.gmra.mxu0 %v2663
    %v4756 = vpop.f32.mrf.mxu0
    %v4757 = vadd.f32 %v4089, %v4756
    %4758 = vdwg.mxu0
    %4759 = vmatpush.msra.mxu0 %v3408
    %4760 = vmatpush.msra.mxu0 %v3401
    %4761 = vmatpush.msra.mxu0 %v3394
    %4762 = vmatpush.msra.mxu0 %v3387
    %4763 = vmatpush.msra.mxu0 %v3380
    %4764 = vmatpush.msra.mxu0 %v3373
    %4765 = vmatpush.msra.mxu0 %v3366
    %4766 = vmatpush.msra.mxu0 %v3359
    %4767 = vmatpush.msra.mxu0 %v3352
    %4768 = vmatpush.msra.mxu0 %v3345
    %4769 = vmatpush.msra.mxu0 %v3338
    %4770 = vmatpush.msra.mxu0 %v3331
    %4771 = vmatpush.msra.mxu0 %v3324
    %4772 = vmatpush.msra.mxu0 %v3317
    %4773 = vmatpush.msra.mxu0 %v3310
    %4774 = vmatpush.msra.mxu0 %v3303
    %4775 = vmatmul.f32.gmra.mxu0 %v2664
    %v4776 = vpop.f32.mrf.mxu0
    %v4777 = vadd.f32 %v4757, %v4776
    %4778 = vdwg.mxu0
    %4779 = vmatpush.msra.mxu0 %v3520
    %4780 = vmatpush.msra.mxu0 %v3513
    %4781 = vmatpush.msra.mxu0 %v3506
    %4782 = vmatpush.msra.mxu0 %v3499
    %4783 = vmatpush.msra.mxu0 %v3492
    %4784 = vmatpush.msra.mxu0 %v3485
    %4785 = vmatpush.msra.mxu0 %v3478
    %4786 = vmatpush.msra.mxu0 %v3471
    %4787 = vmatpush.msra.mxu0 %v3464
    %4788 = vmatpush.msra.mxu0 %v3457
    %4789 = vmatpush.msra.mxu0 %v3450
    %4790 = vmatpush.msra.mxu0 %v3443
    %4791 = vmatpush.msra.mxu0 %v3436
    %4792 = vmatpush.msra.mxu0 %v3429
    %4793 = vmatpush.msra.mxu0 %v3422
    %4794 = vmatpush.msra.mxu0 %v3415
    %4795 = vmatmul.f32.gmra.mxu0 %v2665
    %v4796 = vpop.f32.mrf.mxu0
    %v4797 = vadd.f32 %v4777, %v4796
    %4798 = vdwg.mxu0
    %4799 = vmatpush.msra.mxu0 %v3632
    %4800 = vmatpush.msra.mxu0 %v3625
    %4801 = vmatpush.msra.mxu0 %v3618
    %4802 = vmatpush.msra.mxu0 %v3611
    %4803 = vmatpush.msra.mxu0 %v3604
    %4804 = vmatpush.msra.mxu0 %v3597
    %4805 = vmatpush.msra.mxu0 %v3590
    %4806 = vmatpush.msra.mxu0 %v3583
    %4807 = vmatpush.msra.mxu0 %v3576
    %4808 = vmatpush.msra.mxu0 %v3569
    %4809 = vmatpush.msra.mxu0 %v3562
    %4810 = vmatpush.msra.mxu0 %v3555
    %4811 = vmatpush.msra.mxu0 %v3548
    %4812 = vmatpush.msra.mxu0 %v3541
    %4813 = vmatpush.msra.mxu0 %v3534
    %4814 = vmatpush.msra.mxu0 %v3527
    %4815 = vmatmul.f32.gmra.mxu0 %v2666
    %v4816 = vpop.f32.mrf.mxu0
    %v4817 = vadd.f32 %v4797, %v4816
    %4818 = vdwg.mxu0
    %4819 = vmatpush.msra.mxu0 %v3744
    %4820 = vmatpush.msra.mxu0 %v3737
    %4821 = vmatpush.msra.mxu0 %v3730
    %4822 = vmatpush.msra.mxu0 %v3723
    %4823 = vmatpush.msra.mxu0 %v3716
    %4824 = vmatpush.msra.mxu0 %v3709
    %4825 = vmatpush.msra.mxu0 %v3702
    %4826 = vmatpush.msra.mxu0 %v3695
    %4827 = vmatpush.msra.mxu0 %v3688
    %4828 = vmatpush.msra.mxu0 %v3681
    %4829 = vmatpush.msra.mxu0 %v3674
    %4830 = vmatpush.msra.mxu0 %v3667
    %4831 = vmatpush.msra.mxu0 %v3660
    %4832 = vmatpush.msra.mxu0 %v3653
    %4833 = vmatpush.msra.mxu0 %v3646
    %4834 = vmatpush.msra.mxu0 %v3639
    %4835 = vmatmul.f32.gmra.mxu0 %v2667
    %v4836 = vpop.f32.mrf.mxu0
    %v4837 = vadd.f32 %v4817, %v4836
    %4838 = vdwg.mxu0
    %4839 = vmatpush.msra.mxu0 %v3856
    %4840 = vmatpush.msra.mxu0 %v3849
    %4841 = vmatpush.msra.mxu0 %v3842
    %4842 = vmatpush.msra.mxu0 %v3835
    %4843 = vmatpush.msra.mxu0 %v3828
    %4844 = vmatpush.msra.mxu0 %v3821
    %4845 = vmatpush.msra.mxu0 %v3814
    %4846 = vmatpush.msra.mxu0 %v3807
    %4847 = vmatpush.msra.mxu0 %v3800
    %4848 = vmatpush.msra.mxu0 %v3793
    %4849 = vmatpush.msra.mxu0 %v3786
    %4850 = vmatpush.msra.mxu0 %v3779
    %4851 = vmatpush.msra.mxu0 %v3772
    %4852 = vmatpush.msra.mxu0 %v3765
    %4853 = vmatpush.msra.mxu0 %v3758
    %4854 = vmatpush.msra.mxu0 %v3751
    %4855 = vmatmul.f32.gmra.mxu0 %v2668
    %v4856 = vpop.f32.mrf.mxu0
    %v4857 = vadd.f32 %v4837, %v4856
    %4858 = vdwg.mxu0
    %4859 = vmatpush.msra.mxu0 %v3968
    %4860 = vmatpush.msra.mxu0 %v3961
    %4861 = vmatpush.msra.mxu0 %v3954
    %4862 = vmatpush.msra.mxu0 %v3947
    %4863 = vmatpush.msra.mxu0 %v3940
    %4864 = vmatpush.msra.mxu0 %v3933
    %4865 = vmatpush.msra.mxu0 %v3926
    %4866 = vmatpush.msra.mxu0 %v3919
    %4867 = vmatpush.msra.mxu0 %v3912
    %4868 = vmatpush.msra.mxu0 %v3905
    %4869 = vmatpush.msra.mxu0 %v3898
    %4870 = vmatpush.msra.mxu0 %v3891
    %4871 = vmatpush.msra.mxu0 %v3884
    %4872 = vmatpush.msra.mxu0 %v3877
    %4873 = vmatpush.msra.mxu0 %v3870
    %4874 = vmatpush.msra.mxu0 %v3863
    %4875 = vmatmul.f32.gmra.mxu0 %v2669
    %v4876 = vpop.f32.mrf.mxu0
    %v4877 = vadd.f32 %v4857, %v4876
    %4878 = vdwg.mxu0
    %4879 = vmatpush.msra.mxu0 %v4080
    %4880 = vmatpush.msra.mxu0 %v4073
    %4881 = vmatpush.msra.mxu0 %v4066
    %4882 = vmatpush.msra.mxu0 %v4059
    %4883 = vmatpush.msra.mxu0 %v4052
    %4884 = vmatpush.msra.mxu0 %v4045
    %4885 = vmatpush.msra.mxu0 %v4038
    %4886 = vmatpush.msra.mxu0 %v4031
    %4887 = vmatpush.msra.mxu0 %v4024
    %4888 = vmatpush.msra.mxu0 %v4017
    %4889 = vmatpush.msra.mxu0 %v4010
    %4890 = vmatpush.msra.mxu0 %v4003
    %4891 = vmatpush.msra.mxu0 %v3996
    %4892 = vmatpush.msra.mxu0 %v3989
    %4893 = vmatpush.msra.mxu0 %v3982
    %4894 = vmatpush.msra.mxu0 %v3975
    %4895 = vmatmul.f32.gmra.mxu0 %v2670
    %v4896 = vpop.f32.mrf.mxu0
    %v4897 = vadd.f32 %v4877, %v4896
    %4898 = vdwg.mxu0
    %4899 = vmatpush.msra.mxu0 %v3297
    %4900 = vmatpush.msra.mxu0 %v3290
    %4901 = vmatpush.msra.mxu0 %v3283
    %4902 = vmatpush.msra.mxu0 %v3276
    %4903 = vmatpush.msra.mxu0 %v3269
    %4904 = vmatpush.msra.mxu0 %v3262
    %4905 = vmatpush.msra.mxu0 %v3255
    %4906 = vmatpush.msra.mxu0 %v3248
    %4907 = vmatpush.msra.mxu0 %v3241
    %4908 = vmatpush.msra.mxu0 %v3234
    %4909 = vmatpush.msra.mxu0 %v3227
    %4910 = vmatpush.msra.mxu0 %v3220
    %4911 = vmatpush.msra.mxu0 %v3213
    %4912 = vmatpush.msra.mxu0 %v3206
    %4913 = vmatpush.msra.mxu0 %v3199
    %4914 = vmatpush.msra.mxu0 %v3192
    %4915 = vmatmul.f32.gmra.mxu0 %v2663
    %v4916 = vpop.f32.mrf.mxu0
    %v4917 = vadd.f32 %v4090, %v4916
    %4918 = vdwg.mxu0
    %4919 = vmatpush.msra.mxu0 %v3409
    %4920 = vmatpush.msra.mxu0 %v3402
    %4921 = vmatpush.msra.mxu0 %v3395
    %4922 = vmatpush.msra.mxu0 %v3388
    %4923 = vmatpush.msra.mxu0 %v3381
    %4924 = vmatpush.msra.mxu0 %v3374
    %4925 = vmatpush.msra.mxu0 %v3367
    %4926 = vmatpush.msra.mxu0 %v3360
    %4927 = vmatpush.msra.mxu0 %v3353
    %4928 = vmatpush.msra.mxu0 %v3346
    %4929 = vmatpush.msra.mxu0 %v3339
    %4930 = vmatpush.msra.mxu0 %v3332
    %4931 = vmatpush.msra.mxu0 %v3325
    %4932 = vmatpush.msra.mxu0 %v3318
    %4933 = vmatpush.msra.mxu0 %v3311
    %4934 = vmatpush.msra.mxu0 %v3304
    %4935 = vmatmul.f32.gmra.mxu0 %v2664
    %v4936 = vpop.f32.mrf.mxu0
    %v4937 = vadd.f32 %v4917, %v4936
    %4938 = vdwg.mxu0
    %4939 = vmatpush.msra.mxu0 %v3521
    %4940 = vmatpush.msra.mxu0 %v3514
    %4941 = vmatpush.msra.mxu0 %v3507
    %4942 = vmatpush.msra.mxu0 %v3500
    %4943 = vmatpush.msra.mxu0 %v3493
    %4944 = vmatpush.msra.mxu0 %v3486
    %4945 = vmatpush.msra.mxu0 %v3479
    %4946 = vmatpush.msra.mxu0 %v3472
    %4947 = vmatpush.msra.mxu0 %v3465
    %4948 = vmatpush.msra.mxu0 %v3458
    %4949 = vmatpush.msra.mxu0 %v3451
    %4950 = vmatpush.msra.mxu0 %v3444
    %4951 = vmatpush.msra.mxu0 %v3437
    %4952 = vmatpush.msra.mxu0 %v3430
    %4953 = vmatpush.msra.mxu0 %v3423
    %4954 = vmatpush.msra.mxu0 %v3416
    %4955 = vmatmul.f32.gmra.mxu0 %v2665
    %v4956 = vpop.f32.mrf.mxu0
    %v4957 = vadd.f32 %v4937, %v4956
    %4958 = vdwg.mxu0
    %4959 = vmatpush.msra.mxu0 %v3633
    %4960 = vmatpush.msra.mxu0 %v3626
    %4961 = vmatpush.msra.mxu0 %v3619
    %4962 = vmatpush.msra.mxu0 %v3612
    %4963 = vmatpush.msra.mxu0 %v3605
    %4964 = vmatpush.msra.mxu0 %v3598
    %4965 = vmatpush.msra.mxu0 %v3591
    %4966 = vmatpush.msra.mxu0 %v3584
    %4967 = vmatpush.msra.mxu0 %v3577
    %4968 = vmatpush.msra.mxu0 %v3570
    %4969 = vmatpush.msra.mxu0 %v3563
    %4970 = vmatpush.msra.mxu0 %v3556
    %4971 = vmatpush.msra.mxu0 %v3549
    %4972 = vmatpush.msra.mxu0 %v3542
    %4973 = vmatpush.msra.mxu0 %v3535
    %4974 = vmatpush.msra.mxu0 %v3528
    %4975 = vmatmul.f32.gmra.mxu0 %v2666
    %v4976 = vpop.f32.mrf.mxu0
    %v4977 = vadd.f32 %v4957, %v4976
    %4978 = vdwg.mxu0
    %4979 = vmatpush.msra.mxu0 %v3745
    %4980 = vmatpush.msra.mxu0 %v3738
    %4981 = vmatpush.msra.mxu0 %v3731
    %4982 = vmatpush.msra.mxu0 %v3724
    %4983 = vmatpush.msra.mxu0 %v3717
    %4984 = vmatpush.msra.mxu0 %v3710
    %4985 = vmatpush.msra.mxu0 %v3703
    %4986 = vmatpush.msra.mxu0 %v3696
    %4987 = vmatpush.msra.mxu0 %v3689
    %4988 = vmatpush.msra.mxu0 %v3682
    %4989 = vmatpush.msra.mxu0 %v3675
    %4990 = vmatpush.msra.mxu0 %v3668
    %4991 = vmatpush.msra.mxu0 %v3661
    %4992 = vmatpush.msra.mxu0 %v3654
    %4993 = vmatpush.msra.mxu0 %v3647
    %4994 = vmatpush.msra.mxu0 %v3640
    %4995 = vmatmul.f32.gmra.mxu0 %v2667
    %v4996 = vpop.f32.mrf.mxu0
    %v4997 = vadd.f32 %v4977, %v4996
    %4998 = vdwg.mxu0
    %4999 = vmatpush.msra.mxu0 %v3857
    %5000 = vmatpush.msra.mxu0 %v3850
    %5001 = vmatpush.msra.mxu0 %v3843
    %5002 = vmatpush.msra.mxu0 %v3836
    %5003 = vmatpush.msra.mxu0 %v3829
    %5004 = vmatpush.msra.mxu0 %v3822
    %5005 = vmatpush.msra.mxu0 %v3815
    %5006 = vmatpush.msra.mxu0 %v3808
    %5007 = vmatpush.msra.mxu0 %v3801
    %5008 = vmatpush.msra.mxu0 %v3794
    %5009 = vmatpush.msra.mxu0 %v3787
    %5010 = vmatpush.msra.mxu0 %v3780
    %5011 = vmatpush.msra.mxu0 %v3773
    %5012 = vmatpush.msra.mxu0 %v3766
    %5013 = vmatpush.msra.mxu0 %v3759
    %5014 = vmatpush.msra.mxu0 %v3752
    %5015 = vmatmul.f32.gmra.mxu0 %v2668
    %v5016 = vpop.f32.mrf.mxu0
    %v5017 = vadd.f32 %v4997, %v5016
    %5018 = vdwg.mxu0
    %5019 = vmatpush.msra.mxu0 %v3969
    %5020 = vmatpush.msra.mxu0 %v3962
    %5021 = vmatpush.msra.mxu0 %v3955
    %5022 = vmatpush.msra.mxu0 %v3948
    %5023 = vmatpush.msra.mxu0 %v3941
    %5024 = vmatpush.msra.mxu0 %v3934
    %5025 = vmatpush.msra.mxu0 %v3927
    %5026 = vmatpush.msra.mxu0 %v3920
    %5027 = vmatpush.msra.mxu0 %v3913
    %5028 = vmatpush.msra.mxu0 %v3906
    %5029 = vmatpush.msra.mxu0 %v3899
    %5030 = vmatpush.msra.mxu0 %v3892
    %5031 = vmatpush.msra.mxu0 %v3885
    %5032 = vmatpush.msra.mxu0 %v3878
    %5033 = vmatpush.msra.mxu0 %v3871
    %5034 = vmatpush.msra.mxu0 %v3864
    %5035 = vmatmul.f32.gmra.mxu0 %v2669
    %v5036 = vpop.f32.mrf.mxu0
    %v5037 = vadd.f32 %v5017, %v5036
    %5038 = vdwg.mxu0
    %5039 = vmatpush.msra.mxu0 %v4081
    %5040 = vmatpush.msra.mxu0 %v4074
    %5041 = vmatpush.msra.mxu0 %v4067
    %5042 = vmatpush.msra.mxu0 %v4060
    %5043 = vmatpush.msra.mxu0 %v4053
    %5044 = vmatpush.msra.mxu0 %v4046
    %5045 = vmatpush.msra.mxu0 %v4039
    %5046 = vmatpush.msra.mxu0 %v4032
    %5047 = vmatpush.msra.mxu0 %v4025
    %5048 = vmatpush.msra.mxu0 %v4018
    %5049 = vmatpush.msra.mxu0 %v4011
    %5050 = vmatpush.msra.mxu0 %v4004
    %5051 = vmatpush.msra.mxu0 %v3997
    %5052 = vmatpush.msra.mxu0 %v3990
    %5053 = vmatpush.msra.mxu0 %v3983
    %5054 = vmatpush.msra.mxu0 %v3976
    %5055 = vmatmul.f32.gmra.mxu0 %v2670
    %v5056 = vpop.f32.mrf.mxu0
    %v5057 = vadd.f32 %v5037, %v5056
    %5058 = vdwg.mxu0
    %5059 = vmatpush.msra.mxu0 %v3298
    %5060 = vmatpush.msra.mxu0 %v3291
    %5061 = vmatpush.msra.mxu0 %v3284
    %5062 = vmatpush.msra.mxu0 %v3277
    %5063 = vmatpush.msra.mxu0 %v3270
    %5064 = vmatpush.msra.mxu0 %v3263
    %5065 = vmatpush.msra.mxu0 %v3256
    %5066 = vmatpush.msra.mxu0 %v3249
    %5067 = vmatpush.msra.mxu0 %v3242
    %5068 = vmatpush.msra.mxu0 %v3235
    %5069 = vmatpush.msra.mxu0 %v3228
    %5070 = vmatpush.msra.mxu0 %v3221
    %5071 = vmatpush.msra.mxu0 %v3214
    %5072 = vmatpush.msra.mxu0 %v3207
    %5073 = vmatpush.msra.mxu0 %v3200
    %5074 = vmatpush.msra.mxu0 %v3193
    %5075 = vmatmul.f32.gmra.mxu0 %v2663
    %v5076 = vpop.f32.mrf.mxu0
    %v5077 = vadd.f32 %v4091, %v5076
    %5078 = vdwg.mxu0
    %5079 = vmatpush.msra.mxu0 %v3410
    %5080 = vmatpush.msra.mxu0 %v3403
    %5081 = vmatpush.msra.mxu0 %v3396
    %5082 = vmatpush.msra.mxu0 %v3389
    %5083 = vmatpush.msra.mxu0 %v3382
    %5084 = vmatpush.msra.mxu0 %v3375
    %5085 = vmatpush.msra.mxu0 %v3368
    %5086 = vmatpush.msra.mxu0 %v3361
    %5087 = vmatpush.msra.mxu0 %v3354
    %5088 = vmatpush.msra.mxu0 %v3347
    %5089 = vmatpush.msra.mxu0 %v3340
    %5090 = vmatpush.msra.mxu0 %v3333
    %5091 = vmatpush.msra.mxu0 %v3326
    %5092 = vmatpush.msra.mxu0 %v3319
    %5093 = vmatpush.msra.mxu0 %v3312
    %5094 = vmatpush.msra.mxu0 %v3305
    %5095 = vmatmul.f32.gmra.mxu0 %v2664
    %v5096 = vpop.f32.mrf.mxu0
    %v5097 = vadd.f32 %v5077, %v5096
    %5098 = vdwg.mxu0
    %5099 = vmatpush.msra.mxu0 %v3522
    %5100 = vmatpush.msra.mxu0 %v3515
    %5101 = vmatpush.msra.mxu0 %v3508
    %5102 = vmatpush.msra.mxu0 %v3501
    %5103 = vmatpush.msra.mxu0 %v3494
    %5104 = vmatpush.msra.mxu0 %v3487
    %5105 = vmatpush.msra.mxu0 %v3480
    %5106 = vmatpush.msra.mxu0 %v3473
    %5107 = vmatpush.msra.mxu0 %v3466
    %5108 = vmatpush.msra.mxu0 %v3459
    %5109 = vmatpush.msra.mxu0 %v3452
    %5110 = vmatpush.msra.mxu0 %v3445
    %5111 = vmatpush.msra.mxu0 %v3438
    %5112 = vmatpush.msra.mxu0 %v3431
    %5113 = vmatpush.msra.mxu0 %v3424
    %5114 = vmatpush.msra.mxu0 %v3417
    %5115 = vmatmul.f32.gmra.mxu0 %v2665
    %v5116 = vpop.f32.mrf.mxu0
    %v5117 = vadd.f32 %v5097, %v5116
    %5118 = vdwg.mxu0
    %5119 = vmatpush.msra.mxu0 %v3634
    %5120 = vmatpush.msra.mxu0 %v3627
    %5121 = vmatpush.msra.mxu0 %v3620
    %5122 = vmatpush.msra.mxu0 %v3613
    %5123 = vmatpush.msra.mxu0 %v3606
    %5124 = vmatpush.msra.mxu0 %v3599
    %5125 = vmatpush.msra.mxu0 %v3592
    %5126 = vmatpush.msra.mxu0 %v3585
    %5127 = vmatpush.msra.mxu0 %v3578
    %5128 = vmatpush.msra.mxu0 %v3571
    %5129 = vmatpush.msra.mxu0 %v3564
    %5130 = vmatpush.msra.mxu0 %v3557
    %5131 = vmatpush.msra.mxu0 %v3550
    %5132 = vmatpush.msra.mxu0 %v3543
    %5133 = vmatpush.msra.mxu0 %v3536
    %5134 = vmatpush.msra.mxu0 %v3529
    %5135 = vmatmul.f32.gmra.mxu0 %v2666
    %v5136 = vpop.f32.mrf.mxu0
    %v5137 = vadd.f32 %v5117, %v5136
    %5138 = vdwg.mxu0
    %5139 = vmatpush.msra.mxu0 %v3746
    %5140 = vmatpush.msra.mxu0 %v3739
    %5141 = vmatpush.msra.mxu0 %v3732
    %5142 = vmatpush.msra.mxu0 %v3725
    %5143 = vmatpush.msra.mxu0 %v3718
    %5144 = vmatpush.msra.mxu0 %v3711
    %5145 = vmatpush.msra.mxu0 %v3704
    %5146 = vmatpush.msra.mxu0 %v3697
    %5147 = vmatpush.msra.mxu0 %v3690
    %5148 = vmatpush.msra.mxu0 %v3683
    %5149 = vmatpush.msra.mxu0 %v3676
    %5150 = vmatpush.msra.mxu0 %v3669
    %5151 = vmatpush.msra.mxu0 %v3662
    %5152 = vmatpush.msra.mxu0 %v3655
    %5153 = vmatpush.msra.mxu0 %v3648
    %5154 = vmatpush.msra.mxu0 %v3641
    %5155 = vmatmul.f32.gmra.mxu0 %v2667
    %v5156 = vpop.f32.mrf.mxu0
    %v5157 = vadd.f32 %v5137, %v5156
    %5158 = vdwg.mxu0
    %5159 = vmatpush.msra.mxu0 %v3858
    %5160 = vmatpush.msra.mxu0 %v3851
    %5161 = vmatpush.msra.mxu0 %v3844
    %5162 = vmatpush.msra.mxu0 %v3837
    %5163 = vmatpush.msra.mxu0 %v3830
    %5164 = vmatpush.msra.mxu0 %v3823
    %5165 = vmatpush.msra.mxu0 %v3816
    %5166 = vmatpush.msra.mxu0 %v3809
    %5167 = vmatpush.msra.mxu0 %v3802
    %5168 = vmatpush.msra.mxu0 %v3795
    %5169 = vmatpush.msra.mxu0 %v3788
    %5170 = vmatpush.msra.mxu0 %v3781
    %5171 = vmatpush.msra.mxu0 %v3774
    %5172 = vmatpush.msra.mxu0 %v3767
    %5173 = vmatpush.msra.mxu0 %v3760
    %5174 = vmatpush.msra.mxu0 %v3753
    %5175 = vmatmul.f32.gmra.mxu0 %v2668
    %v5176 = vpop.f32.mrf.mxu0
    %v5177 = vadd.f32 %v5157, %v5176
    %5178 = vdwg.mxu0
    %5179 = vmatpush.msra.mxu0 %v3970
    %5180 = vmatpush.msra.mxu0 %v3963
    %5181 = vmatpush.msra.mxu0 %v3956
    %5182 = vmatpush.msra.mxu0 %v3949
    %5183 = vmatpush.msra.mxu0 %v3942
    %5184 = vmatpush.msra.mxu0 %v3935
    %5185 = vmatpush.msra.mxu0 %v3928
    %5186 = vmatpush.msra.mxu0 %v3921
    %5187 = vmatpush.msra.mxu0 %v3914
    %5188 = vmatpush.msra.mxu0 %v3907
    %5189 = vmatpush.msra.mxu0 %v3900
    %5190 = vmatpush.msra.mxu0 %v3893
    %5191 = vmatpush.msra.mxu0 %v3886
    %5192 = vmatpush.msra.mxu0 %v3879
    %5193 = vmatpush.msra.mxu0 %v3872
    %5194 = vmatpush.msra.mxu0 %v3865
    %5195 = vmatmul.f32.gmra.mxu0 %v2669
    %v5196 = vpop.f32.mrf.mxu0
    %v5197 = vadd.f32 %v5177, %v5196
    %5198 = vdwg.mxu0
    %5199 = vmatpush.msra.mxu0 %v4082
    %5200 = vmatpush.msra.mxu0 %v4075
    %5201 = vmatpush.msra.mxu0 %v4068
    %5202 = vmatpush.msra.mxu0 %v4061
    %5203 = vmatpush.msra.mxu0 %v4054
    %5204 = vmatpush.msra.mxu0 %v4047
    %5205 = vmatpush.msra.mxu0 %v4040
    %5206 = vmatpush.msra.mxu0 %v4033
    %5207 = vmatpush.msra.mxu0 %v4026
    %5208 = vmatpush.msra.mxu0 %v4019
    %5209 = vmatpush.msra.mxu0 %v4012
    %5210 = vmatpush.msra.mxu0 %v4005
    %5211 = vmatpush.msra.mxu0 %v3998
    %5212 = vmatpush.msra.mxu0 %v3991
    %5213 = vmatpush.msra.mxu0 %v3984
    %5214 = vmatpush.msra.mxu0 %v3977
    %5215 = vmatmul.f32.gmra.mxu0 %v2670
    %v5216 = vpop.f32.mrf.mxu0
    %v5217 = vadd.f32 %v5197, %v5216
    %5218 = vdwg.mxu0
    %v5219 = vtanh.pop %v4257
    %v5220 = vtanh.pop %v4417
    %v5221 = vtanh.pop %v4577
    %v5222 = vtanh.pop %v4737
    %v5223 = vtanh.pop %v4897
    %v5224 = vtanh.pop %v5057
    %v5225 = vtanh.pop %v5217
    %5226 = vst [vmem:[%s14] sm:$0xff] %v5219
    %5227 = vst [vmem:[%s14 + $0x8] sm:$0xff] %v5220
    %5228 = vst [vmem:[%s14 + $0x10] sm:$0xff] %v5221
    %5229 = vst [vmem:[%s14 + $0x18] sm:$0xff] %v5222
    %5230 = vst [vmem:[%s14 + $0x20] sm:$0xff] %v5223
    %5231 = vst [vmem:[%s14 + $0x28] sm:$0xff] %v5224
    %5232 = vst [vmem:[%s14 + $0x30] sm:$0xff] %v5225
    // Predicated region
    $region102: #{generator_forward.1} parent=1 // pred_check
      _
    $region103: #{generator_forward.1} parent=1 // pred_check_branch
      %5234 = sbr.rel (0) target = $region105
    $region104: #{generator_forward.1} parent=1 // pred_region
      _
    $region105: #{generator_forward.1} parent=1 // pred_fallthru
      _
    // Predicated region
    $region106: #{generator_forward.1} parent=1 // pred_check
      _
    $region107: #{generator_forward.1} parent=1 // pred_check_branch
      %5236 = sbr.rel (0) target = $region109
    $region108: #{generator_forward.1} parent=1 // pred_region
      _
    $region109: #{generator_forward.1} parent=1 // pred_fallthru
      _
    %5237 = vsyncpa [#allocation6], 1
    %5238 = vsyncpa [#allocation8], 1
    %5239 = vsyncpa [#allocation11], 1
    %5240 = vsyncpa [#allocation14], 1
    %5241 = vsyncpa [#allocation17], 1
    %5242 = vsyncpa [#allocation20], 1
  %5243 = vsyncmov [#allocation4]
  %s5244 = vpop.sfrf %5243
  %p5245 = scmp.eq.s32.totalorder %s5244, 0
  %p5246 = pneg %p5245
  %5248 = shalt.err (%p5246)
  %s5249 = scalar_lea.sflag [#allocation4], 1
  %5250 = vsyncmov %s5249
  %s5251 = vpop.sfrf %5250
  %p5252 = scmp.eq.s32.totalorder %s5251, 0
  %p5253 = pneg %p5252
  %5255 = shalt.err (%p5253)

</llo_original>
